<compile_context>
chip_gen: v7x
topology: tpu7x:2x2x1
jax: 0.10.0
libtpu: 0.0.40
codegen_flags: <defaults>
</compile_context>

<pallas_src>
import functools
from types import SimpleNamespace

import jax
import jax.numpy as jnp
from jax.experimental import pallas as pl
from jax.experimental.pallas import tpu as pltpu


def _round_up(v, m):
    return ((v + m - 1) // m) * m


# ----------------------------------------------------------------------------
# Static shape bookkeeping (all Python ints, resolved at trace time)
# ----------------------------------------------------------------------------
def derive_dims(c, h, w, nc):
    he, we = h + (h % 2), w + (w % 2)            # pad spatial to even for s2d
    h2, w2 = he // 2, we // 2
    p = w2                                       # flat row pitch used everywhere
    # conv1: 5x5 stride 2  ( == 3x3 stride 1 over the space-to-depth input )
    h1o, w1o = (h - 5) // 2 + 1, (w - 5) // 2 + 1
    assert h1o == h2 - 2 and w1o == w2 - 2
    # conv2: 3x3 stride 2 ; conv3: 5x5 stride 1
    h2o, w2o = (h1o - 3) // 2 + 1, (w1o - 3) // 2 + 1
    h3o, w3o = h2o - 4, w2o - 4
    assert h3o >= 1 and w3o >= 1, "input too small for the conv stack"
    hw3 = h3o * w3o
    seq = 16 * hw3                               # PyTorch seq_shape
    c1 = 4 * c                                   # channels after space-to-depth
    c1p = _round_up(c1, 8)
    k1 = 9 * c1p                                 # K of the conv1 merged GEMM
    ncp = 128                                    # lane-dense output block

    n1 = h1o * p                                 # valid conv1 rows
    n3c = _round_up(2 * (h3o - 1) * p + 2 * (w3o - 1) + 1, 8)   # conv3 rows
    n2c = _round_up(n3c + 8 * p + 8, 8)          # conv2 rows read by conv3 taps
    a1_need = n2c + 2 * p + 2                    # conv1 rows read by conv2 taps
    r1rows = _round_up(max(n1, a1_need), 8)      # conv1 GEMM M / a1 scratch rows
    r1in = r1rows + 2 * p + 2                    # s2d slab rows read by im2col
    return SimpleNamespace(**locals())


# ----------------------------------------------------------------------------
# Parameters: synthetic init (PyTorch-equivalent layouts) + one-time packing
# ----------------------------------------------------------------------------
def init_params(key, c, h, w, nc):
    d = derive_dims(c, h, w, nc)

    def uniform(k, shape, fan_in):
        bound = float(fan_in) ** -0.5
        return jax.random.uniform(k, shape, jnp.float32, -bound, bound)

    ks = jax.random.split(key, 10)
    return {
        "w1": uniform(ks[0], (5, 5, c, 128), 5 * 5 * c),
        "b1": uniform(ks[1], (128,), 5 * 5 * c),
        "w2": uniform(ks[2], (3, 3, 128, 32), 3 * 3 * 128),
        "b2": uniform(ks[3], (32,), 3 * 3 * 128),
        "w3": uniform(ks[4], (5, 5, 32, 16), 5 * 5 * 32),
        "b3": uniform(ks[5], (16,), 5 * 5 * 32),
        # Linear weights stored (in, out); wl1 rows follow PyTorch's flatten
        # order over the NCHW conv3 output: idx = ch*H3*W3 + y*W3 + x.
        "wl1": uniform(ks[6], (d.seq, 32), d.seq),
        "bl1": uniform(ks[7], (32,), d.seq),
        "wfc": uniform(ks[8], (32, nc), 32),
        "bfc": uniform(ks[9], (nc,), 32),
    }


def pack_params(params, c, h, w, nc):
    """One-time weight packing: K-merged conv kernels, folded+permuted linear,
    bf16 casts, TPU-friendly padding.  Run OUTSIDE the jitted forward."""
    d = derive_dims(c, h, w, nc)
    f32, bf16 = jnp.float32, jnp.bfloat16

    # conv1 (5x5, s=2) -> 3x3 stride-1 kernel over the space-to-depth input,
    # K-merged to (9*c1p, 128): row index = tap*(c1p) + s2d-channel.
    w1 = params["w1"].astype(f32)
    w1p = jnp.zeros((6, 6, c, 128), f32).at[:5, :5].set(w1)
    w1p = (w1p.reshape(3, 2, 3, 2, c, 128)
               .transpose(0, 2, 1, 3, 4, 5)
               .reshape(3, 3, 4 * c, 128))
    w1p = jnp.pad(w1p, ((0, 0), (0, 0), (0, d.c1p - 4 * c), (0, 0)))
    w1p = w1p.reshape(d.k1, 128)

    # conv2 / conv3 K-merged: row index = tap*in_ch + in_ch_idx.
    w2m = params["w2"].reshape(9 * 128, 32)
    w3m = params["w3"].reshape(25 * 32, 16)

    # Fold Linear(seq,32) @ Linear(32,nc) (purely affine, no nonlinearity),
    # and permute its input dim from PyTorch CHW-flatten order to the
    # position-major / channel-minor order the kernel's flattened row uses.
    wfold = params["wl1"] @ params["wfc"]                     # (seq, nc)
    bfold = params["bl1"] @ params["wfc"] + params["bfc"]     # (nc,)
    wfold = (wfold.reshape(16, d.h3o, d.w3o, nc)
                  .transpose(1, 2, 0, 3)
                  .reshape(d.seq, nc))
    wfold = jnp.pad(wfold, ((0, 0), (0, d.ncp - nc)))
    bfold = jnp.pad(bfold, (0, d.ncp - nc)).reshape(1, d.ncp)

    return {
        "w1": w1p.astype(bf16), "b1": params["b1"].reshape(1, 128).astype(f32),
        "w2": w2m.astype(bf16), "b2": params["b2"].reshape(1, 32).astype(f32),
        "w3": w3m.astype(bf16), "b3": params["b3"].reshape(1, 16).astype(f32),
        "wl": wfold.astype(bf16), "bl": bfold.astype(f32),
    }


# ----------------------------------------------------------------------------
# Fused Pallas kernel: conv1 -> conv2 -> conv3 -> folded linear, per image.
# Each stage is ONE K-merged bf16 GEMM with f32 accumulation.
# ----------------------------------------------------------------------------
def _fused_forward_kernel(lhs1_ref, w1_ref, b1_ref, w2_ref, b2_ref,
                          w3_ref, b3_ref, wl_ref, bl_ref, o_ref,
                          a1_ref, lhs2_ref, c2_ref, lhs3_ref, fl_ref, *, d):
    f32, bf16 = jnp.float32, jnp.bfloat16
    p = d.p

    # ---- conv1: single (r1rows, 9*c1p) x (9*c1p, 128) GEMM -----------------
    a1_ref[...] = (jnp.dot(lhs1_ref[...], w1_ref[...],
                           preferred_element_type=f32) + b1_ref[...])
    # TODO(synk): training-mode Dropout(0.25) mask via pltpu.prng_random_bits;
    # inference mode == identity.

    # ---- conv2: 3x3/s2 at dense stride-1 anchors, K-merged -----------------
    # 9 lane-aligned copies build the (n2c, 1152) bf16 LHS; the f32->bf16 cast
    # happens here (offset-aligned stores; reads from f32 a1 at arbitrary
    # sublane offsets avoid packed-bf16 repack).
    for t in range(9):
        ky, kx = divmod(t, 3)
        off = ky * p + kx
        lhs2_ref[:, t * 128:(t + 1) * 128] = (
            a1_ref[off:off + d.n2c, :].astype(bf16))
    c2_ref[...] = (jnp.dot(lhs2_ref[...], w2_ref[...],
                           preferred_element_type=f32) + b2_ref[...])

    # ---- conv3: 5x5/s1 over conv2's stride-2 grid == dilation-2 taps -------
    for t in range(25):
        ky, kx = divmod(t, 5)
        off = 2 * ky * p + 2 * kx
        lhs3_ref[:, t * 32:(t + 1) * 32] = (
            c2_ref[off:off + d.n3c, :].astype(bf16))
    c3 = (jnp.dot(lhs3_ref[...], w3_ref[...],
                  preferred_element_type=f32) + b3_ref[...])        # (n3c, 16)

    # ---- Flatten + Linear(seq,32) + Linear(32,nc), folded into ONE GEMM ----
    # Gather the valid conv3 anchors into a single lane-dense (1, seq) row
    # (position-major, channel-minor) and contract against the pre-folded
    # (seq, ncp) weight.
    for j in range(d.hw3):
        y3, x3 = divmod(j, d.w3o)
        r = 2 * y3 * p + 2 * x3
        fl_ref[:, j * 16:(j + 1) * 16] = c3[r:r + 1, :].astype(bf16)
    o_ref[...] = (jnp.dot(fl_ref[...], wl_ref[...],
                          preferred_element_type=f32) + bl_ref[...])


# ----------------------------------------------------------------------------
# Forward wrapper
# ----------------------------------------------------------------------------
def learner_model_forward(packed, x_nchw, *, c, h, w, nc):
    d = derive_dims(c, h, w, nc)
    n = x_nchw.shape[0]

    # Host side: pure layout plumbing (no FLOPs).  NCHW -> NHWC, pad spatial
    # to even, 2x2 space-to-depth (turns the 5x5/s2 conv into 3x3/s1), flatten
    # to (row = y*p + x, channel), pad rows/channels, then a tiny 9-tap im2col
    # + bf16 cast so conv1 is one lane-dense K=9*c1p GEMM in the kernel.
    x = jnp.transpose(x_nchw, (0, 2, 3, 1)).astype(jnp.float32)        # NHWC
    x = jnp.pad(x, ((0, 0), (0, d.he - h), (0, d.we - w), (0, 0)))
    x = x.reshape(n, d.h2, 2, d.w2, 2, c).transpose(0, 1, 3, 2, 4, 5)
    x = x.reshape(n, d.h2 * d.w2, d.c1)
    x = jnp.pad(x, ((0, 0), (0, d.r1in - d.h2 * d.w2), (0, d.c1p - d.c1)))
    lhs1 = jnp.concatenate(
        [x[:, (qy * d.p + qx):(qy * d.p + qx) + d.r1rows, :]
         for qy in range(3) for qx in range(3)],
        axis=-1).astype(jnp.bfloat16)                   # (n, r1rows, 9*c1p)

    flops = 2 * n * (d.r1rows * d.k1 * 128 + d.n2c * 1152 * 32
                     + d.n3c * 800 * 16 + d.seq * d.ncp)
    bytes_accessed = (lhs1.size * 2
                      + (packed["w1"].size + packed["w2"].size
                         + packed["w3"].size + packed["wl"].size) * 2
                      + (128 + 32 + 16 + d.ncp) * 4 + n * d.ncp * 4)

    out = pl.pallas_call(
        functools.partial(_fused_forward_kernel, d=d),
        out_shape=jax.ShapeDtypeStruct((n, 1, d.ncp), jnp.float32),
        grid=(n,),
        in_specs=[
            pl.BlockSpec((None, d.r1rows, d.k1), lambda i: (i, 0, 0)),  # im2col'd image
            pl.BlockSpec((d.k1, 128), lambda i: (0, 0)),                # W1 (merged)
            pl.BlockSpec((1, 128), lambda i: (0, 0)),                   # b1
            pl.BlockSpec((9 * 128, 32), lambda i: (0, 0)),              # W2 (merged)
            pl.BlockSpec((1, 32), lambda i: (0, 0)),                    # b2
            pl.BlockSpec((25 * 32, 16), lambda i: (0, 0)),              # W3 (merged)
            pl.BlockSpec((1, 16), lambda i: (0, 0)),                    # b3
            pl.BlockSpec((d.seq, d.ncp), lambda i: (0, 0)),             # folded linear
            pl.BlockSpec((1, d.ncp), lambda i: (0, 0)),                 # folded bias
        ],
        out_specs=pl.BlockSpec((None, 1, d.ncp), lambda i: (i, 0, 0)),
        scratch_shapes=[
            pltpu.VMEM((d.r1rows, 128), jnp.float32),     # conv1 activations
            pltpu.VMEM((d.n2c, 9 * 128), jnp.bfloat16),   # conv2 K-merged LHS
            pltpu.VMEM((d.n2c, 32), jnp.float32),         # conv2 activations
            pltpu.VMEM((d.n3c, 25 * 32), jnp.bfloat16),   # conv3 K-merged LHS
            pltpu.VMEM((1, d.seq), jnp.bfloat16),         # flattened conv3 row
        ],
        compiler_params=pltpu.CompilerParams(
            dimension_semantics=("parallel",),
            vmem_limit_bytes=48 * 1024 * 1024),
        cost_estimate=pl.CostEstimate(flops=flops, transcendentals=0,
                                      bytes_accessed=bytes_accessed),
    )(lhs1, packed["w1"], packed["b1"], packed["w2"], packed["b2"],
      packed["w3"], packed["b3"], packed["wl"], packed["bl"])
    return out[:, 0, :nc]


# ----------------------------------------------------------------------------
# Pure-JAX f32 reference (loose sanity check; kernel runs bf16 on the MXU)
# ----------------------------------------------------------------------------
def _reference_forward(params, x_nchw):
    dn = ("NHWC", "HWIO", "NHWC")
    x = jnp.transpose(x_nchw, (0, 2, 3, 1)).astype(jnp.float32)
    x = jax.lax.conv_general_dilated(x, params["w1"], (2, 2), "VALID",
                                     dimension_numbers=dn) + params["b1"]
    x = jax.lax.conv_general_dilated(x, params["w2"], (2, 2), "VALID",
                                     dimension_numbers=dn) + params["b2"]
    x = jax.lax.conv_general_dilated(x, params["w3"], (1, 1), "VALID",
                                     dimension_numbers=dn) + params["b3"]
    x = jnp.transpose(x, (0, 3, 1, 2)).reshape(x.shape[0], -1)   # CHW flatten
    x = x @ params["wl1"] + params["bl1"]
    x = x @ params["wfc"] + params["bfc"]
    return x


if __name__ == "__main__":
    # Small deterministic config: input_dims=(3, 32, 32), batch=2, nc=4.
    batch, c, h, w, nc = 2, 3, 32, 32, 4

    key = jax.random.PRNGKey(0)
    k_x, k_p = jax.random.split(key)
    x = jax.random.normal(k_x, (batch, c, h, w), jnp.float32)
    params = init_params(k_p, c, h, w, nc)
    packed = pack_params(params, c, h, w, nc)     # one-time packing (not jitted)

    fwd = jax.jit(functools.partial(learner_model_forward, c=c, h=h, w=w, nc=nc))
    out = fwd(packed, x)
    jax.block_until_ready(out)
    assert out.shape == (batch, nc), out.shape

    # Loose sanity check vs. f32 reference (kernel uses bf16 operands on MXU).
    ref = _reference_forward(params, x)
    err = float(jnp.max(jnp.abs(out - ref)))
    scale = float(jnp.max(jnp.abs(ref))) + 1e-6
    assert err <= 0.15 * scale + 0.05, f"mismatch: max|diff|={err}, ref max={scale}"

    print("KERNEL_OK")
</pallas_src>

<mosaic_0001>
module attributes {stable_mosaic.version = 11 : i64} {
  func.func @_fused_forward_kernel(%arg0: i32, %arg1: memref<1x224x144xbf16, #tpu.memory_space<vmem>>, %arg2: memref<144x128xbf16, #tpu.memory_space<vmem>>, %arg3: memref<1x128xf32, #tpu.memory_space<vmem>>, %arg4: memref<1152x32xbf16, #tpu.memory_space<vmem>>, %arg5: memref<1x32xf32, #tpu.memory_space<vmem>>, %arg6: memref<800x16xbf16, #tpu.memory_space<vmem>>, %arg7: memref<1x16xf32, #tpu.memory_space<vmem>>, %arg8: memref<64x128xbf16, #tpu.memory_space<vmem>>, %arg9: memref<1x128xf32, #tpu.memory_space<vmem>>, %arg10: memref<1x1x128xf32, #tpu.memory_space<vmem>>, %arg11: memref<224x128xf32, #tpu.memory_space<vmem>>, %arg12: memref<176x1152xbf16, #tpu.memory_space<vmem>>, %arg13: memref<176x32xf32, #tpu.memory_space<vmem>>, %arg14: memref<40x800xbf16, #tpu.memory_space<vmem>>, %arg15: memref<1x64xbf16, #tpu.memory_space<vmem>>) attributes {dimension_semantics = [#tpu.dimension_semantics<parallel>], iteration_bounds = array<i64: 2>, scalar_prefetch = 0 : i64, scratch_operands = 5 : i64, tpu.core_type = #tpu.core_type<tc>, window_params = [{transform_indices = @transform_0, window_bounds = array<i64: 1, 224, 144>}, {pipeline_mode = #tpu.pipeline_mode<synchronous>, transform_indices = @transform_1, window_bounds = array<i64: 144, 128>}, {pipeline_mode = #tpu.pipeline_mode<synchronous>, transform_indices = @transform_2, window_bounds = array<i64: 1, 128>}, {pipeline_mode = #tpu.pipeline_mode<synchronous>, transform_indices = @transform_3, window_bounds = array<i64: 1152, 32>}, {pipeline_mode = #tpu.pipeline_mode<synchronous>, transform_indices = @transform_4, window_bounds = array<i64: 1, 32>}, {pipeline_mode = #tpu.pipeline_mode<synchronous>, transform_indices = @transform_5, window_bounds = array<i64: 800, 16>}, {pipeline_mode = #tpu.pipeline_mode<synchronous>, transform_indices = @transform_6, window_bounds = array<i64: 1, 16>}, {pipeline_mode = #tpu.pipeline_mode<synchronous>, transform_indices = @transform_7, window_bounds = array<i64: 64, 128>}, {pipeline_mode = #tpu.pipeline_mode<synchronous>, transform_indices = @transform_8, window_bounds = array<i64: 1, 128>}, {transform_indices = @transform_9, window_bounds = array<i64: 1, 1, 128>}]} {
    %c0 = arith.constant 0 : index
    %c0_0 = arith.constant 0 : index
    %c0_1 = arith.constant 0 : index
    %0 = vector.load %arg1[%c0, %c0_0, %c0_1] : memref<1x224x144xbf16, #tpu.memory_space<vmem>>, vector<1x224x144xbf16>
    %1 = vector.shape_cast %0 : vector<1x224x144xbf16> to vector<224x144xbf16>
    %c0_2 = arith.constant 0 : index
    %c0_3 = arith.constant 0 : index
    %2 = vector.load %arg2[%c0_2, %c0_3] : memref<144x128xbf16, #tpu.memory_space<vmem>>, vector<144x128xbf16>
    %cst = arith.constant dense<0.000000e+00> : vector<224x128xf32>
    %3 = tpu.matmul %1, %2, %cst {dimension_numbers = #tpu.dot_dimension_numbers<[1], [0], [0], [1], [0, 0, 1, 1], [], []>} : vector<224x144xbf16>, vector<144x128xbf16>, vector<224x128xf32> -> vector<224x128xf32>
    %c0_4 = arith.constant 0 : index
    %c0_5 = arith.constant 0 : index
    %4 = vector.load %arg3[%c0_4, %c0_5] : memref<1x128xf32, #tpu.memory_space<vmem>>, vector<1x128xf32>
    %5 = vector.broadcast %4 : vector<1x128xf32> to vector<224x128xf32>
    %6 = arith.addf %3, %5 : vector<224x128xf32>
    %c0_6 = arith.constant 0 : index
    %c0_7 = arith.constant 0 : index
    %7 = vector.load %arg11[%c0_6, %c0_7] : memref<224x128xf32, #tpu.memory_space<vmem>>, vector<224x128xf32>
    tpu.vector_store %arg11[%c0_6, %c0_7], %6 {strides = array<i32>} : memref<224x128xf32, #tpu.memory_space<vmem>>, vector<224x128xf32>,
    %c0_8 = arith.constant 0 : index
    %c0_9 = arith.constant 0 : index
    %8 = vector.load %arg11[%c0_8, %c0_9] : memref<224x128xf32, #tpu.memory_space<vmem>>, vector<176x128xf32>
    %9 = arith.truncf %8 : vector<176x128xf32> to vector<176x128xbf16>
    %c0_10 = arith.constant 0 : index
    %c0_11 = arith.constant 0 : index
    %10 = vector.load %arg12[%c0_10, %c0_11] : memref<176x1152xbf16, #tpu.memory_space<vmem>>, vector<176x128xbf16>
    tpu.vector_store %arg12[%c0_10, %c0_11], %9 {strides = array<i32>} : memref<176x1152xbf16, #tpu.memory_space<vmem>>, vector<176x128xbf16>,
    %c1 = arith.constant 1 : index
    %c0_12 = arith.constant 0 : index
    %11 = vector.load %arg11[%c1, %c0_12] : memref<224x128xf32, #tpu.memory_space<vmem>>, vector<176x128xf32>
    %12 = arith.truncf %11 : vector<176x128xf32> to vector<176x128xbf16>
    %c0_13 = arith.constant 0 : index
    %c128 = arith.constant 128 : index
    %13 = vector.load %arg12[%c0_13, %c128] : memref<176x1152xbf16, #tpu.memory_space<vmem>>, vector<176x128xbf16>
    tpu.vector_store %arg12[%c0_13, %c128], %12 {strides = array<i32>} : memref<176x1152xbf16, #tpu.memory_space<vmem>>, vector<176x128xbf16>,
    %c2 = arith.constant 2 : index
    %c0_14 = arith.constant 0 : index
    %14 = vector.load %arg11[%c2, %c0_14] : memref<224x128xf32, #tpu.memory_space<vmem>>, vector<176x128xf32>
    %15 = arith.truncf %14 : vector<176x128xf32> to vector<176x128xbf16>
    %c0_15 = arith.constant 0 : index
    %c256 = arith.constant 256 : index
    %16 = vector.load %arg12[%c0_15, %c256] : memref<176x1152xbf16, #tpu.memory_space<vmem>>, vector<176x128xbf16>
    tpu.vector_store %arg12[%c0_15, %c256], %15 {strides = array<i32>} : memref<176x1152xbf16, #tpu.memory_space<vmem>>, vector<176x128xbf16>,
    %c16 = arith.constant 16 : index
    %c0_16 = arith.constant 0 : index
    %17 = vector.load %arg11[%c16, %c0_16] : memref<224x128xf32, #tpu.memory_space<vmem>>, vector<176x128xf32>
    %18 = arith.truncf %17 : vector<176x128xf32> to vector<176x128xbf16>
    %c0_17 = arith.constant 0 : index
    %c384 = arith.constant 384 : index
    %19 = vector.load %arg12[%c0_17, %c384] : memref<176x1152xbf16, #tpu.memory_space<vmem>>, vector<176x128xbf16>
    tpu.vector_store %arg12[%c0_17, %c384], %18 {strides = array<i32>} : memref<176x1152xbf16, #tpu.memory_space<vmem>>, vector<176x128xbf16>,
    %c17 = arith.constant 17 : index
    %c0_18 = arith.constant 0 : index
    %20 = vector.load %arg11[%c17, %c0_18] : memref<224x128xf32, #tpu.memory_space<vmem>>, vector<176x128xf32>
    %21 = arith.truncf %20 : vector<176x128xf32> to vector<176x128xbf16>
    %c0_19 = arith.constant 0 : index
    %c512 = arith.constant 512 : index
    %22 = vector.load %arg12[%c0_19, %c512] : memref<176x1152xbf16, #tpu.memory_space<vmem>>, vector<176x128xbf16>
    tpu.vector_store %arg12[%c0_19, %c512], %21 {strides = array<i32>} : memref<176x1152xbf16, #tpu.memory_space<vmem>>, vector<176x128xbf16>,
    %c18 = arith.constant 18 : index
    %c0_20 = arith.constant 0 : index
    %23 = vector.load %arg11[%c18, %c0_20] : memref<224x128xf32, #tpu.memory_space<vmem>>, vector<176x128xf32>
    %24 = arith.truncf %23 : vector<176x128xf32> to vector<176x128xbf16>
    %c0_21 = arith.constant 0 : index
    %c640 = arith.constant 640 : index
    %25 = vector.load %arg12[%c0_21, %c640] : memref<176x1152xbf16, #tpu.memory_space<vmem>>, vector<176x128xbf16>
    tpu.vector_store %arg12[%c0_21, %c640], %24 {strides = array<i32>} : memref<176x1152xbf16, #tpu.memory_space<vmem>>, vector<176x128xbf16>,
    %c32 = arith.constant 32 : index
    %c0_22 = arith.constant 0 : index
    %26 = vector.load %arg11[%c32, %c0_22] : memref<224x128xf32, #tpu.memory_space<vmem>>, vector<176x128xf32>
    %27 = arith.truncf %26 : vector<176x128xf32> to vector<176x128xbf16>
    %c0_23 = arith.constant 0 : index
    %c768 = arith.constant 768 : index
    %28 = vector.load %arg12[%c0_23, %c768] : memref<176x1152xbf16, #tpu.memory_space<vmem>>, vector<176x128xbf16>
    tpu.vector_store %arg12[%c0_23, %c768], %27 {strides = array<i32>} : memref<176x1152xbf16, #tpu.memory_space<vmem>>, vector<176x128xbf16>,
    %c33 = arith.constant 33 : index
    %c0_24 = arith.constant 0 : index
    %29 = vector.load %arg11[%c33, %c0_24] : memref<224x128xf32, #tpu.memory_space<vmem>>, vector<176x128xf32>
    %30 = arith.truncf %29 : vector<176x128xf32> to vector<176x128xbf16>
    %c0_25 = arith.constant 0 : index
    %c896 = arith.constant 896 : index
    %31 = vector.load %arg12[%c0_25, %c896] : memref<176x1152xbf16, #tpu.memory_space<vmem>>, vector<176x128xbf16>
    tpu.vector_store %arg12[%c0_25, %c896], %30 {strides = array<i32>} : memref<176x1152xbf16, #tpu.memory_space<vmem>>, vector<176x128xbf16>,
    %c34 = arith.constant 34 : index
    %c0_26 = arith.constant 0 : index
    %32 = vector.load %arg11[%c34, %c0_26] : memref<224x128xf32, #tpu.memory_space<vmem>>, vector<176x128xf32>
    %33 = arith.truncf %32 : vector<176x128xf32> to vector<176x128xbf16>
    %c0_27 = arith.constant 0 : index
    %c1024 = arith.constant 1024 : index
    %34 = vector.load %arg12[%c0_27, %c1024] : memref<176x1152xbf16, #tpu.memory_space<vmem>>, vector<176x128xbf16>
    tpu.vector_store %arg12[%c0_27, %c1024], %33 {strides = array<i32>} : memref<176x1152xbf16, #tpu.memory_space<vmem>>, vector<176x128xbf16>,
    %c0_28 = arith.constant 0 : index
    %c0_29 = arith.constant 0 : index
    %35 = vector.load %arg12[%c0_28, %c0_29] : memref<176x1152xbf16, #tpu.memory_space<vmem>>, vector<176x1152xbf16>
    %c0_30 = arith.constant 0 : index
    %c0_31 = arith.constant 0 : index
    %36 = vector.load %arg4[%c0_30, %c0_31] : memref<1152x32xbf16, #tpu.memory_space<vmem>>, vector<1152x32xbf16>
    %cst_32 = arith.constant dense<0.000000e+00> : vector<176x32xf32>
    %37 = tpu.matmul %35, %36, %cst_32 {dimension_numbers = #tpu.dot_dimension_numbers<[1], [0], [0], [1], [0, 0, 1, 1], [], []>} : vector<176x1152xbf16>, vector<1152x32xbf16>, vector<176x32xf32> -> vector<176x32xf32>
    %c0_33 = arith.constant 0 : index
    %c0_34 = arith.constant 0 : index
    %38 = vector.load %arg5[%c0_33, %c0_34] : memref<1x32xf32, #tpu.memory_space<vmem>>, vector<1x32xf32>
    %39 = vector.broadcast %38 : vector<1x32xf32> to vector<176x32xf32>
    %40 = arith.addf %37, %39 : vector<176x32xf32>
    %c0_35 = arith.constant 0 : index
    %c0_36 = arith.constant 0 : index
    %41 = vector.load %arg13[%c0_35, %c0_36] : memref<176x32xf32, #tpu.memory_space<vmem>>, vector<176x32xf32>
    tpu.vector_store %arg13[%c0_35, %c0_36], %40 {strides = array<i32>} : memref<176x32xf32, #tpu.memory_space<vmem>>, vector<176x32xf32>,
    %c0_37 = arith.constant 0 : index
    %c0_38 = arith.constant 0 : index
    %42 = vector.load %arg13[%c0_37, %c0_38] : memref<176x32xf32, #tpu.memory_space<vmem>>, vector<40x32xf32>
    %43 = arith.truncf %42 : vector<40x32xf32> to vector<40x32xbf16>
    %c0_39 = arith.constant 0 : index
    %c0_40 = arith.constant 0 : index
    %44 = vector.load %arg14[%c0_39, %c0_40] : memref<40x800xbf16, #tpu.memory_space<vmem>>, vector<40x32xbf16>
    tpu.vector_store %arg14[%c0_39, %c0_40], %43 {strides = array<i32>} : memref<40x800xbf16, #tpu.memory_space<vmem>>, vector<40x32xbf16>,
    %c2_41 = arith.constant 2 : index
    %c0_42 = arith.constant 0 : index
    %45 = vector.load %arg13[%c2_41, %c0_42] : memref<176x32xf32, #tpu.memory_space<vmem>>, vector<40x32xf32>
    %46 = arith.truncf %45 : vector<40x32xf32> to vector<40x32xbf16>
    %c0_43 = arith.constant 0 : index
    %c32_44 = arith.constant 32 : index
    %47 = vector.load %arg14[%c0_43, %c32_44] : memref<40x800xbf16, #tpu.memory_space<vmem>>, vector<40x32xbf16>
    tpu.vector_store %arg14[%c0_43, %c32_44], %46 {strides = array<i32>} : memref<40x800xbf16, #tpu.memory_space<vmem>>, vector<40x32xbf16>,
    %c4 = arith.constant 4 : index
    %c0_45 = arith.constant 0 : index
    %48 = vector.load %arg13[%c4, %c0_45] : memref<176x32xf32, #tpu.memory_space<vmem>>, vector<40x32xf32>
    %49 = arith.truncf %48 : vector<40x32xf32> to vector<40x32xbf16>
    %c0_46 = arith.constant 0 : index
    %c64 = arith.constant 64 : index
    %50 = vector.load %arg14[%c0_46, %c64] : memref<40x800xbf16, #tpu.memory_space<vmem>>, vector<40x32xbf16>
    tpu.vector_store %arg14[%c0_46, %c64], %49 {strides = array<i32>} : memref<40x800xbf16, #tpu.memory_space<vmem>>, vector<40x32xbf16>,
    %c6 = arith.constant 6 : index
    %c0_47 = arith.constant 0 : index
    %51 = vector.load %arg13[%c6, %c0_47] : memref<176x32xf32, #tpu.memory_space<vmem>>, vector<40x32xf32>
    %52 = arith.truncf %51 : vector<40x32xf32> to vector<40x32xbf16>
    %c0_48 = arith.constant 0 : index
    %c96 = arith.constant 96 : index
    %53 = vector.load %arg14[%c0_48, %c96] : memref<40x800xbf16, #tpu.memory_space<vmem>>, vector<40x32xbf16>
    tpu.vector_store %arg14[%c0_48, %c96], %52 {strides = array<i32>} : memref<40x800xbf16, #tpu.memory_space<vmem>>, vector<40x32xbf16>,
    %c8 = arith.constant 8 : index
    %c0_49 = arith.constant 0 : index
    %54 = vector.load %arg13[%c8, %c0_49] : memref<176x32xf32, #tpu.memory_space<vmem>>, vector<40x32xf32>
    %55 = arith.truncf %54 : vector<40x32xf32> to vector<40x32xbf16>
    %c0_50 = arith.constant 0 : index
    %c128_51 = arith.constant 128 : index
    %56 = vector.load %arg14[%c0_50, %c128_51] : memref<40x800xbf16, #tpu.memory_space<vmem>>, vector<40x32xbf16>
    tpu.vector_store %arg14[%c0_50, %c128_51], %55 {strides = array<i32>} : memref<40x800xbf16, #tpu.memory_space<vmem>>, vector<40x32xbf16>,
    %c32_52 = arith.constant 32 : index
    %c0_53 = arith.constant 0 : index
    %57 = vector.load %arg13[%c32_52, %c0_53] : memref<176x32xf32, #tpu.memory_space<vmem>>, vector<40x32xf32>
    %58 = arith.truncf %57 : vector<40x32xf32> to vector<40x32xbf16>
    %c0_54 = arith.constant 0 : index
    %c160 = arith.constant 160 : index
    %59 = vector.load %arg14[%c0_54, %c160] : memref<40x800xbf16, #tpu.memory_space<vmem>>, vector<40x32xbf16>
    tpu.vector_store %arg14[%c0_54, %c160], %58 {strides = array<i32>} : memref<40x800xbf16, #tpu.memory_space<vmem>>, vector<40x32xbf16>,
    %c34_55 = arith.constant 34 : index
    %c0_56 = arith.constant 0 : index
    %60 = vector.load %arg13[%c34_55, %c0_56] : memref<176x32xf32, #tpu.memory_space<vmem>>, vector<40x32xf32>
    %61 = arith.truncf %60 : vector<40x32xf32> to vector<40x32xbf16>
    %c0_57 = arith.constant 0 : index
    %c192 = arith.constant 192 : index
    %62 = vector.load %arg14[%c0_57, %c192] : memref<40x800xbf16, #tpu.memory_space<vmem>>, vector<40x32xbf16>
    tpu.vector_store %arg14[%c0_57, %c192], %61 {strides = array<i32>} : memref<40x800xbf16, #tpu.memory_space<vmem>>, vector<40x32xbf16>,
    %c36 = arith.constant 36 : index
    %c0_58 = arith.constant 0 : index
    %63 = vector.load %arg13[%c36, %c0_58] : memref<176x32xf32, #tpu.memory_space<vmem>>, vector<40x32xf32>
    %64 = arith.truncf %63 : vector<40x32xf32> to vector<40x32xbf16>
    %c0_59 = arith.constant 0 : index
    %c224 = arith.constant 224 : index
    %65 = vector.load %arg14[%c0_59, %c224] : memref<40x800xbf16, #tpu.memory_space<vmem>>, vector<40x32xbf16>
    tpu.vector_store %arg14[%c0_59, %c224], %64 {strides = array<i32>} : memref<40x800xbf16, #tpu.memory_space<vmem>>, vector<40x32xbf16>,
    %c38 = arith.constant 38 : index
    %c0_60 = arith.constant 0 : index
    %66 = vector.load %arg13[%c38, %c0_60] : memref<176x32xf32, #tpu.memory_space<vmem>>, vector<40x32xf32>
    %67 = arith.truncf %66 : vector<40x32xf32> to vector<40x32xbf16>
    %c0_61 = arith.constant 0 : index
    %c256_62 = arith.constant 256 : index
    %68 = vector.load %arg14[%c0_61, %c256_62] : memref<40x800xbf16, #tpu.memory_space<vmem>>, vector<40x32xbf16>
    tpu.vector_store %arg14[%c0_61, %c256_62], %67 {strides = array<i32>} : memref<40x800xbf16, #tpu.memory_space<vmem>>, vector<40x32xbf16>,
    %c40 = arith.constant 40 : index
    %c0_63 = arith.constant 0 : index
    %69 = vector.load %arg13[%c40, %c0_63] : memref<176x32xf32, #tpu.memory_space<vmem>>, vector<40x32xf32>
    %70 = arith.truncf %69 : vector<40x32xf32> to vector<40x32xbf16>
    %c0_64 = arith.constant 0 : index
    %c288 = arith.constant 288 : index
    %71 = vector.load %arg14[%c0_64, %c288] : memref<40x800xbf16, #tpu.memory_space<vmem>>, vector<40x32xbf16>
    tpu.vector_store %arg14[%c0_64, %c288], %70 {strides = array<i32>} : memref<40x800xbf16, #tpu.memory_space<vmem>>, vector<40x32xbf16>,
    %c64_65 = arith.constant 64 : index
    %c0_66 = arith.constant 0 : index
    %72 = vector.load %arg13[%c64_65, %c0_66] : memref<176x32xf32, #tpu.memory_space<vmem>>, vector<40x32xf32>
    %73 = arith.truncf %72 : vector<40x32xf32> to vector<40x32xbf16>
    %c0_67 = arith.constant 0 : index
    %c320 = arith.constant 320 : index
    %74 = vector.load %arg14[%c0_67, %c320] : memref<40x800xbf16, #tpu.memory_space<vmem>>, vector<40x32xbf16>
    tpu.vector_store %arg14[%c0_67, %c320], %73 {strides = array<i32>} : memref<40x800xbf16, #tpu.memory_space<vmem>>, vector<40x32xbf16>,
    %c66 = arith.constant 66 : index
    %c0_68 = arith.constant 0 : index
    %75 = vector.load %arg13[%c66, %c0_68] : memref<176x32xf32, #tpu.memory_space<vmem>>, vector<40x32xf32>
    %76 = arith.truncf %75 : vector<40x32xf32> to vector<40x32xbf16>
    %c0_69 = arith.constant 0 : index
    %c352 = arith.constant 352 : index
    %77 = vector.load %arg14[%c0_69, %c352] : memref<40x800xbf16, #tpu.memory_space<vmem>>, vector<40x32xbf16>
    tpu.vector_store %arg14[%c0_69, %c352], %76 {strides = array<i32>} : memref<40x800xbf16, #tpu.memory_space<vmem>>, vector<40x32xbf16>,
    %c68 = arith.constant 68 : index
    %c0_70 = arith.constant 0 : index
    %78 = vector.load %arg13[%c68, %c0_70] : memref<176x32xf32, #tpu.memory_space<vmem>>, vector<40x32xf32>
    %79 = arith.truncf %78 : vector<40x32xf32> to vector<40x32xbf16>
    %c0_71 = arith.constant 0 : index
    %c384_72 = arith.constant 384 : index
    %80 = vector.load %arg14[%c0_71, %c384_72] : memref<40x800xbf16, #tpu.memory_space<vmem>>, vector<40x32xbf16>
    tpu.vector_store %arg14[%c0_71, %c384_72], %79 {strides = array<i32>} : memref<40x800xbf16, #tpu.memory_space<vmem>>, vector<40x32xbf16>,
    %c70 = arith.constant 70 : index
    %c0_73 = arith.constant 0 : index
    %81 = vector.load %arg13[%c70, %c0_73] : memref<176x32xf32, #tpu.memory_space<vmem>>, vector<40x32xf32>
    %82 = arith.truncf %81 : vector<40x32xf32> to vector<40x32xbf16>
    %c0_74 = arith.constant 0 : index
    %c416 = arith.constant 416 : index
    %83 = vector.load %arg14[%c0_74, %c416] : memref<40x800xbf16, #tpu.memory_space<vmem>>, vector<40x32xbf16>
    tpu.vector_store %arg14[%c0_74, %c416], %82 {strides = array<i32>} : memref<40x800xbf16, #tpu.memory_space<vmem>>, vector<40x32xbf16>,
    %c72 = arith.constant 72 : index
    %c0_75 = arith.constant 0 : index
    %84 = vector.load %arg13[%c72, %c0_75] : memref<176x32xf32, #tpu.memory_space<vmem>>, vector<40x32xf32>
    %85 = arith.truncf %84 : vector<40x32xf32> to vector<40x32xbf16>
    %c0_76 = arith.constant 0 : index
    %c448 = arith.constant 448 : index
    %86 = vector.load %arg14[%c0_76, %c448] : memref<40x800xbf16, #tpu.memory_space<vmem>>, vector<40x32xbf16>
    tpu.vector_store %arg14[%c0_76, %c448], %85 {strides = array<i32>} : memref<40x800xbf16, #tpu.memory_space<vmem>>, vector<40x32xbf16>,
    %c96_77 = arith.constant 96 : index
    %c0_78 = arith.constant 0 : index
    %87 = vector.load %arg13[%c96_77, %c0_78] : memref<176x32xf32, #tpu.memory_space<vmem>>, vector<40x32xf32>
    %88 = arith.truncf %87 : vector<40x32xf32> to vector<40x32xbf16>
    %c0_79 = arith.constant 0 : index
    %c480 = arith.constant 480 : index
    %89 = vector.load %arg14[%c0_79, %c480] : memref<40x800xbf16, #tpu.memory_space<vmem>>, vector<40x32xbf16>
    tpu.vector_store %arg14[%c0_79, %c480], %88 {strides = array<i32>} : memref<40x800xbf16, #tpu.memory_space<vmem>>, vector<40x32xbf16>,
    %c98 = arith.constant 98 : index
    %c0_80 = arith.constant 0 : index
    %90 = vector.load %arg13[%c98, %c0_80] : memref<176x32xf32, #tpu.memory_space<vmem>>, vector<40x32xf32>
    %91 = arith.truncf %90 : vector<40x32xf32> to vector<40x32xbf16>
    %c0_81 = arith.constant 0 : index
    %c512_82 = arith.constant 512 : index
    %92 = vector.load %arg14[%c0_81, %c512_82] : memref<40x800xbf16, #tpu.memory_space<vmem>>, vector<40x32xbf16>
    tpu.vector_store %arg14[%c0_81, %c512_82], %91 {strides = array<i32>} : memref<40x800xbf16, #tpu.memory_space<vmem>>, vector<40x32xbf16>,
    %c100 = arith.constant 100 : index
    %c0_83 = arith.constant 0 : index
    %93 = vector.load %arg13[%c100, %c0_83] : memref<176x32xf32, #tpu.memory_space<vmem>>, vector<40x32xf32>
    %94 = arith.truncf %93 : vector<40x32xf32> to vector<40x32xbf16>
    %c0_84 = arith.constant 0 : index
    %c544 = arith.constant 544 : index
    %95 = vector.load %arg14[%c0_84, %c544] : memref<40x800xbf16, #tpu.memory_space<vmem>>, vector<40x32xbf16>
    tpu.vector_store %arg14[%c0_84, %c544], %94 {strides = array<i32>} : memref<40x800xbf16, #tpu.memory_space<vmem>>, vector<40x32xbf16>,
    %c102 = arith.constant 102 : index
    %c0_85 = arith.constant 0 : index
    %96 = vector.load %arg13[%c102, %c0_85] : memref<176x32xf32, #tpu.memory_space<vmem>>, vector<40x32xf32>
    %97 = arith.truncf %96 : vector<40x32xf32> to vector<40x32xbf16>
    %c0_86 = arith.constant 0 : index
    %c576 = arith.constant 576 : index
    %98 = vector.load %arg14[%c0_86, %c576] : memref<40x800xbf16, #tpu.memory_space<vmem>>, vector<40x32xbf16>
    tpu.vector_store %arg14[%c0_86, %c576], %97 {strides = array<i32>} : memref<40x800xbf16, #tpu.memory_space<vmem>>, vector<40x32xbf16>,
    %c104 = arith.constant 104 : index
    %c0_87 = arith.constant 0 : index
    %99 = vector.load %arg13[%c104, %c0_87] : memref<176x32xf32, #tpu.memory_space<vmem>>, vector<40x32xf32>
    %100 = arith.truncf %99 : vector<40x32xf32> to vector<40x32xbf16>
    %c0_88 = arith.constant 0 : index
    %c608 = arith.constant 608 : index
    %101 = vector.load %arg14[%c0_88, %c608] : memref<40x800xbf16, #tpu.memory_space<vmem>>, vector<40x32xbf16>
    tpu.vector_store %arg14[%c0_88, %c608], %100 {strides = array<i32>} : memref<40x800xbf16, #tpu.memory_space<vmem>>, vector<40x32xbf16>,
    %c128_89 = arith.constant 128 : index
    %c0_90 = arith.constant 0 : index
    %102 = vector.load %arg13[%c128_89, %c0_90] : memref<176x32xf32, #tpu.memory_space<vmem>>, vector<40x32xf32>
    %103 = arith.truncf %102 : vector<40x32xf32> to vector<40x32xbf16>
    %c0_91 = arith.constant 0 : index
    %c640_92 = arith.constant 640 : index
    %104 = vector.load %arg14[%c0_91, %c640_92] : memref<40x800xbf16, #tpu.memory_space<vmem>>, vector<40x32xbf16>
    tpu.vector_store %arg14[%c0_91, %c640_92], %103 {strides = array<i32>} : memref<40x800xbf16, #tpu.memory_space<vmem>>, vector<40x32xbf16>,
    %c130 = arith.constant 130 : index
    %c0_93 = arith.constant 0 : index
    %105 = vector.load %arg13[%c130, %c0_93] : memref<176x32xf32, #tpu.memory_space<vmem>>, vector<40x32xf32>
    %106 = arith.truncf %105 : vector<40x32xf32> to vector<40x32xbf16>
    %c0_94 = arith.constant 0 : index
    %c672 = arith.constant 672 : index
    %107 = vector.load %arg14[%c0_94, %c672] : memref<40x800xbf16, #tpu.memory_space<vmem>>, vector<40x32xbf16>
    tpu.vector_store %arg14[%c0_94, %c672], %106 {strides = array<i32>} : memref<40x800xbf16, #tpu.memory_space<vmem>>, vector<40x32xbf16>,
    %c132 = arith.constant 132 : index
    %c0_95 = arith.constant 0 : index
    %108 = vector.load %arg13[%c132, %c0_95] : memref<176x32xf32, #tpu.memory_space<vmem>>, vector<40x32xf32>
    %109 = arith.truncf %108 : vector<40x32xf32> to vector<40x32xbf16>
    %c0_96 = arith.constant 0 : index
    %c704 = arith.constant 704 : index
    %110 = vector.load %arg14[%c0_96, %c704] : memref<40x800xbf16, #tpu.memory_space<vmem>>, vector<40x32xbf16>
    tpu.vector_store %arg14[%c0_96, %c704], %109 {strides = array<i32>} : memref<40x800xbf16, #tpu.memory_space<vmem>>, vector<40x32xbf16>,
    %c134 = arith.constant 134 : index
    %c0_97 = arith.constant 0 : index
    %111 = vector.load %arg13[%c134, %c0_97] : memref<176x32xf32, #tpu.memory_space<vmem>>, vector<40x32xf32>
    %112 = arith.truncf %111 : vector<40x32xf32> to vector<40x32xbf16>
    %c0_98 = arith.constant 0 : index
    %c736 = arith.constant 736 : index
    %113 = vector.load %arg14[%c0_98, %c736] : memref<40x800xbf16, #tpu.memory_space<vmem>>, vector<40x32xbf16>
    tpu.vector_store %arg14[%c0_98, %c736], %112 {strides = array<i32>} : memref<40x800xbf16, #tpu.memory_space<vmem>>, vector<40x32xbf16>,
    %c136 = arith.constant 136 : index
    %c0_99 = arith.constant 0 : index
    %114 = vector.load %arg13[%c136, %c0_99] : memref<176x32xf32, #tpu.memory_space<vmem>>, vector<40x32xf32>
    %115 = arith.truncf %114 : vector<40x32xf32> to vector<40x32xbf16>
    %c0_100 = arith.constant 0 : index
    %c768_101 = arith.constant 768 : index
    %116 = vector.load %arg14[%c0_100, %c768_101] : memref<40x800xbf16, #tpu.memory_space<vmem>>, vector<40x32xbf16>
    tpu.vector_store %arg14[%c0_100, %c768_101], %115 {strides = array<i32>} : memref<40x800xbf16, #tpu.memory_space<vmem>>, vector<40x32xbf16>,
    %c0_102 = arith.constant 0 : index
    %c0_103 = arith.constant 0 : index
    %117 = vector.load %arg14[%c0_102, %c0_103] : memref<40x800xbf16, #tpu.memory_space<vmem>>, vector<40x800xbf16>
    %c0_104 = arith.constant 0 : index
    %c0_105 = arith.constant 0 : index
    %118 = vector.load %arg6[%c0_104, %c0_105] : memref<800x16xbf16, #tpu.memory_space<vmem>>, vector<800x16xbf16>
    %cst_106 = arith.constant dense<0.000000e+00> : vector<40x16xf32>
    %119 = tpu.matmul %117, %118, %cst_106 {dimension_numbers = #tpu.dot_dimension_numbers<[1], [0], [0], [1], [0, 0, 1, 1], [], []>} : vector<40x800xbf16>, vector<800x16xbf16>, vector<40x16xf32> -> vector<40x16xf32>
    %c0_107 = arith.constant 0 : index
    %c0_108 = arith.constant 0 : index
    %120 = vector.load %arg7[%c0_107, %c0_108] : memref<1x16xf32, #tpu.memory_space<vmem>>, vector<1x16xf32>
    %121 = vector.broadcast %120 : vector<1x16xf32> to vector<40x16xf32>
    %122 = arith.addf %119, %121 : vector<40x16xf32>
    %123 = vector.extract_strided_slice %122 {offsets = [0, 0], sizes = [1, 16], strides = [1, 1]} : vector<40x16xf32> to vector<1x16xf32>
    %124 = arith.truncf %123 : vector<1x16xf32> to vector<1x16xbf16>
    %c0_109 = arith.constant 0 : index
    %c0_110 = arith.constant 0 : index
    %125 = vector.load %arg15[%c0_109, %c0_110] : memref<1x64xbf16, #tpu.memory_space<vmem>>, vector<1x16xbf16>
    tpu.vector_store %arg15[%c0_109, %c0_110], %124 {strides = array<i32>} : memref<1x64xbf16, #tpu.memory_space<vmem>>, vector<1x16xbf16>,
    %126 = vector.extract_strided_slice %122 {offsets = [2, 0], sizes = [1, 16], strides = [1, 1]} : vector<40x16xf32> to vector<1x16xf32>
    %127 = arith.truncf %126 : vector<1x16xf32> to vector<1x16xbf16>
    %c0_111 = arith.constant 0 : index
    %c16_112 = arith.constant 16 : index
    %128 = vector.load %arg15[%c0_111, %c16_112] : memref<1x64xbf16, #tpu.memory_space<vmem>>, vector<1x16xbf16>
    tpu.vector_store %arg15[%c0_111, %c16_112], %127 {strides = array<i32>} : memref<1x64xbf16, #tpu.memory_space<vmem>>, vector<1x16xbf16>,
    %129 = vector.extract_strided_slice %122 {offsets = [32, 0], sizes = [1, 16], strides = [1, 1]} : vector<40x16xf32> to vector<1x16xf32>
    %130 = arith.truncf %129 : vector<1x16xf32> to vector<1x16xbf16>
    %c0_113 = arith.constant 0 : index
    %c32_114 = arith.constant 32 : index
    %131 = vector.load %arg15[%c0_113, %c32_114] : memref<1x64xbf16, #tpu.memory_space<vmem>>, vector<1x16xbf16>
    tpu.vector_store %arg15[%c0_113, %c32_114], %130 {strides = array<i32>} : memref<1x64xbf16, #tpu.memory_space<vmem>>, vector<1x16xbf16>,
    %132 = vector.extract_strided_slice %122 {offsets = [34, 0], sizes = [1, 16], strides = [1, 1]} : vector<40x16xf32> to vector<1x16xf32>
    %133 = arith.truncf %132 : vector<1x16xf32> to vector<1x16xbf16>
    %c0_115 = arith.constant 0 : index
    %c48 = arith.constant 48 : index
    %134 = vector.load %arg15[%c0_115, %c48] : memref<1x64xbf16, #tpu.memory_space<vmem>>, vector<1x16xbf16>
    tpu.vector_store %arg15[%c0_115, %c48], %133 {strides = array<i32>} : memref<1x64xbf16, #tpu.memory_space<vmem>>, vector<1x16xbf16>,
    %c0_116 = arith.constant 0 : index
    %c0_117 = arith.constant 0 : index
    %135 = vector.load %arg15[%c0_116, %c0_117] : memref<1x64xbf16, #tpu.memory_space<vmem>>, vector<1x64xbf16>
    %c0_118 = arith.constant 0 : index
    %c0_119 = arith.constant 0 : index
    %136 = vector.load %arg8[%c0_118, %c0_119] : memref<64x128xbf16, #tpu.memory_space<vmem>>, vector<64x128xbf16>
    %cst_120 = arith.constant dense<0.000000e+00> : vector<1x128xf32>
    %137 = tpu.matmul %135, %136, %cst_120 {dimension_numbers = #tpu.dot_dimension_numbers<[1], [0], [0], [1], [0, 0, 1, 1], [], []>} : vector<1x64xbf16>, vector<64x128xbf16>, vector<1x128xf32> -> vector<1x128xf32>
    %c0_121 = arith.constant 0 : index
    %c0_122 = arith.constant 0 : index
    %138 = vector.load %arg9[%c0_121, %c0_122] : memref<1x128xf32, #tpu.memory_space<vmem>>, vector<1x128xf32>
    %139 = arith.addf %137, %138 : vector<1x128xf32>
    %c0_123 = arith.constant 0 : index
    %c0_124 = arith.constant 0 : index
    %c0_125 = arith.constant 0 : index
    %140 = vector.load %arg10[%c0_123, %c0_124, %c0_125] : memref<1x1x128xf32, #tpu.memory_space<vmem>>, vector<1x1x128xf32>
    %141 = vector.shape_cast %140 : vector<1x1x128xf32> to vector<1x128xf32>
    %142 = vector.shape_cast %139 : vector<1x128xf32> to vector<1x1x128xf32>
    tpu.vector_store %arg10[%c0_123, %c0_124, %c0_125], %142 {strides = array<i32>} : memref<1x1x128xf32, #tpu.memory_space<vmem>>, vector<1x1x128xf32>,
    return
  }
  func.func @transform_0(%arg0: i32) -> (i32, i32, i32) {
    %c0_i32 = arith.constant 0 : i32
    %c0_i32_0 = arith.constant 0 : i32
    %c0_i32_1 = arith.constant 0 : i32
    return %arg0, %c0_i32, %c0_i32_0 : i32, i32, i32
  }
  func.func @transform_1(%arg0: i32) -> (i32, i32) {
    %c0_i32 = arith.constant 0 : i32
    %c0_i32_0 = arith.constant 0 : i32
    %c0_i32_1 = arith.constant 0 : i32
    return %c0_i32, %c0_i32_0 : i32, i32
  }
  func.func @transform_2(%arg0: i32) -> (i32, i32) {
    %c0_i32 = arith.constant 0 : i32
    %c0_i32_0 = arith.constant 0 : i32
    %c0_i32_1 = arith.constant 0 : i32
    return %c0_i32, %c0_i32_0 : i32, i32
  }
  func.func @transform_3(%arg0: i32) -> (i32, i32) {
    %c0_i32 = arith.constant 0 : i32
    %c0_i32_0 = arith.constant 0 : i32
    %c0_i32_1 = arith.constant 0 : i32
    return %c0_i32, %c0_i32_0 : i32, i32
  }
  func.func @transform_4(%arg0: i32) -> (i32, i32) {
    %c0_i32 = arith.constant 0 : i32
    %c0_i32_0 = arith.constant 0 : i32
    %c0_i32_1 = arith.constant 0 : i32
    return %c0_i32, %c0_i32_0 : i32, i32
  }
  func.func @transform_5(%arg0: i32) -> (i32, i32) {
    %c0_i32 = arith.constant 0 : i32
    %c0_i32_0 = arith.constant 0 : i32
    %c0_i32_1 = arith.constant 0 : i32
    return %c0_i32, %c0_i32_0 : i32, i32
  }
  func.func @transform_6(%arg0: i32) -> (i32, i32) {
    %c0_i32 = arith.constant 0 : i32
    %c0_i32_0 = arith.constant 0 : i32
    %c0_i32_1 = arith.constant 0 : i32
    return %c0_i32, %c0_i32_0 : i32, i32
  }
  func.func @transform_7(%arg0: i32) -> (i32, i32) {
    %c0_i32 = arith.constant 0 : i32
    %c0_i32_0 = arith.constant 0 : i32
    %c0_i32_1 = arith.constant 0 : i32
    return %c0_i32, %c0_i32_0 : i32, i32
  }
  func.func @transform_8(%arg0: i32) -> (i32, i32) {
    %c0_i32 = arith.constant 0 : i32
    %c0_i32_0 = arith.constant 0 : i32
    %c0_i32_1 = arith.constant 0 : i32
    return %c0_i32, %c0_i32_0 : i32, i32
  }
  func.func @transform_9(%arg0: i32) -> (i32, i32, i32) {
    %c0_i32 = arith.constant 0 : i32
    %c0_i32_0 = arith.constant 0 : i32
    %c0_i32_1 = arith.constant 0 : i32
    return %arg0, %c0_i32, %c0_i32_0 : i32, i32, i32
  }
}

</mosaic_0001>

<llo_original>
// kernel: learner_model_forward.1
$region0: #{learner_model_forward.1}
  #allocation0 [shape = 'u32[]', space=smem, size = 0x4, offset = 0x4, fixed_abs, tag = 'smem constant byte address 0x4 - core index']
  #allocation1 [shape = 'u32[144,128]{1,0:T(1,128)}', space=vmem, size = 0x12000, scoped, tag = 'internal scratch']
  #allocation2 [shape = 'f32[224,128]{1,0:T(8,128)}', space=vmem, size = 0x1c000, scoped, tag = 'scratch operand']
  #allocation3 [shape = 'bf16[176,1152]{1,0:T(16,128)(2,1)}', space=vmem, size = 0x63000, scoped, tag = 'scratch operand']
  #allocation4 [shape = 'f32[176,32]{1,0:T(8,128)}', space=vmem, size = 0x16000, scoped, tag = 'scratch operand']
  #allocation5 [shape = 'bf16[40,800]{1,0:T(8,128)(2,1)}', space=vmem, size = 0x11800, scoped, tag = 'scratch operand']
  #allocation6 [shape = 'bf16[1,64]{1,0:T(2,128)(2,1)}', space=vmem, size = 0x200, scoped, tag = 'scratch operand']
  %s0 = inlined_call_operand.vmem [shape: bf16[2,224,144], index: 0, kind: input, shape index: {}]
  %s1 = inlined_call_operand.vmem [shape: bf16[144,128], index: 1, kind: input, shape index: {}]
  %s2 = inlined_call_operand.vmem [shape: f32[1,128], index: 2, kind: input, shape index: {}]
  %s3 = inlined_call_operand.vmem [shape: bf16[1152,32], index: 3, kind: input, shape index: {}]
  %s4 = inlined_call_operand.vmem [shape: f32[1,32], index: 4, kind: input, shape index: {}]
  %s5 = inlined_call_operand.vmem [shape: bf16[800,16], index: 5, kind: input, shape index: {}]
  %s6 = inlined_call_operand.vmem [shape: f32[1,16], index: 6, kind: input, shape index: {}]
  %s7 = inlined_call_operand.vmem [shape: bf16[64,128], index: 7, kind: input, shape index: {}]
  %s8 = inlined_call_operand.vmem [shape: f32[1,128], index: 8, kind: input, shape index: {}]
  %s9 = inlined_call_operand.hbm [shape: f32[2,1,128], index: 9, kind: output, shape index: {}]
  %s10 = sld [smem:[#allocation0]]
  $region69: #{learner_model_forward.1} parent=0
    _
  %s12 = ssub.s32 1, %s10
  %s13 = scalar_select 0, %s12, %s10
  $region1: #{learner_model_forward.1} parent=0
    #allocation7 [shape = 'u8[1024]{0}', space=vmem, size = 0x400, scoped, tag = 'output window, operand 0']
    #allocation8 [shape = 's32[2]{0}', space=sflag, size = 0x8, scoped, tag = 'scoped memory for learner_model_forward.1']
    %14 = vsyncpa [#allocation8], 0
    %s15 = scalar_lea.sflag [#allocation8], 1
    %16 = vsyncpa %s15, 0
    loop: start=0, step=1, limit=4
    $region2: #{learner_model_forward.1} parent=1 // loop_pre_header
      _
    $region3: #{learner_model_forward.1} parent=1 // loop_header
      %s18 = sphi 0, %s22
      %p19 = scmp.ge.s32.totalorder %s18, 4
      %s28 = sphi 0, %s30
      %s31 = sphi 0, %s28
      %s32 = sphi 0, %s31
      %s48 = sphi 0, %s32
      %s52 = sphi 0, %s52
      %s54 = sphi 0, %s52
      %s55 = sphi 0, %s54
      %s69 = sphi 0, %s55
      %s73 = sphi 0, %s73
      %s75 = sphi 0, %s73
      %s76 = sphi 0, %s75
      %s90 = sphi 0, %s76
      %s94 = sphi 0, %s94
      %s96 = sphi 0, %s94
      %s97 = sphi 0, %s96
      %s111 = sphi 0, %s97
      %s115 = sphi 0, %s115
      %s117 = sphi 0, %s115
      %s118 = sphi 0, %s117
      %s132 = sphi 0, %s118
      %s136 = sphi 0, %s136
      %s138 = sphi 0, %s136
      %s139 = sphi 0, %s138
      %s153 = sphi 0, %s139
      %s157 = sphi 0, %s157
      %s159 = sphi 0, %s157
      %s160 = sphi 0, %s159
      %s174 = sphi 0, %s160
      %s178 = sphi 0, %s178
      %s180 = sphi 0, %s178
      %s181 = sphi 0, %s180
      %s195 = sphi 0, %s181
      %s199 = sphi 0, %s199
      %s201 = sphi 0, %s199
      %s202 = sphi 0, %s201
      %s216 = sphi 0, %s202
      %s222 = sphi 0, %s224
      %s225 = sphi 0, %s222
      %s226 = sphi 0, %s225
      %s242 = sphi 0, %s226
    $region4: #{learner_model_forward.1} parent=1 // loop_header_branch
      %21 = sbr.rel (%p19) target = $region8
    $region5: #{learner_model_forward.1} parent=1 // loop_body
      %s23 = ssub.s32 %s18, 1
      %s24 = ssub.s32 %s18, 2
      %s25 = sadd.s32 %s18, 1
      %s26 = ssub.s32 %s18, %s25
      %p27 = scmp.eq.s32.totalorder %s26, 0
      %s29 = sadd.s32 %s28, 1
      %s30 = scalar_select %p27, %s28, %s29
      %p33 = pneg %p27
      %p34 = scmp.eq.s32.totalorder %s18, 1
      %p35 = por %p33, %p34
      %p36 = scmp.ne.s32.totalorder %s28, %s31
      %p37 = scmp.eq.s32.totalorder %s18, 0
      %p38 = por %p36, %p37
      %p39 = scmp.ne.s32.totalorder %s28, %s31
      %p40 = scmp.eq.s32.totalorder %s23, 1
      %p41 = por %p39, %p40
      %p42 = scmp.ne.s32.totalorder %s31, %s32
      %p43 = scmp.eq.s32.totalorder %s23, 0
      %p44 = por %p42, %p43
      %p45 = scmp.ne.s32.totalorder %s31, %s32
      %p46 = scmp.eq.s32.totalorder %s24, 1
      %p47 = por %p45, %p46
      %p49 = scmp.ne.s32.totalorder %s32, %s48
      %p50 = scmp.eq.s32.totalorder %s24, 0
      %p51 = por %p49, %p50
      %s53 = sadd.s32 %s52, 1
      %p56 = scmp.eq.s32.totalorder %s18, 1
      %p57 = scmp.ne.s32.totalorder %s52, %s54
      %p58 = scmp.eq.s32.totalorder %s18, 0
      %p59 = por %p57, %p58
      %p60 = scmp.ne.s32.totalorder %s52, %s54
      %p61 = scmp.eq.s32.totalorder %s23, 1
      %p62 = por %p60, %p61
      %p63 = scmp.ne.s32.totalorder %s54, %s55
      %p64 = scmp.eq.s32.totalorder %s23, 0
      %p65 = por %p63, %p64
      %p66 = scmp.ne.s32.totalorder %s54, %s55
      %p67 = scmp.eq.s32.totalorder %s24, 1
      %p68 = por %p66, %p67
      %p70 = scmp.ne.s32.totalorder %s55, %s69
      %p71 = scmp.eq.s32.totalorder %s24, 0
      %p72 = por %p70, %p71
      %s74 = sadd.s32 %s73, 1
      %p77 = scmp.eq.s32.totalorder %s18, 1
      %p78 = scmp.ne.s32.totalorder %s73, %s75
      %p79 = scmp.eq.s32.totalorder %s18, 0
      %p80 = por %p78, %p79
      %p81 = scmp.ne.s32.totalorder %s73, %s75
      %p82 = scmp.eq.s32.totalorder %s23, 1
      %p83 = por %p81, %p82
      %p84 = scmp.ne.s32.totalorder %s75, %s76
      %p85 = scmp.eq.s32.totalorder %s23, 0
      %p86 = por %p84, %p85
      %p87 = scmp.ne.s32.totalorder %s75, %s76
      %p88 = scmp.eq.s32.totalorder %s24, 1
      %p89 = por %p87, %p88
      %p91 = scmp.ne.s32.totalorder %s76, %s90
      %p92 = scmp.eq.s32.totalorder %s24, 0
      %p93 = por %p91, %p92
      %s95 = sadd.s32 %s94, 1
      %p98 = scmp.eq.s32.totalorder %s18, 1
      %p99 = scmp.ne.s32.totalorder %s94, %s96
      %p100 = scmp.eq.s32.totalorder %s18, 0
      %p101 = por %p99, %p100
      %p102 = scmp.ne.s32.totalorder %s94, %s96
      %p103 = scmp.eq.s32.totalorder %s23, 1
      %p104 = por %p102, %p103
      %p105 = scmp.ne.s32.totalorder %s96, %s97
      %p106 = scmp.eq.s32.totalorder %s23, 0
      %p107 = por %p105, %p106
      %p108 = scmp.ne.s32.totalorder %s96, %s97
      %p109 = scmp.eq.s32.totalorder %s24, 1
      %p110 = por %p108, %p109
      %p112 = scmp.ne.s32.totalorder %s97, %s111
      %p113 = scmp.eq.s32.totalorder %s24, 0
      %p114 = por %p112, %p113
      %s116 = sadd.s32 %s115, 1
      %p119 = scmp.eq.s32.totalorder %s18, 1
      %p120 = scmp.ne.s32.totalorder %s115, %s117
      %p121 = scmp.eq.s32.totalorder %s18, 0
      %p122 = por %p120, %p121
      %p123 = scmp.ne.s32.totalorder %s115, %s117
      %p124 = scmp.eq.s32.totalorder %s23, 1
      %p125 = por %p123, %p124
      %p126 = scmp.ne.s32.totalorder %s117, %s118
      %p127 = scmp.eq.s32.totalorder %s23, 0
      %p128 = por %p126, %p127
      %p129 = scmp.ne.s32.totalorder %s117, %s118
      %p130 = scmp.eq.s32.totalorder %s24, 1
      %p131 = por %p129, %p130
      %p133 = scmp.ne.s32.totalorder %s118, %s132
      %p134 = scmp.eq.s32.totalorder %s24, 0
      %p135 = por %p133, %p134
      %s137 = sadd.s32 %s136, 1
      %p140 = scmp.eq.s32.totalorder %s18, 1
      %p141 = scmp.ne.s32.totalorder %s136, %s138
      %p142 = scmp.eq.s32.totalorder %s18, 0
      %p143 = por %p141, %p142
      %p144 = scmp.ne.s32.totalorder %s136, %s138
      %p145 = scmp.eq.s32.totalorder %s23, 1
      %p146 = por %p144, %p145
      %p147 = scmp.ne.s32.totalorder %s138, %s139
      %p148 = scmp.eq.s32.totalorder %s23, 0
      %p149 = por %p147, %p148
      %p150 = scmp.ne.s32.totalorder %s138, %s139
      %p151 = scmp.eq.s32.totalorder %s24, 1
      %p152 = por %p150, %p151
      %p154 = scmp.ne.s32.totalorder %s139, %s153
      %p155 = scmp.eq.s32.totalorder %s24, 0
      %p156 = por %p154, %p155
      %s158 = sadd.s32 %s157, 1
      %p161 = scmp.eq.s32.totalorder %s18, 1
      %p162 = scmp.ne.s32.totalorder %s157, %s159
      %p163 = scmp.eq.s32.totalorder %s18, 0
      %p164 = por %p162, %p163
      %p165 = scmp.ne.s32.totalorder %s157, %s159
      %p166 = scmp.eq.s32.totalorder %s23, 1
      %p167 = por %p165, %p166
      %p168 = scmp.ne.s32.totalorder %s159, %s160
      %p169 = scmp.eq.s32.totalorder %s23, 0
      %p170 = por %p168, %p169
      %p171 = scmp.ne.s32.totalorder %s159, %s160
      %p172 = scmp.eq.s32.totalorder %s24, 1
      %p173 = por %p171, %p172
      %p175 = scmp.ne.s32.totalorder %s160, %s174
      %p176 = scmp.eq.s32.totalorder %s24, 0
      %p177 = por %p175, %p176
      %s179 = sadd.s32 %s178, 1
      %p182 = scmp.eq.s32.totalorder %s18, 1
      %p183 = scmp.ne.s32.totalorder %s178, %s180
      %p184 = scmp.eq.s32.totalorder %s18, 0
      %p185 = por %p183, %p184
      %p186 = scmp.ne.s32.totalorder %s178, %s180
      %p187 = scmp.eq.s32.totalorder %s23, 1
      %p188 = por %p186, %p187
      %p189 = scmp.ne.s32.totalorder %s180, %s181
      %p190 = scmp.eq.s32.totalorder %s23, 0
      %p191 = por %p189, %p190
      %p192 = scmp.ne.s32.totalorder %s180, %s181
      %p193 = scmp.eq.s32.totalorder %s24, 1
      %p194 = por %p192, %p193
      %p196 = scmp.ne.s32.totalorder %s181, %s195
      %p197 = scmp.eq.s32.totalorder %s24, 0
      %p198 = por %p196, %p197
      %s200 = sadd.s32 %s199, 1
      %p203 = scmp.eq.s32.totalorder %s18, 1
      %p204 = scmp.ne.s32.totalorder %s199, %s201
      %p205 = scmp.eq.s32.totalorder %s18, 0
      %p206 = por %p204, %p205
      %p207 = scmp.ne.s32.totalorder %s199, %s201
      %p208 = scmp.eq.s32.totalorder %s23, 1
      %p209 = por %p207, %p208
      %p210 = scmp.ne.s32.totalorder %s201, %s202
      %p211 = scmp.eq.s32.totalorder %s23, 0
      %p212 = por %p210, %p211
      %p213 = scmp.ne.s32.totalorder %s201, %s202
      %p214 = scmp.eq.s32.totalorder %s24, 1
      %p215 = por %p213, %p214
      %p217 = scmp.ne.s32.totalorder %s202, %s216
      %p218 = scmp.eq.s32.totalorder %s24, 0
      %p219 = por %p217, %p218
      %s220 = ssub.s32 %s18, %s25
      %p221 = scmp.eq.s32.totalorder %s220, 0
      %s223 = sadd.s32 %s222, 1
      %s224 = scalar_select %p221, %s222, %s223
      %p227 = pneg %p221
      %p228 = scmp.eq.s32.totalorder %s18, 1
      %p229 = por %p227, %p228
      %p230 = scmp.ne.s32.totalorder %s222, %s225
      %p231 = scmp.eq.s32.totalorder %s18, 0
      %p232 = por %p230, %p231
      %p233 = scmp.ne.s32.totalorder %s222, %s225
      %p234 = scmp.eq.s32.totalorder %s23, 1
      %p235 = por %p233, %p234
      %p236 = scmp.ne.s32.totalorder %s225, %s226
      %p237 = scmp.eq.s32.totalorder %s23, 0
      %p238 = por %p236, %p237
      %p239 = scmp.ne.s32.totalorder %s225, %s226
      %p240 = scmp.eq.s32.totalorder %s24, 1
      %p241 = por %p239, %p240
      %p243 = scmp.ne.s32.totalorder %s226, %s242
      %p244 = scmp.eq.s32.totalorder %s24, 0
      %p245 = por %p243, %p244
      %p246 = scmp.le.s32.totalorder 1, %s18
      %p247 = scmp.lt.s32.totalorder %s18, 3
      %p248 = pnand %p246, %p247
      %p249 = pneg %p248
      // Predicated region
      $region9: #{learner_model_forward.1} parent=5 // pred_check
        _
      $region10: #{learner_model_forward.1} parent=5 // pred_check_branch
        %251 = sbr.rel (%p248) target = $region12
      $region11: #{learner_model_forward.1} parent=5 // pred_region
        %s252 = ssub.s32 %s18, 1
        // Predicated region
        $region13: #{learner_model_forward.1} parent=11 // pred_check
          %p253 = pneg %p65
        $region14: #{learner_model_forward.1} parent=11 // pred_check_branch
          %255 = sbr.rel (%p253) target = $region16
        $region15: #{learner_model_forward.1} parent=11 // pred_region
          _
        $region16: #{learner_model_forward.1} parent=11 // pred_fallthru
          _
        // Predicated region
        $region17: #{learner_model_forward.1} parent=11 // pred_check
          %p256 = pneg %p86
        $region18: #{learner_model_forward.1} parent=11 // pred_check_branch
          %258 = sbr.rel (%p256) target = $region20
        $region19: #{learner_model_forward.1} parent=11 // pred_region
          _
        $region20: #{learner_model_forward.1} parent=11 // pred_fallthru
          _
        // Predicated region
        $region21: #{learner_model_forward.1} parent=11 // pred_check
          %p259 = pneg %p107
        $region22: #{learner_model_forward.1} parent=11 // pred_check_branch
          %261 = sbr.rel (%p259) target = $region24
        $region23: #{learner_model_forward.1} parent=11 // pred_region
          _
        $region24: #{learner_model_forward.1} parent=11 // pred_fallthru
          _
        // Predicated region
        $region25: #{learner_model_forward.1} parent=11 // pred_check
          %p262 = pneg %p128
        $region26: #{learner_model_forward.1} parent=11 // pred_check_branch
          %264 = sbr.rel (%p262) target = $region28
        $region27: #{learner_model_forward.1} parent=11 // pred_region
          _
        $region28: #{learner_model_forward.1} parent=11 // pred_fallthru
          _
        // Predicated region
        $region29: #{learner_model_forward.1} parent=11 // pred_check
          %p265 = pneg %p149
        $region30: #{learner_model_forward.1} parent=11 // pred_check_branch
          %267 = sbr.rel (%p265) target = $region32
        $region31: #{learner_model_forward.1} parent=11 // pred_region
          _
        $region32: #{learner_model_forward.1} parent=11 // pred_fallthru
          _
        // Predicated region
        $region33: #{learner_model_forward.1} parent=11 // pred_check
          %p268 = pneg %p170
        $region34: #{learner_model_forward.1} parent=11 // pred_check_branch
          %270 = sbr.rel (%p268) target = $region36
        $region35: #{learner_model_forward.1} parent=11 // pred_region
          _
        $region36: #{learner_model_forward.1} parent=11 // pred_fallthru
          _
        // Predicated region
        $region37: #{learner_model_forward.1} parent=11 // pred_check
          %p271 = pneg %p191
        $region38: #{learner_model_forward.1} parent=11 // pred_check_branch
          %273 = sbr.rel (%p271) target = $region40
        $region39: #{learner_model_forward.1} parent=11 // pred_region
          _
        $region40: #{learner_model_forward.1} parent=11 // pred_fallthru
          _
        // Predicated region
        $region41: #{learner_model_forward.1} parent=11 // pred_check
          %p274 = pneg %p212
        $region42: #{learner_model_forward.1} parent=11 // pred_check_branch
          %276 = sbr.rel (%p274) target = $region44
        $region43: #{learner_model_forward.1} parent=11 // pred_region
          _
        $region44: #{learner_model_forward.1} parent=11 // pred_fallthru
          _
      $region12: #{learner_model_forward.1} parent=5 // pred_fallthru
        _
      %p277 = scmp.lt.s32.totalorder %s18, 2
      // Predicated region
      $region45: #{learner_model_forward.1} parent=5 // pred_check
        %p278 = pneg %p277
      $region46: #{learner_model_forward.1} parent=5 // pred_check_branch
        %280 = sbr.rel (%p278) target = $region48
      $region47: #{learner_model_forward.1} parent=5 // pred_region
        // Predicated region
        $region49: #{learner_model_forward.1} parent=47 // pred_check
          %p281 = pneg %p38
        $region50: #{learner_model_forward.1} parent=47 // pred_check_branch
          %283 = sbr.rel (%p281) target = $region52
        $region51: #{learner_model_forward.1} parent=47 // pred_region
          %p284 = scmp.lt.s32.totalorder %s18, 1
          %s285 = scalar_select %p284, %s18, 1
          %s286 = smul.addr %s285, 56
          %s287 = smul.addr %s286, 4
          %s288 = scalar_lea.vmem %s0, %s287
        $region52: #{learner_model_forward.1} parent=47 // pred_fallthru
          _
      $region48: #{learner_model_forward.1} parent=5 // pred_fallthru
        _
      %p289 = scmp.le.s32.totalorder 1, %s18
      %p290 = scmp.lt.s32.totalorder %s18, 3
      %p291 = pnand %p289, %p290
      %p292 = pneg %p291
      // Predicated region
      $region53: #{learner_model_forward.1} parent=5 // pred_check
        _
      $region54: #{learner_model_forward.1} parent=5 // pred_check_branch
        %294 = sbr.rel (%p291) target = $region56
      $region55: #{learner_model_forward.1} parent=5 // pred_region
        %s295 = ssub.s32 %s18, 1
        %p296 = scmp.lt.s32.totalorder %s23, 1
        %s297 = scalar_select %p296, %s23, 1
        %s298 = smul.addr %s297, 56
        %s299 = smul.addr %s298, 4
        %s300 = scalar_lea.vmem %s0, %s299
        %p301 = pneg %p44
        %p302 = pneg %p41
        %p303 = pneg %p65
        %p304 = pneg %p62
        %p305 = pneg %p86
        %p306 = pneg %p83
        %p307 = pneg %p107
        %p308 = pneg %p104
        %p309 = pneg %p128
        %p310 = pneg %p125
        %p311 = pneg %p149
        %p312 = pneg %p146
        %p313 = pneg %p170
        %p314 = pneg %p167
        %p315 = pneg %p191
        %p316 = pneg %p188
        %p317 = pneg %p212
        %p318 = pneg %p209
        %p319 = pneg %p238
        %p320 = pneg %p235
        %s321 = sand.u32 %s225, 1
        %s322 = scalar_lea.sflag [#allocation8], %s321
        %s323 = sand.u32 %s225, 1
        %s324 = scalar_lea.vmem [#allocation7], %s323
        %p325 = scmp.lt.s32.totalorder %s23, 1
        %s326 = scalar_select %p325, %s23, 1
        %s327 = smul.addr %s326, 56
        %s328 = smul.addr %s327, 4
        %s329 = scalar_lea.vmem %s0, %s328
        %v331 = vld [vmem:[%s329] sm:$0xff]
        %v332 = vld [vmem:[%s329 + $0x8] sm:$0xff]
        %v333 = vld [vmem:[%s329 + $0x10] sm:$0xff]
        %v334 = vld [vmem:[%s329 + $0x18] sm:$0xff]
        %v335 = vld [vmem:[%s329 + $0x20] sm:$0xff]
        %v336 = vld [vmem:[%s329 + $0x28] sm:$0xff]
        %v337 = vld [vmem:[%s329 + $0x30] sm:$0xff]
        %v338 = vld [vmem:[%s329 + $0x38] sm:$0xff]
        %v339 = vld [vmem:[%s329 + $0x40] sm:$0xff]
        %v340 = vld [vmem:[%s329 + $0x48] sm:$0xff]
        %v341 = vld [vmem:[%s329 + $0x50] sm:$0xff]
        %v342 = vld [vmem:[%s329 + $0x58] sm:$0xff]
        %v343 = vld [vmem:[%s329 + $0x60] sm:$0xff]
        %v344 = vld [vmem:[%s329 + $0x68] sm:$0xff]
        %v345 = vld [vmem:[%s329 + $0x70] sm:$0xff]
        %v346 = vld [vmem:[%s329 + $0x78] sm:$0xff]
        %v347 = vld [vmem:[%s329 + $0x80] sm:$0xff]
        %v348 = vld [vmem:[%s329 + $0x88] sm:$0xff]
        %v349 = vld [vmem:[%s329 + $0x90] sm:$0xff]
        %v350 = vld [vmem:[%s329 + $0x98] sm:$0xff]
        %v351 = vld [vmem:[%s329 + $0xa0] sm:$0xff]
        %v352 = vld [vmem:[%s329 + $0xa8] sm:$0xff]
        %v353 = vld [vmem:[%s329 + $0xb0] sm:$0xff]
        %v354 = vld [vmem:[%s329 + $0xb8] sm:$0xff]
        %v355 = vld [vmem:[%s329 + $0xc0] sm:$0xff]
        %v356 = vld [vmem:[%s329 + $0xc8] sm:$0xff]
        %v357 = vld [vmem:[%s329 + $0xd0] sm:$0xff]
        %v358 = vld [vmem:[%s329 + $0xd8] sm:$0xff]
        %v359 = vld [vmem:[%s1] sm:$0xf]
        %v360 = vld [vmem:[%s1 + $0x4] sm:$0xf]
        %v361 = vld [vmem:[%s1 + $0x8] sm:$0xf]
        %v362 = vld [vmem:[%s1 + $0xc] sm:$0xf]
        %v363 = vld [vmem:[%s1 + $0x10] sm:$0xf]
        %v364 = vld [vmem:[%s1 + $0x14] sm:$0xf]
        %v365 = vld [vmem:[%s1 + $0x18] sm:$0xf]
        %v366 = vld [vmem:[%s1 + $0x1c] sm:$0xf]
        %v367 = vld [vmem:[%s1 + $0x20] sm:$0xf]
        %v368 = vld [vmem:[%s1 + $0x24] sm:$0xf]
        %v369 = vld [vmem:[%s1 + $0x28] sm:$0xf]
        %v370 = vld [vmem:[%s1 + $0x2c] sm:$0xf]
        %v371 = vld [vmem:[%s1 + $0x30] sm:$0xf]
        %v372 = vld [vmem:[%s1 + $0x34] sm:$0xf]
        %v373 = vld [vmem:[%s1 + $0x38] sm:$0xf]
        %v374 = vld [vmem:[%s1 + $0x3c] sm:$0xf]
        %v375 = vld [vmem:[%s1 + $0x40] sm:$0xf]
        %v376 = vld [vmem:[%s1 + $0x44] sm:$0xf]
        %v377 = vld [vmem:[%s2] sm:$0x1]
        %v379 = vlaneseq
        %v380 = vshrl.u32 %v379, 7
        %v381 = vsub.s32 0, %v380
        %v382 = vrot.slane %v377, %v381
        %v412 = vunpack.c.l.b16 %v331
        %v413 = vunpack.c.h.b16 %v331
        %v414 = vunpack.c.l.b16 %v332
        %v415 = vunpack.c.h.b16 %v332
        %v416 = vunpack.c.l.b16 %v333
        %v417 = vunpack.c.h.b16 %v333
        %v418 = vunpack.c.l.b16 %v334
        %v419 = vunpack.c.h.b16 %v334
        %v420 = vunpack.c.l.b16 %v335
        %v421 = vunpack.c.h.b16 %v335
        %v422 = vunpack.c.l.b16 %v336
        %v423 = vunpack.c.h.b16 %v336
        %v424 = vunpack.c.l.b16 %v337
        %v425 = vunpack.c.h.b16 %v337
        %v426 = vunpack.c.l.b16 %v338
        %v427 = vunpack.c.h.b16 %v338
        %v428 = vunpack.c.l.b16 %v339
        %v429 = vunpack.c.h.b16 %v339
        %v430 = vunpack.c.l.b16 %v340
        %v431 = vunpack.c.h.b16 %v340
        %v432 = vunpack.c.l.b16 %v341
        %v433 = vunpack.c.h.b16 %v341
        %v434 = vunpack.c.l.b16 %v342
        %v435 = vunpack.c.h.b16 %v342
        %v436 = vunpack.c.l.b16 %v343
        %v437 = vunpack.c.h.b16 %v343
        %v438 = vunpack.c.l.b16 %v344
        %v439 = vunpack.c.h.b16 %v344
        %v440 = vunpack.c.l.b16 %v345
        %v441 = vunpack.c.h.b16 %v345
        %v442 = vunpack.c.l.b16 %v346
        %v443 = vunpack.c.h.b16 %v346
        %v444 = vunpack.c.l.b16 %v347
        %v445 = vunpack.c.h.b16 %v347
        %v446 = vunpack.c.l.b16 %v348
        %v447 = vunpack.c.h.b16 %v348
        %v448 = vunpack.c.l.b16 %v349
        %v449 = vunpack.c.h.b16 %v349
        %v450 = vunpack.c.l.b16 %v350
        %v451 = vunpack.c.h.b16 %v350
        %v452 = vunpack.c.l.b16 %v351
        %v453 = vunpack.c.h.b16 %v351
        %v454 = vunpack.c.l.b16 %v352
        %v455 = vunpack.c.h.b16 %v352
        %v456 = vunpack.c.l.b16 %v353
        %v457 = vunpack.c.h.b16 %v353
        %v458 = vunpack.c.l.b16 %v354
        %v459 = vunpack.c.h.b16 %v354
        %v460 = vunpack.c.l.b16 %v355
        %v461 = vunpack.c.h.b16 %v355
        %v462 = vunpack.c.l.b16 %v356
        %v463 = vunpack.c.h.b16 %v356
        %v464 = vunpack.c.l.b16 %v357
        %v465 = vunpack.c.h.b16 %v357
        %v466 = vunpack.c.l.b16 %v358
        %v467 = vunpack.c.h.b16 %v358
        %v468 = vpack.c.b16 %v414, %v412
        %v469 = vpack.c.b16 %v415, %v413
        %v470 = vpack.c.b16 %v418, %v416
        %v471 = vpack.c.b16 %v419, %v417
        %v472 = vpack.c.b16 %v422, %v420
        %v473 = vpack.c.b16 %v423, %v421
        %v474 = vpack.c.b16 %v426, %v424
        %v475 = vpack.c.b16 %v427, %v425
        %v476 = vpack.c.b16 %v430, %v428
        %v477 = vpack.c.b16 %v431, %v429
        %v478 = vpack.c.b16 %v434, %v432
        %v479 = vpack.c.b16 %v435, %v433
        %v480 = vpack.c.b16 %v438, %v436
        %v481 = vpack.c.b16 %v439, %v437
        %v482 = vpack.c.b16 %v442, %v440
        %v483 = vpack.c.b16 %v443, %v441
        %v484 = vpack.c.b16 %v446, %v444
        %v485 = vpack.c.b16 %v447, %v445
        %v486 = vpack.c.b16 %v450, %v448
        %v487 = vpack.c.b16 %v451, %v449
        %v488 = vpack.c.b16 %v454, %v452
        %v489 = vpack.c.b16 %v455, %v453
        %v490 = vpack.c.b16 %v458, %v456
        %v491 = vpack.c.b16 %v459, %v457
        %v492 = vpack.c.b16 %v462, %v460
        %v493 = vpack.c.b16 %v463, %v461
        %v494 = vpack.c.b16 %v466, %v464
        %v495 = vpack.c.b16 %v467, %v465
        %v528 = vunpack.c.l.b16 %v359
        %v529 = vunpack.c.l.b16 %v360
        %v530 = vunpack.c.l.b16 %v361
        %v531 = vunpack.c.l.b16 %v362
        %v532 = vunpack.c.l.b16 %v363
        %v533 = vunpack.c.l.b16 %v364
        %v534 = vunpack.c.l.b16 %v365
        %v535 = vunpack.c.l.b16 %v366
        %v536 = vunpack.c.l.b16 %v367
        %v537 = vunpack.c.l.b16 %v368
        %v538 = vunpack.c.l.b16 %v369
        %v539 = vunpack.c.l.b16 %v370
        %v540 = vunpack.c.l.b16 %v371
        %v541 = vunpack.c.l.b16 %v372
        %v542 = vunpack.c.l.b16 %v373
        %v543 = vunpack.c.l.b16 %v374
        %v544 = vunpack.c.l.b16 %v375
        %v545 = vunpack.c.l.b16 %v376
        %v546 = vpack.c.b16 %v529, %v528
        %v547 = vpack.c.b16 %v531, %v530
        %v548 = vpack.c.b16 %v533, %v532
        %v549 = vpack.c.b16 %v535, %v534
        %v550 = vpack.c.b16 %v537, %v536
        %v551 = vpack.c.b16 %v539, %v538
        %v552 = vpack.c.b16 %v541, %v540
        %v553 = vpack.c.b16 %v543, %v542
        %v554 = vpack.c.b16 %v545, %v544
        %vm564 = vcmask 130048
        %v566 = vsel %vm564, %v469, 0
        %v569 = vsel %vm564, %v471, 0
        %v572 = vsel %vm564, %v473, 0
        %v575 = vsel %vm564, %v475, 0
        %v578 = vsel %vm564, %v477, 0
        %v581 = vsel %vm564, %v479, 0
        %v584 = vsel %vm564, %v481, 0
        %v587 = vsel %vm564, %v483, 0
        %v590 = vsel %vm564, %v485, 0
        %v593 = vsel %vm564, %v487, 0
        %v596 = vsel %vm564, %v489, 0
        %v599 = vsel %vm564, %v491, 0
        %v602 = vsel %vm564, %v493, 0
        %v605 = vsel %vm564, %v495, 0
        %607 = vmatprep.subr.bf16.mxu0 0
        %608 = vmatpush1.bf16.msra.mxu0 %v546
        %609 = vmatprep.subr.bf16.mxu0 0
        %610 = vmatpush1.bf16.msra.mxu0 %v547
        %611 = vmatprep.subr.bf16.mxu0 0
        %612 = vmatpush1.bf16.msra.mxu0 %v548
        %613 = vmatprep.subr.bf16.mxu0 0
        %614 = vmatpush1.bf16.msra.mxu0 %v549
        %615 = vmatprep.subr.bf16.mxu0 0
        %616 = vmatpush1.bf16.msra.mxu0 %v550
        %617 = vmatprep.subr.bf16.mxu0 0
        %618 = vmatpush1.bf16.msra.mxu0 %v551
        %619 = vmatprep.subr.bf16.mxu0 0
        %620 = vmatpush1.bf16.msra.mxu0 %v552
        %621 = vmatprep.subr.bf16.mxu0 0
        %622 = vmatpush1.bf16.msra.mxu0 %v553
        %623 = vmatprep.subr.bf16.mxu0 0
        %624 = vmatpush1.bf16.msra.mxu0 %v554
        %625 = vmatprep.subr.bf16.mxu0 0
        %626 = vmatpush1.bf16.msra.mxu0 0
        %627 = vmatprep.subr.bf16.mxu0 0
        %628 = vmatpush1.bf16.msra.mxu0 0
        %629 = vmatprep.subr.bf16.mxu0 0
        %630 = vmatpush1.bf16.msra.mxu0 0
        %631 = vmatprep.subr.bf16.mxu0 0
        %632 = vmatpush1.bf16.msra.mxu0 0
        %633 = vmatprep.subr.bf16.mxu0 0
        %634 = vmatpush1.bf16.msra.mxu0 0
        %635 = vmatprep.subr.bf16.mxu0 0
        %636 = vmatpush1.bf16.msra.mxu0 0
        %637 = vmatprep.subr.bf16.mxu0 0
        %638 = vmatpush1.bf16.msra.mxu0 0
        %639 = vmatprep.mubr.bf16.mxu0 %v566
        %640 = vmatmul.mubr.bf16.gmra.mrb[0].mxu0 %v468
        %v641 = vpop.f32.mrb[0].mxu0
        %v642 = vadd.f32 %v382, %v641
        %v643 = vpop.f32.mrb[0].mxu0
        %v644 = vpop.f32.mrb[0].mxu0
        %v645 = vadd.f32 %v382, %v644
        %v646 = vpop.f32.mrb[0].mxu0
        %647 = vmatprep.mubr.bf16.mxu0 %v569
        %648 = vmatmul.mubr.bf16.gmra.mrb[0].mxu0 %v470
        %v649 = vpop.f32.mrb[0].mxu0
        %v650 = vadd.f32 %v382, %v649
        %v651 = vpop.f32.mrb[0].mxu0
        %v652 = vpop.f32.mrb[0].mxu0
        %v653 = vadd.f32 %v382, %v652
        %v654 = vpop.f32.mrb[0].mxu0
        %655 = vmatprep.mubr.bf16.mxu0 %v572
        %656 = vmatmul.mubr.bf16.gmra.mrb[0].mxu0 %v472
        %v657 = vpop.f32.mrb[0].mxu0
        %v658 = vadd.f32 %v382, %v657
        %v659 = vpop.f32.mrb[0].mxu0
        %v660 = vpop.f32.mrb[0].mxu0
        %v661 = vadd.f32 %v382, %v660
        %v662 = vpop.f32.mrb[0].mxu0
        %663 = vmatprep.mubr.bf16.mxu0 %v575
        %664 = vmatmul.mubr.bf16.gmra.mrb[0].mxu0 %v474
        %v665 = vpop.f32.mrb[0].mxu0
        %v666 = vadd.f32 %v382, %v665
        %v667 = vpop.f32.mrb[0].mxu0
        %v668 = vpop.f32.mrb[0].mxu0
        %v669 = vadd.f32 %v382, %v668
        %v670 = vpop.f32.mrb[0].mxu0
        %671 = vmatprep.mubr.bf16.mxu0 %v578
        %672 = vmatmul.mubr.bf16.gmra.mrb[0].mxu0 %v476
        %v673 = vpop.f32.mrb[0].mxu0
        %v674 = vadd.f32 %v382, %v673
        %v675 = vpop.f32.mrb[0].mxu0
        %v676 = vpop.f32.mrb[0].mxu0
        %v677 = vadd.f32 %v382, %v676
        %v678 = vpop.f32.mrb[0].mxu0
        %679 = vmatprep.mubr.bf16.mxu0 %v581
        %680 = vmatmul.mubr.bf16.gmra.mrb[0].mxu0 %v478
        %v681 = vpop.f32.mrb[0].mxu0
        %v682 = vadd.f32 %v382, %v681
        %v683 = vpop.f32.mrb[0].mxu0
        %v684 = vpop.f32.mrb[0].mxu0
        %v685 = vadd.f32 %v382, %v684
        %v686 = vpop.f32.mrb[0].mxu0
        %687 = vmatprep.mubr.bf16.mxu0 %v584
        %688 = vmatmul.mubr.bf16.gmra.mrb[0].mxu0 %v480
        %v689 = vpop.f32.mrb[0].mxu0
        %v690 = vadd.f32 %v382, %v689
        %v691 = vpop.f32.mrb[0].mxu0
        %v692 = vpop.f32.mrb[0].mxu0
        %v693 = vadd.f32 %v382, %v692
        %v694 = vpop.f32.mrb[0].mxu0
        %695 = vmatprep.mubr.bf16.mxu0 %v587
        %696 = vmatmul.mubr.bf16.gmra.mrb[0].mxu0 %v482
        %v697 = vpop.f32.mrb[0].mxu0
        %v698 = vadd.f32 %v382, %v697
        %v699 = vpop.f32.mrb[0].mxu0
        %v700 = vpop.f32.mrb[0].mxu0
        %v701 = vadd.f32 %v382, %v700
        %v702 = vpop.f32.mrb[0].mxu0
        %703 = vmatprep.mubr.bf16.mxu0 %v590
        %704 = vmatmul.mubr.bf16.gmra.mrb[0].mxu0 %v484
        %v705 = vpop.f32.mrb[0].mxu0
        %v706 = vadd.f32 %v382, %v705
        %v707 = vpop.f32.mrb[0].mxu0
        %v708 = vpop.f32.mrb[0].mxu0
        %v709 = vadd.f32 %v382, %v708
        %v710 = vpop.f32.mrb[0].mxu0
        %711 = vmatprep.mubr.bf16.mxu0 %v593
        %712 = vmatmul.mubr.bf16.gmra.mrb[0].mxu0 %v486
        %v713 = vpop.f32.mrb[0].mxu0
        %v714 = vadd.f32 %v382, %v713
        %v715 = vpop.f32.mrb[0].mxu0
        %v716 = vpop.f32.mrb[0].mxu0
        %v717 = vadd.f32 %v382, %v716
        %v718 = vpop.f32.mrb[0].mxu0
        %719 = vmatprep.mubr.bf16.mxu0 %v596
        %720 = vmatmul.mubr.bf16.gmra.mrb[0].mxu0 %v488
        %v721 = vpop.f32.mrb[0].mxu0
        %v722 = vadd.f32 %v382, %v721
        %v723 = vpop.f32.mrb[0].mxu0
        %v724 = vpop.f32.mrb[0].mxu0
        %v725 = vadd.f32 %v382, %v724
        %v726 = vpop.f32.mrb[0].mxu0
        %727 = vmatprep.mubr.bf16.mxu0 %v599
        %728 = vmatmul.mubr.bf16.gmra.mrb[0].mxu0 %v490
        %v729 = vpop.f32.mrb[0].mxu0
        %v730 = vadd.f32 %v382, %v729
        %v731 = vpop.f32.mrb[0].mxu0
        %v732 = vpop.f32.mrb[0].mxu0
        %v733 = vadd.f32 %v382, %v732
        %v734 = vpop.f32.mrb[0].mxu0
        %735 = vmatprep.mubr.bf16.mxu0 %v602
        %736 = vmatmul.mubr.bf16.gmra.mrb[0].mxu0 %v492
        %v737 = vpop.f32.mrb[0].mxu0
        %v738 = vadd.f32 %v382, %v737
        %v739 = vpop.f32.mrb[0].mxu0
        %v740 = vpop.f32.mrb[0].mxu0
        %v741 = vadd.f32 %v382, %v740
        %v742 = vpop.f32.mrb[0].mxu0
        %743 = vmatprep.mubr.bf16.mxu0 %v605
        %744 = vmatmul.mubr.bf16.gmra.mrb[0].mxu0 %v494
        %v745 = vpop.f32.mrb[0].mxu0
        %v746 = vadd.f32 %v382, %v745
        %v747 = vpop.f32.mrb[0].mxu0
        %v748 = vpop.f32.mrb[0].mxu0
        %v749 = vadd.f32 %v382, %v748
        %v750 = vpop.f32.mrb[0].mxu0
        %751 = vdwg.mxu0
        %752 = vst [vmem:[#allocation2] sm:$0xff] %v642
        %753 = vst [vmem:[#allocation2 + $0x8] sm:$0xff] %v645
        %754 = vst [vmem:[#allocation2 + $0x10] sm:$0xff] %v650
        %755 = vst [vmem:[#allocation2 + $0x18] sm:$0xff] %v653
        %756 = vst [vmem:[#allocation2 + $0x20] sm:$0xff] %v658
        %757 = vst [vmem:[#allocation2 + $0x28] sm:$0xff] %v661
        %758 = vst [vmem:[#allocation2 + $0x30] sm:$0xff] %v666
        %759 = vst [vmem:[#allocation2 + $0x38] sm:$0xff] %v669
        %760 = vst [vmem:[#allocation2 + $0x40] sm:$0xff] %v674
        %761 = vst [vmem:[#allocation2 + $0x48] sm:$0xff] %v677
        %762 = vst [vmem:[#allocation2 + $0x50] sm:$0xff] %v682
        %763 = vst [vmem:[#allocation2 + $0x58] sm:$0xff] %v685
        %764 = vst [vmem:[#allocation2 + $0x60] sm:$0xff] %v690
        %765 = vst [vmem:[#allocation2 + $0x68] sm:$0xff] %v693
        %766 = vst [vmem:[#allocation2 + $0x70] sm:$0xff] %v698
        %767 = vst [vmem:[#allocation2 + $0x78] sm:$0xff] %v701
        %768 = vst [vmem:[#allocation2 + $0x80] sm:$0xff] %v706
        %769 = vst [vmem:[#allocation2 + $0x88] sm:$0xff] %v709
        %770 = vst [vmem:[#allocation2 + $0x90] sm:$0xff] %v714
        %771 = vst [vmem:[#allocation2 + $0x98] sm:$0xff] %v717
        %772 = vst [vmem:[#allocation2 + $0xa0] sm:$0xff] %v722
        %773 = vst [vmem:[#allocation2 + $0xa8] sm:$0xff] %v725
        %774 = vst [vmem:[#allocation2 + $0xb0] sm:$0xff] %v730
        %775 = vst [vmem:[#allocation2 + $0xb8] sm:$0xff] %v733
        %776 = vst [vmem:[#allocation2 + $0xc0] sm:$0xff] %v738
        %777 = vst [vmem:[#allocation2 + $0xc8] sm:$0xff] %v741
        %778 = vst [vmem:[#allocation2 + $0xd0] sm:$0xff] %v746
        %779 = vst [vmem:[#allocation2 + $0xd8] sm:$0xff] %v749
        %v780 = vld [vmem:[#allocation2] sm:$0xff]
        %v781 = vld [vmem:[#allocation2 + $0x8] sm:$0xff]
        %v782 = vld [vmem:[#allocation2 + $0x10] sm:$0xff]
        %v783 = vld [vmem:[#allocation2 + $0x18] sm:$0xff]
        %v784 = vld [vmem:[#allocation2 + $0x20] sm:$0xff]
        %v785 = vld [vmem:[#allocation2 + $0x28] sm:$0xff]
        %v786 = vld [vmem:[#allocation2 + $0x30] sm:$0xff]
        %v787 = vld [vmem:[#allocation2 + $0x38] sm:$0xff]
        %v788 = vld [vmem:[#allocation2 + $0x40] sm:$0xff]
        %v789 = vld [vmem:[#allocation2 + $0x48] sm:$0xff]
        %v790 = vld [vmem:[#allocation2 + $0x50] sm:$0xff]
        %v791 = vld [vmem:[#allocation2 + $0x58] sm:$0xff]
        %v792 = vld [vmem:[#allocation2 + $0x60] sm:$0xff]
        %v793 = vld [vmem:[#allocation2 + $0x68] sm:$0xff]
        %v794 = vld [vmem:[#allocation2 + $0x70] sm:$0xff]
        %v795 = vld [vmem:[#allocation2 + $0x78] sm:$0xff]
        %v796 = vld [vmem:[#allocation2 + $0x80] sm:$0xff]
        %v797 = vld [vmem:[#allocation2 + $0x88] sm:$0xff]
        %v798 = vld [vmem:[#allocation2 + $0x90] sm:$0xff]
        %v799 = vld [vmem:[#allocation2 + $0x98] sm:$0xff]
        %v800 = vld [vmem:[#allocation2 + $0xa0] sm:$0xff]
        %v801 = vld [vmem:[#allocation2 + $0xa8] sm:$0xff]
        %v802 = vpack.c.bf16 %v781, %v780
        %v803 = vpack.c.bf16 %v783, %v782
        %v804 = vpack.c.bf16 %v785, %v784
        %v805 = vpack.c.bf16 %v787, %v786
        %v806 = vpack.c.bf16 %v789, %v788
        %v807 = vpack.c.bf16 %v791, %v790
        %v808 = vpack.c.bf16 %v793, %v792
        %v809 = vpack.c.bf16 %v795, %v794
        %v810 = vpack.c.bf16 %v797, %v796
        %v811 = vpack.c.bf16 %v799, %v798
        %v812 = vpack.c.bf16 %v801, %v800
        %813 = vst [vmem:[#allocation3] sm:$0xff] %v802
        %814 = vst [vmem:[#allocation3 + $0x48] sm:$0xff] %v803
        %815 = vst [vmem:[#allocation3 + $0x90] sm:$0xff] %v804
        %816 = vst [vmem:[#allocation3 + $0xd8] sm:$0xff] %v805
        %817 = vst [vmem:[#allocation3 + $0x120] sm:$0xff] %v806
        %818 = vst [vmem:[#allocation3 + $0x168] sm:$0xff] %v807
        %819 = vst [vmem:[#allocation3 + $0x1b0] sm:$0xff] %v808
        %820 = vst [vmem:[#allocation3 + $0x1f8] sm:$0xff] %v809
        %821 = vst [vmem:[#allocation3 + $0x240] sm:$0xff] %v810
        %822 = vst [vmem:[#allocation3 + $0x288] sm:$0xff] %v811
        %823 = vst [vmem:[#allocation3 + $0x2d0] sm:$0xff] %v812
        %v824 = vld [vmem:[#allocation2 + $0x1] sm:$0xff]
        %v825 = vld [vmem:[#allocation2 + $0x9] sm:$0xff]
        %v826 = vld [vmem:[#allocation2 + $0x11] sm:$0xff]
        %v827 = vld [vmem:[#allocation2 + $0x19] sm:$0xff]
        %v828 = vld [vmem:[#allocation2 + $0x21] sm:$0xff]
        %v829 = vld [vmem:[#allocation2 + $0x29] sm:$0xff]
        %v830 = vld [vmem:[#allocation2 + $0x31] sm:$0xff]
        %v831 = vld [vmem:[#allocation2 + $0x39] sm:$0xff]
        %v832 = vld [vmem:[#allocation2 + $0x41] sm:$0xff]
        %v833 = vld [vmem:[#allocation2 + $0x49] sm:$0xff]
        %v834 = vld [vmem:[#allocation2 + $0x51] sm:$0xff]
        %v835 = vld [vmem:[#allocation2 + $0x59] sm:$0xff]
        %v836 = vld [vmem:[#allocation2 + $0x61] sm:$0xff]
        %v837 = vld [vmem:[#allocation2 + $0x69] sm:$0xff]
        %v838 = vld [vmem:[#allocation2 + $0x71] sm:$0xff]
        %v839 = vld [vmem:[#allocation2 + $0x79] sm:$0xff]
        %v840 = vld [vmem:[#allocation2 + $0x81] sm:$0xff]
        %v841 = vld [vmem:[#allocation2 + $0x89] sm:$0xff]
        %v842 = vld [vmem:[#allocation2 + $0x91] sm:$0xff]
        %v843 = vld [vmem:[#allocation2 + $0x99] sm:$0xff]
        %v844 = vld [vmem:[#allocation2 + $0xa1] sm:$0xff]
        %v845 = vld [vmem:[#allocation2 + $0xa9] sm:$0xff]
        %v846 = vpack.c.bf16 %v825, %v824
        %v847 = vpack.c.bf16 %v827, %v826
        %v848 = vpack.c.bf16 %v829, %v828
        %v849 = vpack.c.bf16 %v831, %v830
        %v850 = vpack.c.bf16 %v833, %v832
        %v851 = vpack.c.bf16 %v835, %v834
        %v852 = vpack.c.bf16 %v837, %v836
        %v853 = vpack.c.bf16 %v839, %v838
        %v854 = vpack.c.bf16 %v841, %v840
        %v855 = vpack.c.bf16 %v843, %v842
        %v856 = vpack.c.bf16 %v845, %v844
        %857 = vst [vmem:[#allocation3 + $0x8] sm:$0xff] %v846
        %858 = vst [vmem:[#allocation3 + $0x50] sm:$0xff] %v847
        %859 = vst [vmem:[#allocation3 + $0x98] sm:$0xff] %v848
        %860 = vst [vmem:[#allocation3 + $0xe0] sm:$0xff] %v849
        %861 = vst [vmem:[#allocation3 + $0x128] sm:$0xff] %v850
        %862 = vst [vmem:[#allocation3 + $0x170] sm:$0xff] %v851
        %863 = vst [vmem:[#allocation3 + $0x1b8] sm:$0xff] %v852
        %864 = vst [vmem:[#allocation3 + $0x200] sm:$0xff] %v853
        %865 = vst [vmem:[#allocation3 + $0x248] sm:$0xff] %v854
        %866 = vst [vmem:[#allocation3 + $0x290] sm:$0xff] %v855
        %867 = vst [vmem:[#allocation3 + $0x2d8] sm:$0xff] %v856
        %v868 = vld [vmem:[#allocation2 + $0x2] sm:$0xff]
        %v869 = vld [vmem:[#allocation2 + $0xa] sm:$0xff]
        %v870 = vld [vmem:[#allocation2 + $0x12] sm:$0xff]
        %v871 = vld [vmem:[#allocation2 + $0x1a] sm:$0xff]
        %v872 = vld [vmem:[#allocation2 + $0x22] sm:$0xff]
        %v873 = vld [vmem:[#allocation2 + $0x2a] sm:$0xff]
        %v874 = vld [vmem:[#allocation2 + $0x32] sm:$0xff]
        %v875 = vld [vmem:[#allocation2 + $0x3a] sm:$0xff]
        %v876 = vld [vmem:[#allocation2 + $0x42] sm:$0xff]
        %v877 = vld [vmem:[#allocation2 + $0x4a] sm:$0xff]
        %v878 = vld [vmem:[#allocation2 + $0x52] sm:$0xff]
        %v879 = vld [vmem:[#allocation2 + $0x5a] sm:$0xff]
        %v880 = vld [vmem:[#allocation2 + $0x62] sm:$0xff]
        %v881 = vld [vmem:[#allocation2 + $0x6a] sm:$0xff]
        %v882 = vld [vmem:[#allocation2 + $0x72] sm:$0xff]
        %v883 = vld [vmem:[#allocation2 + $0x7a] sm:$0xff]
        %v884 = vld [vmem:[#allocation2 + $0x82] sm:$0xff]
        %v885 = vld [vmem:[#allocation2 + $0x8a] sm:$0xff]
        %v886 = vld [vmem:[#allocation2 + $0x92] sm:$0xff]
        %v887 = vld [vmem:[#allocation2 + $0x9a] sm:$0xff]
        %v888 = vld [vmem:[#allocation2 + $0xa2] sm:$0xff]
        %v889 = vld [vmem:[#allocation2 + $0xaa] sm:$0xff]
        %v890 = vpack.c.bf16 %v869, %v868
        %v891 = vpack.c.bf16 %v871, %v870
        %v892 = vpack.c.bf16 %v873, %v872
        %v893 = vpack.c.bf16 %v875, %v874
        %v894 = vpack.c.bf16 %v877, %v876
        %v895 = vpack.c.bf16 %v879, %v878
        %v896 = vpack.c.bf16 %v881, %v880
        %v897 = vpack.c.bf16 %v883, %v882
        %v898 = vpack.c.bf16 %v885, %v884
        %v899 = vpack.c.bf16 %v887, %v886
        %v900 = vpack.c.bf16 %v889, %v888
        %901 = vst [vmem:[#allocation3 + $0x10] sm:$0xff] %v890
        %902 = vst [vmem:[#allocation3 + $0x58] sm:$0xff] %v891
        %903 = vst [vmem:[#allocation3 + $0xa0] sm:$0xff] %v892
        %904 = vst [vmem:[#allocation3 + $0xe8] sm:$0xff] %v893
        %905 = vst [vmem:[#allocation3 + $0x130] sm:$0xff] %v894
        %906 = vst [vmem:[#allocation3 + $0x178] sm:$0xff] %v895
        %907 = vst [vmem:[#allocation3 + $0x1c0] sm:$0xff] %v896
        %908 = vst [vmem:[#allocation3 + $0x208] sm:$0xff] %v897
        %909 = vst [vmem:[#allocation3 + $0x250] sm:$0xff] %v898
        %910 = vst [vmem:[#allocation3 + $0x298] sm:$0xff] %v899
        %911 = vst [vmem:[#allocation3 + $0x2e0] sm:$0xff] %v900
        %v912 = vld [vmem:[#allocation2 + $0x10] sm:$0xff]
        %v913 = vld [vmem:[#allocation2 + $0x18] sm:$0xff]
        %v914 = vld [vmem:[#allocation2 + $0x20] sm:$0xff]
        %v915 = vld [vmem:[#allocation2 + $0x28] sm:$0xff]
        %v916 = vld [vmem:[#allocation2 + $0x30] sm:$0xff]
        %v917 = vld [vmem:[#allocation2 + $0x38] sm:$0xff]
        %v918 = vld [vmem:[#allocation2 + $0x40] sm:$0xff]
        %v919 = vld [vmem:[#allocation2 + $0x48] sm:$0xff]
        %v920 = vld [vmem:[#allocation2 + $0x50] sm:$0xff]
        %v921 = vld [vmem:[#allocation2 + $0x58] sm:$0xff]
        %v922 = vld [vmem:[#allocation2 + $0x60] sm:$0xff]
        %v923 = vld [vmem:[#allocation2 + $0x68] sm:$0xff]
        %v924 = vld [vmem:[#allocation2 + $0x70] sm:$0xff]
        %v925 = vld [vmem:[#allocation2 + $0x78] sm:$0xff]
        %v926 = vld [vmem:[#allocation2 + $0x80] sm:$0xff]
        %v927 = vld [vmem:[#allocation2 + $0x88] sm:$0xff]
        %v928 = vld [vmem:[#allocation2 + $0x90] sm:$0xff]
        %v929 = vld [vmem:[#allocation2 + $0x98] sm:$0xff]
        %v930 = vld [vmem:[#allocation2 + $0xa0] sm:$0xff]
        %v931 = vld [vmem:[#allocation2 + $0xa8] sm:$0xff]
        %v932 = vld [vmem:[#allocation2 + $0xb0] sm:$0xff]
        %v933 = vld [vmem:[#allocation2 + $0xb8] sm:$0xff]
        %v934 = vpack.c.bf16 %v913, %v912
        %v935 = vpack.c.bf16 %v915, %v914
        %v936 = vpack.c.bf16 %v917, %v916
        %v937 = vpack.c.bf16 %v919, %v918
        %v938 = vpack.c.bf16 %v921, %v920
        %v939 = vpack.c.bf16 %v923, %v922
        %v940 = vpack.c.bf16 %v925, %v924
        %v941 = vpack.c.bf16 %v927, %v926
        %v942 = vpack.c.bf16 %v929, %v928
        %v943 = vpack.c.bf16 %v931, %v930
        %v944 = vpack.c.bf16 %v933, %v932
        %945 = vst [vmem:[#allocation3 + $0x18] sm:$0xff] %v934
        %946 = vst [vmem:[#allocation3 + $0x60] sm:$0xff] %v935
        %947 = vst [vmem:[#allocation3 + $0xa8] sm:$0xff] %v936
        %948 = vst [vmem:[#allocation3 + $0xf0] sm:$0xff] %v937
        %949 = vst [vmem:[#allocation3 + $0x138] sm:$0xff] %v938
        %950 = vst [vmem:[#allocation3 + $0x180] sm:$0xff] %v939
        %951 = vst [vmem:[#allocation3 + $0x1c8] sm:$0xff] %v940
        %952 = vst [vmem:[#allocation3 + $0x210] sm:$0xff] %v941
        %953 = vst [vmem:[#allocation3 + $0x258] sm:$0xff] %v942
        %954 = vst [vmem:[#allocation3 + $0x2a0] sm:$0xff] %v943
        %955 = vst [vmem:[#allocation3 + $0x2e8] sm:$0xff] %v944
        %v956 = vld [vmem:[#allocation2 + $0x11] sm:$0xff]
        %v957 = vld [vmem:[#allocation2 + $0x19] sm:$0xff]
        %v958 = vld [vmem:[#allocation2 + $0x21] sm:$0xff]
        %v959 = vld [vmem:[#allocation2 + $0x29] sm:$0xff]
        %v960 = vld [vmem:[#allocation2 + $0x31] sm:$0xff]
        %v961 = vld [vmem:[#allocation2 + $0x39] sm:$0xff]
        %v962 = vld [vmem:[#allocation2 + $0x41] sm:$0xff]
        %v963 = vld [vmem:[#allocation2 + $0x49] sm:$0xff]
        %v964 = vld [vmem:[#allocation2 + $0x51] sm:$0xff]
        %v965 = vld [vmem:[#allocation2 + $0x59] sm:$0xff]
        %v966 = vld [vmem:[#allocation2 + $0x61] sm:$0xff]
        %v967 = vld [vmem:[#allocation2 + $0x69] sm:$0xff]
        %v968 = vld [vmem:[#allocation2 + $0x71] sm:$0xff]
        %v969 = vld [vmem:[#allocation2 + $0x79] sm:$0xff]
        %v970 = vld [vmem:[#allocation2 + $0x81] sm:$0xff]
        %v971 = vld [vmem:[#allocation2 + $0x89] sm:$0xff]
        %v972 = vld [vmem:[#allocation2 + $0x91] sm:$0xff]
        %v973 = vld [vmem:[#allocation2 + $0x99] sm:$0xff]
        %v974 = vld [vmem:[#allocation2 + $0xa1] sm:$0xff]
        %v975 = vld [vmem:[#allocation2 + $0xa9] sm:$0xff]
        %v976 = vld [vmem:[#allocation2 + $0xb1] sm:$0xff]
        %v977 = vld [vmem:[#allocation2 + $0xb9] sm:$0xff]
        %v978 = vpack.c.bf16 %v957, %v956
        %v979 = vpack.c.bf16 %v959, %v958
        %v980 = vpack.c.bf16 %v961, %v960
        %v981 = vpack.c.bf16 %v963, %v962
        %v982 = vpack.c.bf16 %v965, %v964
        %v983 = vpack.c.bf16 %v967, %v966
        %v984 = vpack.c.bf16 %v969, %v968
        %v985 = vpack.c.bf16 %v971, %v970
        %v986 = vpack.c.bf16 %v973, %v972
        %v987 = vpack.c.bf16 %v975, %v974
        %v988 = vpack.c.bf16 %v977, %v976
        %989 = vst [vmem:[#allocation3 + $0x20] sm:$0xff] %v978
        %990 = vst [vmem:[#allocation3 + $0x68] sm:$0xff] %v979
        %991 = vst [vmem:[#allocation3 + $0xb0] sm:$0xff] %v980
        %992 = vst [vmem:[#allocation3 + $0xf8] sm:$0xff] %v981
        %993 = vst [vmem:[#allocation3 + $0x140] sm:$0xff] %v982
        %994 = vst [vmem:[#allocation3 + $0x188] sm:$0xff] %v983
        %995 = vst [vmem:[#allocation3 + $0x1d0] sm:$0xff] %v984
        %996 = vst [vmem:[#allocation3 + $0x218] sm:$0xff] %v985
        %997 = vst [vmem:[#allocation3 + $0x260] sm:$0xff] %v986
        %998 = vst [vmem:[#allocation3 + $0x2a8] sm:$0xff] %v987
        %999 = vst [vmem:[#allocation3 + $0x2f0] sm:$0xff] %v988
        %v1000 = vld [vmem:[#allocation2 + $0x12] sm:$0xff]
        %v1001 = vld [vmem:[#allocation2 + $0x1a] sm:$0xff]
        %v1002 = vld [vmem:[#allocation2 + $0x22] sm:$0xff]
        %v1003 = vld [vmem:[#allocation2 + $0x2a] sm:$0xff]
        %v1004 = vld [vmem:[#allocation2 + $0x32] sm:$0xff]
        %v1005 = vld [vmem:[#allocation2 + $0x3a] sm:$0xff]
        %v1006 = vld [vmem:[#allocation2 + $0x42] sm:$0xff]
        %v1007 = vld [vmem:[#allocation2 + $0x4a] sm:$0xff]
        %v1008 = vld [vmem:[#allocation2 + $0x52] sm:$0xff]
        %v1009 = vld [vmem:[#allocation2 + $0x5a] sm:$0xff]
        %v1010 = vld [vmem:[#allocation2 + $0x62] sm:$0xff]
        %v1011 = vld [vmem:[#allocation2 + $0x6a] sm:$0xff]
        %v1012 = vld [vmem:[#allocation2 + $0x72] sm:$0xff]
        %v1013 = vld [vmem:[#allocation2 + $0x7a] sm:$0xff]
        %v1014 = vld [vmem:[#allocation2 + $0x82] sm:$0xff]
        %v1015 = vld [vmem:[#allocation2 + $0x8a] sm:$0xff]
        %v1016 = vld [vmem:[#allocation2 + $0x92] sm:$0xff]
        %v1017 = vld [vmem:[#allocation2 + $0x9a] sm:$0xff]
        %v1018 = vld [vmem:[#allocation2 + $0xa2] sm:$0xff]
        %v1019 = vld [vmem:[#allocation2 + $0xaa] sm:$0xff]
        %v1020 = vld [vmem:[#allocation2 + $0xb2] sm:$0xff]
        %v1021 = vld [vmem:[#allocation2 + $0xba] sm:$0xff]
        %v1022 = vpack.c.bf16 %v1001, %v1000
        %v1023 = vpack.c.bf16 %v1003, %v1002
        %v1024 = vpack.c.bf16 %v1005, %v1004
        %v1025 = vpack.c.bf16 %v1007, %v1006
        %v1026 = vpack.c.bf16 %v1009, %v1008
        %v1027 = vpack.c.bf16 %v1011, %v1010
        %v1028 = vpack.c.bf16 %v1013, %v1012
        %v1029 = vpack.c.bf16 %v1015, %v1014
        %v1030 = vpack.c.bf16 %v1017, %v1016
        %v1031 = vpack.c.bf16 %v1019, %v1018
        %v1032 = vpack.c.bf16 %v1021, %v1020
        %1033 = vst [vmem:[#allocation3 + $0x28] sm:$0xff] %v1022
        %1034 = vst [vmem:[#allocation3 + $0x70] sm:$0xff] %v1023
        %1035 = vst [vmem:[#allocation3 + $0xb8] sm:$0xff] %v1024
        %1036 = vst [vmem:[#allocation3 + $0x100] sm:$0xff] %v1025
        %1037 = vst [vmem:[#allocation3 + $0x148] sm:$0xff] %v1026
        %1038 = vst [vmem:[#allocation3 + $0x190] sm:$0xff] %v1027
        %1039 = vst [vmem:[#allocation3 + $0x1d8] sm:$0xff] %v1028
        %1040 = vst [vmem:[#allocation3 + $0x220] sm:$0xff] %v1029
        %1041 = vst [vmem:[#allocation3 + $0x268] sm:$0xff] %v1030
        %1042 = vst [vmem:[#allocation3 + $0x2b0] sm:$0xff] %v1031
        %1043 = vst [vmem:[#allocation3 + $0x2f8] sm:$0xff] %v1032
        %v1044 = vld [vmem:[#allocation2 + $0x20] sm:$0xff]
        %v1045 = vld [vmem:[#allocation2 + $0x28] sm:$0xff]
        %v1046 = vld [vmem:[#allocation2 + $0x30] sm:$0xff]
        %v1047 = vld [vmem:[#allocation2 + $0x38] sm:$0xff]
        %v1048 = vld [vmem:[#allocation2 + $0x40] sm:$0xff]
        %v1049 = vld [vmem:[#allocation2 + $0x48] sm:$0xff]
        %v1050 = vld [vmem:[#allocation2 + $0x50] sm:$0xff]
        %v1051 = vld [vmem:[#allocation2 + $0x58] sm:$0xff]
        %v1052 = vld [vmem:[#allocation2 + $0x60] sm:$0xff]
        %v1053 = vld [vmem:[#allocation2 + $0x68] sm:$0xff]
        %v1054 = vld [vmem:[#allocation2 + $0x70] sm:$0xff]
        %v1055 = vld [vmem:[#allocation2 + $0x78] sm:$0xff]
        %v1056 = vld [vmem:[#allocation2 + $0x80] sm:$0xff]
        %v1057 = vld [vmem:[#allocation2 + $0x88] sm:$0xff]
        %v1058 = vld [vmem:[#allocation2 + $0x90] sm:$0xff]
        %v1059 = vld [vmem:[#allocation2 + $0x98] sm:$0xff]
        %v1060 = vld [vmem:[#allocation2 + $0xa0] sm:$0xff]
        %v1061 = vld [vmem:[#allocation2 + $0xa8] sm:$0xff]
        %v1062 = vld [vmem:[#allocation2 + $0xb0] sm:$0xff]
        %v1063 = vld [vmem:[#allocation2 + $0xb8] sm:$0xff]
        %v1064 = vld [vmem:[#allocation2 + $0xc0] sm:$0xff]
        %v1065 = vld [vmem:[#allocation2 + $0xc8] sm:$0xff]
        %v1066 = vpack.c.bf16 %v1045, %v1044
        %v1067 = vpack.c.bf16 %v1047, %v1046
        %v1068 = vpack.c.bf16 %v1049, %v1048
        %v1069 = vpack.c.bf16 %v1051, %v1050
        %v1070 = vpack.c.bf16 %v1053, %v1052
        %v1071 = vpack.c.bf16 %v1055, %v1054
        %v1072 = vpack.c.bf16 %v1057, %v1056
        %v1073 = vpack.c.bf16 %v1059, %v1058
        %v1074 = vpack.c.bf16 %v1061, %v1060
        %v1075 = vpack.c.bf16 %v1063, %v1062
        %v1076 = vpack.c.bf16 %v1065, %v1064
        %1077 = vst [vmem:[#allocation3 + $0x30] sm:$0xff] %v1066
        %1078 = vst [vmem:[#allocation3 + $0x78] sm:$0xff] %v1067
        %1079 = vst [vmem:[#allocation3 + $0xc0] sm:$0xff] %v1068
        %1080 = vst [vmem:[#allocation3 + $0x108] sm:$0xff] %v1069
        %1081 = vst [vmem:[#allocation3 + $0x150] sm:$0xff] %v1070
        %1082 = vst [vmem:[#allocation3 + $0x198] sm:$0xff] %v1071
        %1083 = vst [vmem:[#allocation3 + $0x1e0] sm:$0xff] %v1072
        %1084 = vst [vmem:[#allocation3 + $0x228] sm:$0xff] %v1073
        %1085 = vst [vmem:[#allocation3 + $0x270] sm:$0xff] %v1074
        %1086 = vst [vmem:[#allocation3 + $0x2b8] sm:$0xff] %v1075
        %1087 = vst [vmem:[#allocation3 + $0x300] sm:$0xff] %v1076
        %v1088 = vld [vmem:[#allocation2 + $0x21] sm:$0xff]
        %v1089 = vld [vmem:[#allocation2 + $0x29] sm:$0xff]
        %v1090 = vld [vmem:[#allocation2 + $0x31] sm:$0xff]
        %v1091 = vld [vmem:[#allocation2 + $0x39] sm:$0xff]
        %v1092 = vld [vmem:[#allocation2 + $0x41] sm:$0xff]
        %v1093 = vld [vmem:[#allocation2 + $0x49] sm:$0xff]
        %v1094 = vld [vmem:[#allocation2 + $0x51] sm:$0xff]
        %v1095 = vld [vmem:[#allocation2 + $0x59] sm:$0xff]
        %v1096 = vld [vmem:[#allocation2 + $0x61] sm:$0xff]
        %v1097 = vld [vmem:[#allocation2 + $0x69] sm:$0xff]
        %v1098 = vld [vmem:[#allocation2 + $0x71] sm:$0xff]
        %v1099 = vld [vmem:[#allocation2 + $0x79] sm:$0xff]
        %v1100 = vld [vmem:[#allocation2 + $0x81] sm:$0xff]
        %v1101 = vld [vmem:[#allocation2 + $0x89] sm:$0xff]
        %v1102 = vld [vmem:[#allocation2 + $0x91] sm:$0xff]
        %v1103 = vld [vmem:[#allocation2 + $0x99] sm:$0xff]
        %v1104 = vld [vmem:[#allocation2 + $0xa1] sm:$0xff]
        %v1105 = vld [vmem:[#allocation2 + $0xa9] sm:$0xff]
        %v1106 = vld [vmem:[#allocation2 + $0xb1] sm:$0xff]
        %v1107 = vld [vmem:[#allocation2 + $0xb9] sm:$0xff]
        %v1108 = vld [vmem:[#allocation2 + $0xc1] sm:$0xff]
        %v1109 = vld [vmem:[#allocation2 + $0xc9] sm:$0xff]
        %v1110 = vpack.c.bf16 %v1089, %v1088
        %v1111 = vpack.c.bf16 %v1091, %v1090
        %v1112 = vpack.c.bf16 %v1093, %v1092
        %v1113 = vpack.c.bf16 %v1095, %v1094
        %v1114 = vpack.c.bf16 %v1097, %v1096
        %v1115 = vpack.c.bf16 %v1099, %v1098
        %v1116 = vpack.c.bf16 %v1101, %v1100
        %v1117 = vpack.c.bf16 %v1103, %v1102
        %v1118 = vpack.c.bf16 %v1105, %v1104
        %v1119 = vpack.c.bf16 %v1107, %v1106
        %v1120 = vpack.c.bf16 %v1109, %v1108
        %1121 = vst [vmem:[#allocation3 + $0x38] sm:$0xff] %v1110
        %1122 = vst [vmem:[#allocation3 + $0x80] sm:$0xff] %v1111
        %1123 = vst [vmem:[#allocation3 + $0xc8] sm:$0xff] %v1112
        %1124 = vst [vmem:[#allocation3 + $0x110] sm:$0xff] %v1113
        %1125 = vst [vmem:[#allocation3 + $0x158] sm:$0xff] %v1114
        %1126 = vst [vmem:[#allocation3 + $0x1a0] sm:$0xff] %v1115
        %1127 = vst [vmem:[#allocation3 + $0x1e8] sm:$0xff] %v1116
        %1128 = vst [vmem:[#allocation3 + $0x230] sm:$0xff] %v1117
        %1129 = vst [vmem:[#allocation3 + $0x278] sm:$0xff] %v1118
        %1130 = vst [vmem:[#allocation3 + $0x2c0] sm:$0xff] %v1119
        %1131 = vst [vmem:[#allocation3 + $0x308] sm:$0xff] %v1120
        %v1132 = vld [vmem:[#allocation2 + $0x22] sm:$0xff]
        %v1133 = vld [vmem:[#allocation2 + $0x2a] sm:$0xff]
        %v1134 = vld [vmem:[#allocation2 + $0x32] sm:$0xff]
        %v1135 = vld [vmem:[#allocation2 + $0x3a] sm:$0xff]
        %v1136 = vld [vmem:[#allocation2 + $0x42] sm:$0xff]
        %v1137 = vld [vmem:[#allocation2 + $0x4a] sm:$0xff]
        %v1138 = vld [vmem:[#allocation2 + $0x52] sm:$0xff]
        %v1139 = vld [vmem:[#allocation2 + $0x5a] sm:$0xff]
        %v1140 = vld [vmem:[#allocation2 + $0x62] sm:$0xff]
        %v1141 = vld [vmem:[#allocation2 + $0x6a] sm:$0xff]
        %v1142 = vld [vmem:[#allocation2 + $0x72] sm:$0xff]
        %v1143 = vld [vmem:[#allocation2 + $0x7a] sm:$0xff]
        %v1144 = vld [vmem:[#allocation2 + $0x82] sm:$0xff]
        %v1145 = vld [vmem:[#allocation2 + $0x8a] sm:$0xff]
        %v1146 = vld [vmem:[#allocation2 + $0x92] sm:$0xff]
        %v1147 = vld [vmem:[#allocation2 + $0x9a] sm:$0xff]
        %v1148 = vld [vmem:[#allocation2 + $0xa2] sm:$0xff]
        %v1149 = vld [vmem:[#allocation2 + $0xaa] sm:$0xff]
        %v1150 = vld [vmem:[#allocation2 + $0xb2] sm:$0xff]
        %v1151 = vld [vmem:[#allocation2 + $0xba] sm:$0xff]
        %v1152 = vld [vmem:[#allocation2 + $0xc2] sm:$0xff]
        %v1153 = vld [vmem:[#allocation2 + $0xca] sm:$0xff]
        %v1154 = vpack.c.bf16 %v1133, %v1132
        %v1155 = vpack.c.bf16 %v1135, %v1134
        %v1156 = vpack.c.bf16 %v1137, %v1136
        %v1157 = vpack.c.bf16 %v1139, %v1138
        %v1158 = vpack.c.bf16 %v1141, %v1140
        %v1159 = vpack.c.bf16 %v1143, %v1142
        %v1160 = vpack.c.bf16 %v1145, %v1144
        %v1161 = vpack.c.bf16 %v1147, %v1146
        %v1162 = vpack.c.bf16 %v1149, %v1148
        %v1163 = vpack.c.bf16 %v1151, %v1150
        %v1164 = vpack.c.bf16 %v1153, %v1152
        %1165 = vst [vmem:[#allocation3 + $0x40] sm:$0xff] %v1154
        %1166 = vst [vmem:[#allocation3 + $0x88] sm:$0xff] %v1155
        %1167 = vst [vmem:[#allocation3 + $0xd0] sm:$0xff] %v1156
        %1168 = vst [vmem:[#allocation3 + $0x118] sm:$0xff] %v1157
        %1169 = vst [vmem:[#allocation3 + $0x160] sm:$0xff] %v1158
        %1170 = vst [vmem:[#allocation3 + $0x1a8] sm:$0xff] %v1159
        %1171 = vst [vmem:[#allocation3 + $0x1f0] sm:$0xff] %v1160
        %1172 = vst [vmem:[#allocation3 + $0x238] sm:$0xff] %v1161
        %1173 = vst [vmem:[#allocation3 + $0x280] sm:$0xff] %v1162
        %1174 = vst [vmem:[#allocation3 + $0x2c8] sm:$0xff] %v1163
        %1175 = vst [vmem:[#allocation3 + $0x310] sm:$0xff] %v1164
        %v1176 = vld [vmem:[#allocation3] sm:$0xff]
        %v1177 = vld [vmem:[#allocation3 + $0x8] sm:$0xff]
        %v1178 = vld [vmem:[#allocation3 + $0x10] sm:$0xff]
        %v1179 = vld [vmem:[#allocation3 + $0x18] sm:$0xff]
        %v1180 = vld [vmem:[#allocation3 + $0x20] sm:$0xff]
        %v1181 = vld [vmem:[#allocation3 + $0x28] sm:$0xff]
        %v1182 = vld [vmem:[#allocation3 + $0x30] sm:$0xff]
        %v1183 = vld [vmem:[#allocation3 + $0x38] sm:$0xff]
        %v1184 = vld [vmem:[#allocation3 + $0x40] sm:$0xff]
        %v1185 = vld [vmem:[#allocation3 + $0x48] sm:$0xff]
        %v1186 = vld [vmem:[#allocation3 + $0x50] sm:$0xff]
        %v1187 = vld [vmem:[#allocation3 + $0x58] sm:$0xff]
        %v1188 = vld [vmem:[#allocation3 + $0x60] sm:$0xff]
        %v1189 = vld [vmem:[#allocation3 + $0x68] sm:$0xff]
        %v1190 = vld [vmem:[#allocation3 + $0x70] sm:$0xff]
        %v1191 = vld [vmem:[#allocation3 + $0x78] sm:$0xff]
        %v1192 = vld [vmem:[#allocation3 + $0x80] sm:$0xff]
        %v1193 = vld [vmem:[#allocation3 + $0x88] sm:$0xff]
        %v1194 = vld [vmem:[#allocation3 + $0x90] sm:$0xff]
        %v1195 = vld [vmem:[#allocation3 + $0x98] sm:$0xff]
        %v1196 = vld [vmem:[#allocation3 + $0xa0] sm:$0xff]
        %v1197 = vld [vmem:[#allocation3 + $0xa8] sm:$0xff]
        %v1198 = vld [vmem:[#allocation3 + $0xb0] sm:$0xff]
        %v1199 = vld [vmem:[#allocation3 + $0xb8] sm:$0xff]
        %v1200 = vld [vmem:[#allocation3 + $0xc0] sm:$0xff]
        %v1201 = vld [vmem:[#allocation3 + $0xc8] sm:$0xff]
        %v1202 = vld [vmem:[#allocation3 + $0xd0] sm:$0xff]
        %v1203 = vld [vmem:[#allocation3 + $0xd8] sm:$0xff]
        %v1204 = vld [vmem:[#allocation3 + $0xe0] sm:$0xff]
        %v1205 = vld [vmem:[#allocation3 + $0xe8] sm:$0xff]
        %v1206 = vld [vmem:[#allocation3 + $0xf0] sm:$0xff]
        %v1207 = vld [vmem:[#allocation3 + $0xf8] sm:$0xff]
        %v1208 = vld [vmem:[#allocation3 + $0x100] sm:$0xff]
        %v1209 = vld [vmem:[#allocation3 + $0x108] sm:$0xff]
        %v1210 = vld [vmem:[#allocation3 + $0x110] sm:$0xff]
        %v1211 = vld [vmem:[#allocation3 + $0x118] sm:$0xff]
        %v1212 = vld [vmem:[#allocation3 + $0x120] sm:$0xff]
        %v1213 = vld [vmem:[#allocation3 + $0x128] sm:$0xff]
        %v1214 = vld [vmem:[#allocation3 + $0x130] sm:$0xff]
        %v1215 = vld [vmem:[#allocation3 + $0x138] sm:$0xff]
        %v1216 = vld [vmem:[#allocation3 + $0x140] sm:$0xff]
        %v1217 = vld [vmem:[#allocation3 + $0x148] sm:$0xff]
        %v1218 = vld [vmem:[#allocation3 + $0x150] sm:$0xff]
        %v1219 = vld [vmem:[#allocation3 + $0x158] sm:$0xff]
        %v1220 = vld [vmem:[#allocation3 + $0x160] sm:$0xff]
        %v1221 = vld [vmem:[#allocation3 + $0x168] sm:$0xff]
        %v1222 = vld [vmem:[#allocation3 + $0x170] sm:$0xff]
        %v1223 = vld [vmem:[#allocation3 + $0x178] sm:$0xff]
        %v1224 = vld [vmem:[#allocation3 + $0x180] sm:$0xff]
        %v1225 = vld [vmem:[#allocation3 + $0x188] sm:$0xff]
        %v1226 = vld [vmem:[#allocation3 + $0x190] sm:$0xff]
        %v1227 = vld [vmem:[#allocation3 + $0x198] sm:$0xff]
        %v1228 = vld [vmem:[#allocation3 + $0x1a0] sm:$0xff]
        %v1229 = vld [vmem:[#allocation3 + $0x1a8] sm:$0xff]
        %v1230 = vld [vmem:[#allocation3 + $0x1b0] sm:$0xff]
        %v1231 = vld [vmem:[#allocation3 + $0x1b8] sm:$0xff]
        %v1232 = vld [vmem:[#allocation3 + $0x1c0] sm:$0xff]
        %v1233 = vld [vmem:[#allocation3 + $0x1c8] sm:$0xff]
        %v1234 = vld [vmem:[#allocation3 + $0x1d0] sm:$0xff]
        %v1235 = vld [vmem:[#allocation3 + $0x1d8] sm:$0xff]
        %v1236 = vld [vmem:[#allocation3 + $0x1e0] sm:$0xff]
        %v1237 = vld [vmem:[#allocation3 + $0x1e8] sm:$0xff]
        %v1238 = vld [vmem:[#allocation3 + $0x1f0] sm:$0xff]
        %v1239 = vld [vmem:[#allocation3 + $0x1f8] sm:$0xff]
        %v1240 = vld [vmem:[#allocation3 + $0x200] sm:$0xff]
        %v1241 = vld [vmem:[#allocation3 + $0x208] sm:$0xff]
        %v1242 = vld [vmem:[#allocation3 + $0x210] sm:$0xff]
        %v1243 = vld [vmem:[#allocation3 + $0x218] sm:$0xff]
        %v1244 = vld [vmem:[#allocation3 + $0x220] sm:$0xff]
        %v1245 = vld [vmem:[#allocation3 + $0x228] sm:$0xff]
        %v1246 = vld [vmem:[#allocation3 + $0x230] sm:$0xff]
        %v1247 = vld [vmem:[#allocation3 + $0x238] sm:$0xff]
        %v1248 = vld [vmem:[#allocation3 + $0x240] sm:$0xff]
        %v1249 = vld [vmem:[#allocation3 + $0x248] sm:$0xff]
        %v1250 = vld [vmem:[#allocation3 + $0x250] sm:$0xff]
        %v1251 = vld [vmem:[#allocation3 + $0x258] sm:$0xff]
        %v1252 = vld [vmem:[#allocation3 + $0x260] sm:$0xff]
        %v1253 = vld [vmem:[#allocation3 + $0x268] sm:$0xff]
        %v1254 = vld [vmem:[#allocation3 + $0x270] sm:$0xff]
        %v1255 = vld [vmem:[#allocation3 + $0x278] sm:$0xff]
        %v1256 = vld [vmem:[#allocation3 + $0x280] sm:$0xff]
        %v1257 = vld [vmem:[#allocation3 + $0x288] sm:$0xff]
        %v1258 = vld [vmem:[#allocation3 + $0x290] sm:$0xff]
        %v1259 = vld [vmem:[#allocation3 + $0x298] sm:$0xff]
        %v1260 = vld [vmem:[#allocation3 + $0x2a0] sm:$0xff]
        %v1261 = vld [vmem:[#allocation3 + $0x2a8] sm:$0xff]
        %v1262 = vld [vmem:[#allocation3 + $0x2b0] sm:$0xff]
        %v1263 = vld [vmem:[#allocation3 + $0x2b8] sm:$0xff]
        %v1264 = vld [vmem:[#allocation3 + $0x2c0] sm:$0xff]
        %v1265 = vld [vmem:[#allocation3 + $0x2c8] sm:$0xff]
        %v1266 = vld [vmem:[#allocation3 + $0x2d0] sm:$0xff]
        %v1267 = vld [vmem:[#allocation3 + $0x2d8] sm:$0xff]
        %v1268 = vld [vmem:[#allocation3 + $0x2e0] sm:$0xff]
        %v1269 = vld [vmem:[#allocation3 + $0x2e8] sm:$0xff]
        %v1270 = vld [vmem:[#allocation3 + $0x2f0] sm:$0xff]
        %v1271 = vld [vmem:[#allocation3 + $0x2f8] sm:$0xff]
        %v1272 = vld [vmem:[#allocation3 + $0x300] sm:$0xff]
        %v1273 = vld [vmem:[#allocation3 + $0x308] sm:$0xff]
        %v1274 = vld [vmem:[#allocation3 + $0x310] sm:$0xff]
        %v1275 = vld [vmem:[%s3] sm:$0xf]
        %v1276 = vld [vmem:[%s3 + $0x4] sm:$0xf]
        %v1277 = vld [vmem:[%s3 + $0x8] sm:$0xf]
        %v1278 = vld [vmem:[%s3 + $0xc] sm:$0xf]
        %v1279 = vld [vmem:[%s3 + $0x10] sm:$0xf]
        %v1280 = vld [vmem:[%s3 + $0x14] sm:$0xf]
        %v1281 = vld [vmem:[%s3 + $0x18] sm:$0xf]
        %v1282 = vld [vmem:[%s3 + $0x1c] sm:$0xf]
        %v1283 = vld [vmem:[%s3 + $0x20] sm:$0xf]
        %v1284 = vld [vmem:[%s3 + $0x24] sm:$0xf]
        %v1285 = vld [vmem:[%s3 + $0x28] sm:$0xf]
        %v1286 = vld [vmem:[%s3 + $0x2c] sm:$0xf]
        %v1287 = vld [vmem:[%s3 + $0x30] sm:$0xf]
        %v1288 = vld [vmem:[%s3 + $0x34] sm:$0xf]
        %v1289 = vld [vmem:[%s3 + $0x38] sm:$0xf]
        %v1290 = vld [vmem:[%s3 + $0x3c] sm:$0xf]
        %v1291 = vld [vmem:[%s3 + $0x40] sm:$0xf]
        %v1292 = vld [vmem:[%s3 + $0x44] sm:$0xf]
        %v1293 = vld [vmem:[%s3 + $0x48] sm:$0xf]
        %v1294 = vld [vmem:[%s3 + $0x4c] sm:$0xf]
        %v1295 = vld [vmem:[%s3 + $0x50] sm:$0xf]
        %v1296 = vld [vmem:[%s3 + $0x54] sm:$0xf]
        %v1297 = vld [vmem:[%s3 + $0x58] sm:$0xf]
        %v1298 = vld [vmem:[%s3 + $0x5c] sm:$0xf]
        %v1299 = vld [vmem:[%s3 + $0x60] sm:$0xf]
        %v1300 = vld [vmem:[%s3 + $0x64] sm:$0xf]
        %v1301 = vld [vmem:[%s3 + $0x68] sm:$0xf]
        %v1302 = vld [vmem:[%s3 + $0x6c] sm:$0xf]
        %v1303 = vld [vmem:[%s3 + $0x70] sm:$0xf]
        %v1304 = vld [vmem:[%s3 + $0x74] sm:$0xf]
        %v1305 = vld [vmem:[%s3 + $0x78] sm:$0xf]
        %v1306 = vld [vmem:[%s3 + $0x7c] sm:$0xf]
        %v1307 = vld [vmem:[%s3 + $0x80] sm:$0xf]
        %v1308 = vld [vmem:[%s3 + $0x84] sm:$0xf]
        %v1309 = vld [vmem:[%s3 + $0x88] sm:$0xf]
        %v1310 = vld [vmem:[%s3 + $0x8c] sm:$0xf]
        %v1311 = vld [vmem:[%s3 + $0x90] sm:$0xf]
        %v1312 = vld [vmem:[%s3 + $0x94] sm:$0xf]
        %v1313 = vld [vmem:[%s3 + $0x98] sm:$0xf]
        %v1314 = vld [vmem:[%s3 + $0x9c] sm:$0xf]
        %v1315 = vld [vmem:[%s3 + $0xa0] sm:$0xf]
        %v1316 = vld [vmem:[%s3 + $0xa4] sm:$0xf]
        %v1317 = vld [vmem:[%s3 + $0xa8] sm:$0xf]
        %v1318 = vld [vmem:[%s3 + $0xac] sm:$0xf]
        %v1319 = vld [vmem:[%s3 + $0xb0] sm:$0xf]
        %v1320 = vld [vmem:[%s3 + $0xb4] sm:$0xf]
        %v1321 = vld [vmem:[%s3 + $0xb8] sm:$0xf]
        %v1322 = vld [vmem:[%s3 + $0xbc] sm:$0xf]
        %v1323 = vld [vmem:[%s3 + $0xc0] sm:$0xf]
        %v1324 = vld [vmem:[%s3 + $0xc4] sm:$0xf]
        %v1325 = vld [vmem:[%s3 + $0xc8] sm:$0xf]
        %v1326 = vld [vmem:[%s3 + $0xcc] sm:$0xf]
        %v1327 = vld [vmem:[%s3 + $0xd0] sm:$0xf]
        %v1328 = vld [vmem:[%s3 + $0xd4] sm:$0xf]
        %v1329 = vld [vmem:[%s3 + $0xd8] sm:$0xf]
        %v1330 = vld [vmem:[%s3 + $0xdc] sm:$0xf]
        %v1331 = vld [vmem:[%s3 + $0xe0] sm:$0xf]
        %v1332 = vld [vmem:[%s3 + $0xe4] sm:$0xf]
        %v1333 = vld [vmem:[%s3 + $0xe8] sm:$0xf]
        %v1334 = vld [vmem:[%s3 + $0xec] sm:$0xf]
        %v1335 = vld [vmem:[%s3 + $0xf0] sm:$0xf]
        %v1336 = vld [vmem:[%s3 + $0xf4] sm:$0xf]
        %v1337 = vld [vmem:[%s3 + $0xf8] sm:$0xf]
        %v1338 = vld [vmem:[%s3 + $0xfc] sm:$0xf]
        %v1339 = vld [vmem:[%s3 + $0x100] sm:$0xf]
        %v1340 = vld [vmem:[%s3 + $0x104] sm:$0xf]
        %v1341 = vld [vmem:[%s3 + $0x108] sm:$0xf]
        %v1342 = vld [vmem:[%s3 + $0x10c] sm:$0xf]
        %v1343 = vld [vmem:[%s3 + $0x110] sm:$0xf]
        %v1344 = vld [vmem:[%s3 + $0x114] sm:$0xf]
        %v1345 = vld [vmem:[%s3 + $0x118] sm:$0xf]
        %v1346 = vld [vmem:[%s3 + $0x11c] sm:$0xf]
        %v1347 = vld [vmem:[%s3 + $0x120] sm:$0xf]
        %v1348 = vld [vmem:[%s3 + $0x124] sm:$0xf]
        %v1349 = vld [vmem:[%s3 + $0x128] sm:$0xf]
        %v1350 = vld [vmem:[%s3 + $0x12c] sm:$0xf]
        %v1351 = vld [vmem:[%s3 + $0x130] sm:$0xf]
        %v1352 = vld [vmem:[%s3 + $0x134] sm:$0xf]
        %v1353 = vld [vmem:[%s3 + $0x138] sm:$0xf]
        %v1354 = vld [vmem:[%s3 + $0x13c] sm:$0xf]
        %v1355 = vld [vmem:[%s3 + $0x140] sm:$0xf]
        %v1356 = vld [vmem:[%s3 + $0x144] sm:$0xf]
        %v1357 = vld [vmem:[%s3 + $0x148] sm:$0xf]
        %v1358 = vld [vmem:[%s3 + $0x14c] sm:$0xf]
        %v1359 = vld [vmem:[%s3 + $0x150] sm:$0xf]
        %v1360 = vld [vmem:[%s3 + $0x154] sm:$0xf]
        %v1361 = vld [vmem:[%s3 + $0x158] sm:$0xf]
        %v1362 = vld [vmem:[%s3 + $0x15c] sm:$0xf]
        %v1363 = vld [vmem:[%s3 + $0x160] sm:$0xf]
        %v1364 = vld [vmem:[%s3 + $0x164] sm:$0xf]
        %v1365 = vld [vmem:[%s3 + $0x168] sm:$0xf]
        %v1366 = vld [vmem:[%s3 + $0x16c] sm:$0xf]
        %v1367 = vld [vmem:[%s3 + $0x170] sm:$0xf]
        %v1368 = vld [vmem:[%s3 + $0x174] sm:$0xf]
        %v1369 = vld [vmem:[%s3 + $0x178] sm:$0xf]
        %v1370 = vld [vmem:[%s3 + $0x17c] sm:$0xf]
        %v1371 = vld [vmem:[%s3 + $0x180] sm:$0xf]
        %v1372 = vld [vmem:[%s3 + $0x184] sm:$0xf]
        %v1373 = vld [vmem:[%s3 + $0x188] sm:$0xf]
        %v1374 = vld [vmem:[%s3 + $0x18c] sm:$0xf]
        %v1375 = vld [vmem:[%s3 + $0x190] sm:$0xf]
        %v1376 = vld [vmem:[%s3 + $0x194] sm:$0xf]
        %v1377 = vld [vmem:[%s3 + $0x198] sm:$0xf]
        %v1378 = vld [vmem:[%s3 + $0x19c] sm:$0xf]
        %v1379 = vld [vmem:[%s3 + $0x1a0] sm:$0xf]
        %v1380 = vld [vmem:[%s3 + $0x1a4] sm:$0xf]
        %v1381 = vld [vmem:[%s3 + $0x1a8] sm:$0xf]
        %v1382 = vld [vmem:[%s3 + $0x1ac] sm:$0xf]
        %v1383 = vld [vmem:[%s3 + $0x1b0] sm:$0xf]
        %v1384 = vld [vmem:[%s3 + $0x1b4] sm:$0xf]
        %v1385 = vld [vmem:[%s3 + $0x1b8] sm:$0xf]
        %v1386 = vld [vmem:[%s3 + $0x1bc] sm:$0xf]
        %v1387 = vld [vmem:[%s3 + $0x1c0] sm:$0xf]
        %v1388 = vld [vmem:[%s3 + $0x1c4] sm:$0xf]
        %v1389 = vld [vmem:[%s3 + $0x1c8] sm:$0xf]
        %v1390 = vld [vmem:[%s3 + $0x1cc] sm:$0xf]
        %v1391 = vld [vmem:[%s3 + $0x1d0] sm:$0xf]
        %v1392 = vld [vmem:[%s3 + $0x1d4] sm:$0xf]
        %v1393 = vld [vmem:[%s3 + $0x1d8] sm:$0xf]
        %v1394 = vld [vmem:[%s3 + $0x1dc] sm:$0xf]
        %v1395 = vld [vmem:[%s3 + $0x1e0] sm:$0xf]
        %v1396 = vld [vmem:[%s3 + $0x1e4] sm:$0xf]
        %v1397 = vld [vmem:[%s3 + $0x1e8] sm:$0xf]
        %v1398 = vld [vmem:[%s3 + $0x1ec] sm:$0xf]
        %v1399 = vld [vmem:[%s3 + $0x1f0] sm:$0xf]
        %v1400 = vld [vmem:[%s3 + $0x1f4] sm:$0xf]
        %v1401 = vld [vmem:[%s3 + $0x1f8] sm:$0xf]
        %v1402 = vld [vmem:[%s3 + $0x1fc] sm:$0xf]
        %v1403 = vld [vmem:[%s3 + $0x200] sm:$0xf]
        %v1404 = vld [vmem:[%s3 + $0x204] sm:$0xf]
        %v1405 = vld [vmem:[%s3 + $0x208] sm:$0xf]
        %v1406 = vld [vmem:[%s3 + $0x20c] sm:$0xf]
        %v1407 = vld [vmem:[%s3 + $0x210] sm:$0xf]
        %v1408 = vld [vmem:[%s3 + $0x214] sm:$0xf]
        %v1409 = vld [vmem:[%s3 + $0x218] sm:$0xf]
        %v1410 = vld [vmem:[%s3 + $0x21c] sm:$0xf]
        %v1411 = vld [vmem:[%s3 + $0x220] sm:$0xf]
        %v1412 = vld [vmem:[%s3 + $0x224] sm:$0xf]
        %v1413 = vld [vmem:[%s3 + $0x228] sm:$0xf]
        %v1414 = vld [vmem:[%s3 + $0x22c] sm:$0xf]
        %v1415 = vld [vmem:[%s3 + $0x230] sm:$0xf]
        %v1416 = vld [vmem:[%s3 + $0x234] sm:$0xf]
        %v1417 = vld [vmem:[%s3 + $0x238] sm:$0xf]
        %v1418 = vld [vmem:[%s3 + $0x23c] sm:$0xf]
        %v1419 = vld [vmem:[%s4] sm:$0x1]
        %v1421 = vlaneseq
        %v1422 = vshrl.u32 %v1421, 7
        %v1423 = vsub.s32 0, %v1422
        %v1424 = vrot.slane %v1419, %v1423
        %v1570 = vunpack.c.l.b16 %v1275
        %v1571 = vunpack.c.l.b16 %v1276
        %v1572 = vunpack.c.l.b16 %v1277
        %v1573 = vunpack.c.l.b16 %v1278
        %v1574 = vunpack.c.l.b16 %v1279
        %v1575 = vunpack.c.l.b16 %v1280
        %v1576 = vunpack.c.l.b16 %v1281
        %v1577 = vunpack.c.l.b16 %v1282
        %v1578 = vunpack.c.l.b16 %v1283
        %v1579 = vunpack.c.l.b16 %v1284
        %v1580 = vunpack.c.l.b16 %v1285
        %v1581 = vunpack.c.l.b16 %v1286
        %v1582 = vunpack.c.l.b16 %v1287
        %v1583 = vunpack.c.l.b16 %v1288
        %v1584 = vunpack.c.l.b16 %v1289
        %v1585 = vunpack.c.l.b16 %v1290
        %v1586 = vunpack.c.l.b16 %v1291
        %v1587 = vunpack.c.l.b16 %v1292
        %v1588 = vunpack.c.l.b16 %v1293
        %v1589 = vunpack.c.l.b16 %v1294
        %v1590 = vunpack.c.l.b16 %v1295
        %v1591 = vunpack.c.l.b16 %v1296
        %v1592 = vunpack.c.l.b16 %v1297
        %v1593 = vunpack.c.l.b16 %v1298
        %v1594 = vunpack.c.l.b16 %v1299
        %v1595 = vunpack.c.l.b16 %v1300
        %v1596 = vunpack.c.l.b16 %v1301
        %v1597 = vunpack.c.l.b16 %v1302
        %v1598 = vunpack.c.l.b16 %v1303
        %v1599 = vunpack.c.l.b16 %v1304
        %v1600 = vunpack.c.l.b16 %v1305
        %v1601 = vunpack.c.l.b16 %v1306
        %v1602 = vunpack.c.l.b16 %v1307
        %v1603 = vunpack.c.l.b16 %v1308
        %v1604 = vunpack.c.l.b16 %v1309
        %v1605 = vunpack.c.l.b16 %v1310
        %v1606 = vunpack.c.l.b16 %v1311
        %v1607 = vunpack.c.l.b16 %v1312
        %v1608 = vunpack.c.l.b16 %v1313
        %v1609 = vunpack.c.l.b16 %v1314
        %v1610 = vunpack.c.l.b16 %v1315
        %v1611 = vunpack.c.l.b16 %v1316
        %v1612 = vunpack.c.l.b16 %v1317
        %v1613 = vunpack.c.l.b16 %v1318
        %v1614 = vunpack.c.l.b16 %v1319
        %v1615 = vunpack.c.l.b16 %v1320
        %v1616 = vunpack.c.l.b16 %v1321
        %v1617 = vunpack.c.l.b16 %v1322
        %v1618 = vunpack.c.l.b16 %v1323
        %v1619 = vunpack.c.l.b16 %v1324
        %v1620 = vunpack.c.l.b16 %v1325
        %v1621 = vunpack.c.l.b16 %v1326
        %v1622 = vunpack.c.l.b16 %v1327
        %v1623 = vunpack.c.l.b16 %v1328
        %v1624 = vunpack.c.l.b16 %v1329
        %v1625 = vunpack.c.l.b16 %v1330
        %v1626 = vunpack.c.l.b16 %v1331
        %v1627 = vunpack.c.l.b16 %v1332
        %v1628 = vunpack.c.l.b16 %v1333
        %v1629 = vunpack.c.l.b16 %v1334
        %v1630 = vunpack.c.l.b16 %v1335
        %v1631 = vunpack.c.l.b16 %v1336
        %v1632 = vunpack.c.l.b16 %v1337
        %v1633 = vunpack.c.l.b16 %v1338
        %v1634 = vunpack.c.l.b16 %v1339
        %v1635 = vunpack.c.l.b16 %v1340
        %v1636 = vunpack.c.l.b16 %v1341
        %v1637 = vunpack.c.l.b16 %v1342
        %v1638 = vunpack.c.l.b16 %v1343
        %v1639 = vunpack.c.l.b16 %v1344
        %v1640 = vunpack.c.l.b16 %v1345
        %v1641 = vunpack.c.l.b16 %v1346
        %v1642 = vunpack.c.l.b16 %v1347
        %v1643 = vunpack.c.l.b16 %v1348
        %v1644 = vunpack.c.l.b16 %v1349
        %v1645 = vunpack.c.l.b16 %v1350
        %v1646 = vunpack.c.l.b16 %v1351
        %v1647 = vunpack.c.l.b16 %v1352
        %v1648 = vunpack.c.l.b16 %v1353
        %v1649 = vunpack.c.l.b16 %v1354
        %v1650 = vunpack.c.l.b16 %v1355
        %v1651 = vunpack.c.l.b16 %v1356
        %v1652 = vunpack.c.l.b16 %v1357
        %v1653 = vunpack.c.l.b16 %v1358
        %v1654 = vunpack.c.l.b16 %v1359
        %v1655 = vunpack.c.l.b16 %v1360
        %v1656 = vunpack.c.l.b16 %v1361
        %v1657 = vunpack.c.l.b16 %v1362
        %v1658 = vunpack.c.l.b16 %v1363
        %v1659 = vunpack.c.l.b16 %v1364
        %v1660 = vunpack.c.l.b16 %v1365
        %v1661 = vunpack.c.l.b16 %v1366
        %v1662 = vunpack.c.l.b16 %v1367
        %v1663 = vunpack.c.l.b16 %v1368
        %v1664 = vunpack.c.l.b16 %v1369
        %v1665 = vunpack.c.l.b16 %v1370
        %v1666 = vunpack.c.l.b16 %v1371
        %v1667 = vunpack.c.l.b16 %v1372
        %v1668 = vunpack.c.l.b16 %v1373
        %v1669 = vunpack.c.l.b16 %v1374
        %v1670 = vunpack.c.l.b16 %v1375
        %v1671 = vunpack.c.l.b16 %v1376
        %v1672 = vunpack.c.l.b16 %v1377
        %v1673 = vunpack.c.l.b16 %v1378
        %v1674 = vunpack.c.l.b16 %v1379
        %v1675 = vunpack.c.l.b16 %v1380
        %v1676 = vunpack.c.l.b16 %v1381
        %v1677 = vunpack.c.l.b16 %v1382
        %v1678 = vunpack.c.l.b16 %v1383
        %v1679 = vunpack.c.l.b16 %v1384
        %v1680 = vunpack.c.l.b16 %v1385
        %v1681 = vunpack.c.l.b16 %v1386
        %v1682 = vunpack.c.l.b16 %v1387
        %v1683 = vunpack.c.l.b16 %v1388
        %v1684 = vunpack.c.l.b16 %v1389
        %v1685 = vunpack.c.l.b16 %v1390
        %v1686 = vunpack.c.l.b16 %v1391
        %v1687 = vunpack.c.l.b16 %v1392
        %v1688 = vunpack.c.l.b16 %v1393
        %v1689 = vunpack.c.l.b16 %v1394
        %v1690 = vunpack.c.l.b16 %v1395
        %v1691 = vunpack.c.l.b16 %v1396
        %v1692 = vunpack.c.l.b16 %v1397
        %v1693 = vunpack.c.l.b16 %v1398
        %v1694 = vunpack.c.l.b16 %v1399
        %v1695 = vunpack.c.l.b16 %v1400
        %v1696 = vunpack.c.l.b16 %v1401
        %v1697 = vunpack.c.l.b16 %v1402
        %v1698 = vunpack.c.l.b16 %v1403
        %v1699 = vunpack.c.l.b16 %v1404
        %v1700 = vunpack.c.l.b16 %v1405
        %v1701 = vunpack.c.l.b16 %v1406
        %v1702 = vunpack.c.l.b16 %v1407
        %v1703 = vunpack.c.l.b16 %v1408
        %v1704 = vunpack.c.l.b16 %v1409
        %v1705 = vunpack.c.l.b16 %v1410
        %v1706 = vunpack.c.l.b16 %v1411
        %v1707 = vunpack.c.l.b16 %v1412
        %v1708 = vunpack.c.l.b16 %v1413
        %v1709 = vunpack.c.l.b16 %v1414
        %v1710 = vunpack.c.l.b16 %v1415
        %v1711 = vunpack.c.l.b16 %v1416
        %v1712 = vunpack.c.l.b16 %v1417
        %v1713 = vunpack.c.l.b16 %v1418
        %v1714 = vpack.c.b16 %v1571, %v1570
        %v1715 = vpack.c.b16 %v1573, %v1572
        %v1716 = vpack.c.b16 %v1575, %v1574
        %v1717 = vpack.c.b16 %v1577, %v1576
        %v1718 = vpack.c.b16 %v1579, %v1578
        %v1719 = vpack.c.b16 %v1581, %v1580
        %v1720 = vpack.c.b16 %v1583, %v1582
        %v1721 = vpack.c.b16 %v1585, %v1584
        %v1722 = vpack.c.b16 %v1587, %v1586
        %v1723 = vpack.c.b16 %v1589, %v1588
        %v1724 = vpack.c.b16 %v1591, %v1590
        %v1725 = vpack.c.b16 %v1593, %v1592
        %v1726 = vpack.c.b16 %v1595, %v1594
        %v1727 = vpack.c.b16 %v1597, %v1596
        %v1728 = vpack.c.b16 %v1599, %v1598
        %v1729 = vpack.c.b16 %v1601, %v1600
        %v1730 = vpack.c.b16 %v1603, %v1602
        %v1731 = vpack.c.b16 %v1605, %v1604
        %v1732 = vpack.c.b16 %v1607, %v1606
        %v1733 = vpack.c.b16 %v1609, %v1608
        %v1734 = vpack.c.b16 %v1611, %v1610
        %v1735 = vpack.c.b16 %v1613, %v1612
        %v1736 = vpack.c.b16 %v1615, %v1614
        %v1737 = vpack.c.b16 %v1617, %v1616
        %v1738 = vpack.c.b16 %v1619, %v1618
        %v1739 = vpack.c.b16 %v1621, %v1620
        %v1740 = vpack.c.b16 %v1623, %v1622
        %v1741 = vpack.c.b16 %v1625, %v1624
        %v1742 = vpack.c.b16 %v1627, %v1626
        %v1743 = vpack.c.b16 %v1629, %v1628
        %v1744 = vpack.c.b16 %v1631, %v1630
        %v1745 = vpack.c.b16 %v1633, %v1632
        %v1746 = vpack.c.b16 %v1635, %v1634
        %v1747 = vpack.c.b16 %v1637, %v1636
        %v1748 = vpack.c.b16 %v1639, %v1638
        %v1749 = vpack.c.b16 %v1641, %v1640
        %v1750 = vpack.c.b16 %v1643, %v1642
        %v1751 = vpack.c.b16 %v1645, %v1644
        %v1752 = vpack.c.b16 %v1647, %v1646
        %v1753 = vpack.c.b16 %v1649, %v1648
        %v1754 = vpack.c.b16 %v1651, %v1650
        %v1755 = vpack.c.b16 %v1653, %v1652
        %v1756 = vpack.c.b16 %v1655, %v1654
        %v1757 = vpack.c.b16 %v1657, %v1656
        %v1758 = vpack.c.b16 %v1659, %v1658
        %v1759 = vpack.c.b16 %v1661, %v1660
        %v1760 = vpack.c.b16 %v1663, %v1662
        %v1761 = vpack.c.b16 %v1665, %v1664
        %v1762 = vpack.c.b16 %v1667, %v1666
        %v1763 = vpack.c.b16 %v1669, %v1668
        %v1764 = vpack.c.b16 %v1671, %v1670
        %v1765 = vpack.c.b16 %v1673, %v1672
        %v1766 = vpack.c.b16 %v1675, %v1674
        %v1767 = vpack.c.b16 %v1677, %v1676
        %v1768 = vpack.c.b16 %v1679, %v1678
        %v1769 = vpack.c.b16 %v1681, %v1680
        %v1770 = vpack.c.b16 %v1683, %v1682
        %v1771 = vpack.c.b16 %v1685, %v1684
        %v1772 = vpack.c.b16 %v1687, %v1686
        %v1773 = vpack.c.b16 %v1689, %v1688
        %v1774 = vpack.c.b16 %v1691, %v1690
        %v1775 = vpack.c.b16 %v1693, %v1692
        %v1776 = vpack.c.b16 %v1695, %v1694
        %v1777 = vpack.c.b16 %v1697, %v1696
        %v1778 = vpack.c.b16 %v1699, %v1698
        %v1779 = vpack.c.b16 %v1701, %v1700
        %v1780 = vpack.c.b16 %v1703, %v1702
        %v1781 = vpack.c.b16 %v1705, %v1704
        %v1782 = vpack.c.b16 %v1707, %v1706
        %v1783 = vpack.c.b16 %v1709, %v1708
        %v1784 = vpack.c.b16 %v1711, %v1710
        %v1785 = vpack.c.b16 %v1713, %v1712
        %1858 = vmatprep.subr.bf16.mxu0 0
        %1859 = vmatpush1.bf16.msra.mxu0 %v1714
        %1860 = vmatprep.subr.bf16.mxu0 0
        %1861 = vmatpush1.bf16.msra.mxu0 %v1715
        %1862 = vmatprep.subr.bf16.mxu0 0
        %1863 = vmatpush1.bf16.msra.mxu0 %v1716
        %1864 = vmatprep.subr.bf16.mxu0 0
        %1865 = vmatpush1.bf16.msra.mxu0 %v1717
        %1866 = vmatprep.subr.bf16.mxu0 0
        %1867 = vmatpush1.bf16.msra.mxu0 %v1718
        %1868 = vmatprep.subr.bf16.mxu0 0
        %1869 = vmatpush1.bf16.msra.mxu0 %v1719
        %1870 = vmatprep.subr.bf16.mxu0 0
        %1871 = vmatpush1.bf16.msra.mxu0 %v1720
        %1872 = vmatprep.subr.bf16.mxu0 0
        %1873 = vmatpush1.bf16.msra.mxu0 %v1721
        %1874 = vmatprep.subr.bf16.mxu0 0
        %1875 = vmatpush1.bf16.msra.mxu0 %v1722
        %1876 = vmatprep.subr.bf16.mxu0 0
        %1877 = vmatpush1.bf16.msra.mxu0 %v1723
        %1878 = vmatprep.subr.bf16.mxu0 0
        %1879 = vmatpush1.bf16.msra.mxu0 %v1724
        %1880 = vmatprep.subr.bf16.mxu0 0
        %1881 = vmatpush1.bf16.msra.mxu0 %v1725
        %1882 = vmatprep.subr.bf16.mxu0 0
        %1883 = vmatpush1.bf16.msra.mxu0 %v1726
        %1884 = vmatprep.subr.bf16.mxu0 0
        %1885 = vmatpush1.bf16.msra.mxu0 %v1727
        %1886 = vmatprep.subr.bf16.mxu0 0
        %1887 = vmatpush1.bf16.msra.mxu0 %v1728
        %1888 = vmatprep.subr.bf16.mxu0 0
        %1889 = vmatpush1.bf16.msra.mxu0 %v1729
        %1890 = vmatprep.mubr.bf16.mxu0 %v1177
        %1891 = vmatmul.mubr.bf16.gmra.mrb[0].mxu0 %v1176
        %v1892 = vpop.f32.mrb[0].mxu0
        %v1893 = vadd.f32 %v1424, %v1892
        %v1894 = vpop.f32.mrb[0].mxu0
        %v1895 = vpop.f32.mrb[0].mxu0
        %v1896 = vadd.f32 %v1424, %v1895
        %v1897 = vpop.f32.mrb[0].mxu0
        %1898 = vmatprep.mubr.bf16.mxu0 %v1186
        %1899 = vmatmul.mubr.bf16.gmra.mrb[0].mxu0 %v1185
        %v1900 = vpop.f32.mrb[0].mxu0
        %v1901 = vadd.f32 %v1424, %v1900
        %v1902 = vpop.f32.mrb[0].mxu0
        %v1903 = vpop.f32.mrb[0].mxu0
        %v1904 = vadd.f32 %v1424, %v1903
        %v1905 = vpop.f32.mrb[0].mxu0
        %1906 = vmatprep.mubr.bf16.mxu0 %v1195
        %1907 = vmatmul.mubr.bf16.gmra.mrb[0].mxu0 %v1194
        %v1908 = vpop.f32.mrb[0].mxu0
        %v1909 = vadd.f32 %v1424, %v1908
        %v1910 = vpop.f32.mrb[0].mxu0
        %v1911 = vpop.f32.mrb[0].mxu0
        %v1912 = vadd.f32 %v1424, %v1911
        %v1913 = vpop.f32.mrb[0].mxu0
        %1914 = vmatprep.mubr.bf16.mxu0 %v1204
        %1915 = vmatmul.mubr.bf16.gmra.mrb[0].mxu0 %v1203
        %v1916 = vpop.f32.mrb[0].mxu0
        %v1917 = vadd.f32 %v1424, %v1916
        %v1918 = vpop.f32.mrb[0].mxu0
        %v1919 = vpop.f32.mrb[0].mxu0
        %v1920 = vadd.f32 %v1424, %v1919
        %v1921 = vpop.f32.mrb[0].mxu0
        %1922 = vmatprep.mubr.bf16.mxu0 %v1213
        %1923 = vmatmul.mubr.bf16.gmra.mrb[0].mxu0 %v1212
        %v1924 = vpop.f32.mrb[0].mxu0
        %v1925 = vadd.f32 %v1424, %v1924
        %v1926 = vpop.f32.mrb[0].mxu0
        %v1927 = vpop.f32.mrb[0].mxu0
        %v1928 = vadd.f32 %v1424, %v1927
        %v1929 = vpop.f32.mrb[0].mxu0
        %1930 = vmatprep.mubr.bf16.mxu0 %v1222
        %1931 = vmatmul.mubr.bf16.gmra.mrb[0].mxu0 %v1221
        %v1932 = vpop.f32.mrb[0].mxu0
        %v1933 = vadd.f32 %v1424, %v1932
        %v1934 = vpop.f32.mrb[0].mxu0
        %v1935 = vpop.f32.mrb[0].mxu0
        %v1936 = vadd.f32 %v1424, %v1935
        %v1937 = vpop.f32.mrb[0].mxu0
        %1938 = vmatprep.mubr.bf16.mxu0 %v1231
        %1939 = vmatmul.mubr.bf16.gmra.mrb[0].mxu0 %v1230
        %v1940 = vpop.f32.mrb[0].mxu0
        %v1941 = vadd.f32 %v1424, %v1940
        %v1942 = vpop.f32.mrb[0].mxu0
        %v1943 = vpop.f32.mrb[0].mxu0
        %v1944 = vadd.f32 %v1424, %v1943
        %v1945 = vpop.f32.mrb[0].mxu0
        %1946 = vmatprep.mubr.bf16.mxu0 %v1240
        %1947 = vmatmul.mubr.bf16.gmra.mrb[0].mxu0 %v1239
        %v1948 = vpop.f32.mrb[0].mxu0
        %v1949 = vadd.f32 %v1424, %v1948
        %v1950 = vpop.f32.mrb[0].mxu0
        %v1951 = vpop.f32.mrb[0].mxu0
        %v1952 = vadd.f32 %v1424, %v1951
        %v1953 = vpop.f32.mrb[0].mxu0
        %1954 = vmatprep.mubr.bf16.mxu0 %v1249
        %1955 = vmatmul.mubr.bf16.gmra.mrb[0].mxu0 %v1248
        %v1956 = vpop.f32.mrb[0].mxu0
        %v1957 = vadd.f32 %v1424, %v1956
        %v1958 = vpop.f32.mrb[0].mxu0
        %v1959 = vpop.f32.mrb[0].mxu0
        %v1960 = vadd.f32 %v1424, %v1959
        %v1961 = vpop.f32.mrb[0].mxu0
        %1962 = vmatprep.mubr.bf16.mxu0 %v1258
        %1963 = vmatmul.mubr.bf16.gmra.mrb[0].mxu0 %v1257
        %v1964 = vpop.f32.mrb[0].mxu0
        %v1965 = vadd.f32 %v1424, %v1964
        %v1966 = vpop.f32.mrb[0].mxu0
        %v1967 = vpop.f32.mrb[0].mxu0
        %v1968 = vadd.f32 %v1424, %v1967
        %v1969 = vpop.f32.mrb[0].mxu0
        %1970 = vmatprep.mubr.bf16.mxu0 %v1267
        %1971 = vmatmul.mubr.bf16.gmra.mrb[0].mxu0 %v1266
        %v1972 = vpop.f32.mrb[0].mxu0
        %v1973 = vadd.f32 %v1424, %v1972
        %v1974 = vpop.f32.mrb[0].mxu0
        %v1975 = vpop.f32.mrb[0].mxu0
        %v1976 = vadd.f32 %v1424, %v1975
        %v1977 = vpop.f32.mrb[0].mxu0
        %1978 = vdwg.mxu0
        %1979 = vmatprep.subr.bf16.mxu0 0
        %1980 = vmatpush1.bf16.msra.mxu0 %v1730
        %1981 = vmatprep.subr.bf16.mxu0 0
        %1982 = vmatpush1.bf16.msra.mxu0 %v1731
        %1983 = vmatprep.subr.bf16.mxu0 0
        %1984 = vmatpush1.bf16.msra.mxu0 %v1732
        %1985 = vmatprep.subr.bf16.mxu0 0
        %1986 = vmatpush1.bf16.msra.mxu0 %v1733
        %1987 = vmatprep.subr.bf16.mxu0 0
        %1988 = vmatpush1.bf16.msra.mxu0 %v1734
        %1989 = vmatprep.subr.bf16.mxu0 0
        %1990 = vmatpush1.bf16.msra.mxu0 %v1735
        %1991 = vmatprep.subr.bf16.mxu0 0
        %1992 = vmatpush1.bf16.msra.mxu0 %v1736
        %1993 = vmatprep.subr.bf16.mxu0 0
        %1994 = vmatpush1.bf16.msra.mxu0 %v1737
        %1995 = vmatprep.subr.bf16.mxu0 0
        %1996 = vmatpush1.bf16.msra.mxu0 %v1738
        %1997 = vmatprep.subr.bf16.mxu0 0
        %1998 = vmatpush1.bf16.msra.mxu0 %v1739
        %1999 = vmatprep.subr.bf16.mxu0 0
        %2000 = vmatpush1.bf16.msra.mxu0 %v1740
        %2001 = vmatprep.subr.bf16.mxu0 0
        %2002 = vmatpush1.bf16.msra.mxu0 %v1741
        %2003 = vmatprep.subr.bf16.mxu0 0
        %2004 = vmatpush1.bf16.msra.mxu0 %v1742
        %2005 = vmatprep.subr.bf16.mxu0 0
        %2006 = vmatpush1.bf16.msra.mxu0 %v1743
        %2007 = vmatprep.subr.bf16.mxu0 0
        %2008 = vmatpush1.bf16.msra.mxu0 %v1744
        %2009 = vmatprep.subr.bf16.mxu0 0
        %2010 = vmatpush1.bf16.msra.mxu0 %v1745
        %2011 = vmatprep.mubr.bf16.mxu0 %v1179
        %2012 = vmatmul.mubr.bf16.gmra.mrb[0].mxu0 %v1178
        %v2013 = vpop.f32.mrb[0].mxu0
        %v2014 = vadd.f32 %v1893, %v2013
        %v2015 = vpop.f32.mrb[0].mxu0
        %v2016 = vpop.f32.mrb[0].mxu0
        %v2017 = vadd.f32 %v1896, %v2016
        %v2018 = vpop.f32.mrb[0].mxu0
        %2019 = vmatprep.mubr.bf16.mxu0 %v1188
        %2020 = vmatmul.mubr.bf16.gmra.mrb[0].mxu0 %v1187
        %v2021 = vpop.f32.mrb[0].mxu0
        %v2022 = vadd.f32 %v1901, %v2021
        %v2023 = vpop.f32.mrb[0].mxu0
        %v2024 = vpop.f32.mrb[0].mxu0
        %v2025 = vadd.f32 %v1904, %v2024
        %v2026 = vpop.f32.mrb[0].mxu0
        %2027 = vmatprep.mubr.bf16.mxu0 %v1197
        %2028 = vmatmul.mubr.bf16.gmra.mrb[0].mxu0 %v1196
        %v2029 = vpop.f32.mrb[0].mxu0
        %v2030 = vadd.f32 %v1909, %v2029
        %v2031 = vpop.f32.mrb[0].mxu0
        %v2032 = vpop.f32.mrb[0].mxu0
        %v2033 = vadd.f32 %v1912, %v2032
        %v2034 = vpop.f32.mrb[0].mxu0
        %2035 = vmatprep.mubr.bf16.mxu0 %v1206
        %2036 = vmatmul.mubr.bf16.gmra.mrb[0].mxu0 %v1205
        %v2037 = vpop.f32.mrb[0].mxu0
        %v2038 = vadd.f32 %v1917, %v2037
        %v2039 = vpop.f32.mrb[0].mxu0
        %v2040 = vpop.f32.mrb[0].mxu0
        %v2041 = vadd.f32 %v1920, %v2040
        %v2042 = vpop.f32.mrb[0].mxu0
        %2043 = vmatprep.mubr.bf16.mxu0 %v1215
        %2044 = vmatmul.mubr.bf16.gmra.mrb[0].mxu0 %v1214
        %v2045 = vpop.f32.mrb[0].mxu0
        %v2046 = vadd.f32 %v1925, %v2045
        %v2047 = vpop.f32.mrb[0].mxu0
        %v2048 = vpop.f32.mrb[0].mxu0
        %v2049 = vadd.f32 %v1928, %v2048
        %v2050 = vpop.f32.mrb[0].mxu0
        %2051 = vmatprep.mubr.bf16.mxu0 %v1224
        %2052 = vmatmul.mubr.bf16.gmra.mrb[0].mxu0 %v1223
        %v2053 = vpop.f32.mrb[0].mxu0
        %v2054 = vadd.f32 %v1933, %v2053
        %v2055 = vpop.f32.mrb[0].mxu0
        %v2056 = vpop.f32.mrb[0].mxu0
        %v2057 = vadd.f32 %v1936, %v2056
        %v2058 = vpop.f32.mrb[0].mxu0
        %2059 = vmatprep.mubr.bf16.mxu0 %v1233
        %2060 = vmatmul.mubr.bf16.gmra.mrb[0].mxu0 %v1232
        %v2061 = vpop.f32.mrb[0].mxu0
        %v2062 = vadd.f32 %v1941, %v2061
        %v2063 = vpop.f32.mrb[0].mxu0
        %v2064 = vpop.f32.mrb[0].mxu0
        %v2065 = vadd.f32 %v1944, %v2064
        %v2066 = vpop.f32.mrb[0].mxu0
        %2067 = vmatprep.mubr.bf16.mxu0 %v1242
        %2068 = vmatmul.mubr.bf16.gmra.mrb[0].mxu0 %v1241
        %v2069 = vpop.f32.mrb[0].mxu0
        %v2070 = vadd.f32 %v1949, %v2069
        %v2071 = vpop.f32.mrb[0].mxu0
        %v2072 = vpop.f32.mrb[0].mxu0
        %v2073 = vadd.f32 %v1952, %v2072
        %v2074 = vpop.f32.mrb[0].mxu0
        %2075 = vmatprep.mubr.bf16.mxu0 %v1251
        %2076 = vmatmul.mubr.bf16.gmra.mrb[0].mxu0 %v1250
        %v2077 = vpop.f32.mrb[0].mxu0
        %v2078 = vadd.f32 %v1957, %v2077
        %v2079 = vpop.f32.mrb[0].mxu0
        %v2080 = vpop.f32.mrb[0].mxu0
        %v2081 = vadd.f32 %v1960, %v2080
        %v2082 = vpop.f32.mrb[0].mxu0
        %2083 = vmatprep.mubr.bf16.mxu0 %v1260
        %2084 = vmatmul.mubr.bf16.gmra.mrb[0].mxu0 %v1259
        %v2085 = vpop.f32.mrb[0].mxu0
        %v2086 = vadd.f32 %v1965, %v2085
        %v2087 = vpop.f32.mrb[0].mxu0
        %v2088 = vpop.f32.mrb[0].mxu0
        %v2089 = vadd.f32 %v1968, %v2088
        %v2090 = vpop.f32.mrb[0].mxu0
        %2091 = vmatprep.mubr.bf16.mxu0 %v1269
        %2092 = vmatmul.mubr.bf16.gmra.mrb[0].mxu0 %v1268
        %v2093 = vpop.f32.mrb[0].mxu0
        %v2094 = vadd.f32 %v1973, %v2093
        %v2095 = vpop.f32.mrb[0].mxu0
        %v2096 = vpop.f32.mrb[0].mxu0
        %v2097 = vadd.f32 %v1976, %v2096
        %v2098 = vpop.f32.mrb[0].mxu0
        %2099 = vdwg.mxu0
        %2100 = vmatprep.subr.bf16.mxu0 0
        %2101 = vmatpush1.bf16.msra.mxu0 %v1746
        %2102 = vmatprep.subr.bf16.mxu0 0
        %2103 = vmatpush1.bf16.msra.mxu0 %v1747
        %2104 = vmatprep.subr.bf16.mxu0 0
        %2105 = vmatpush1.bf16.msra.mxu0 %v1748
        %2106 = vmatprep.subr.bf16.mxu0 0
        %2107 = vmatpush1.bf16.msra.mxu0 %v1749
        %2108 = vmatprep.subr.bf16.mxu0 0
        %2109 = vmatpush1.bf16.msra.mxu0 %v1750
        %2110 = vmatprep.subr.bf16.mxu0 0
        %2111 = vmatpush1.bf16.msra.mxu0 %v1751
        %2112 = vmatprep.subr.bf16.mxu0 0
        %2113 = vmatpush1.bf16.msra.mxu0 %v1752
        %2114 = vmatprep.subr.bf16.mxu0 0
        %2115 = vmatpush1.bf16.msra.mxu0 %v1753
        %2116 = vmatprep.subr.bf16.mxu0 0
        %2117 = vmatpush1.bf16.msra.mxu0 %v1754
        %2118 = vmatprep.subr.bf16.mxu0 0
        %2119 = vmatpush1.bf16.msra.mxu0 %v1755
        %2120 = vmatprep.subr.bf16.mxu0 0
        %2121 = vmatpush1.bf16.msra.mxu0 %v1756
        %2122 = vmatprep.subr.bf16.mxu0 0
        %2123 = vmatpush1.bf16.msra.mxu0 %v1757
        %2124 = vmatprep.subr.bf16.mxu0 0
        %2125 = vmatpush1.bf16.msra.mxu0 %v1758
        %2126 = vmatprep.subr.bf16.mxu0 0
        %2127 = vmatpush1.bf16.msra.mxu0 %v1759
        %2128 = vmatprep.subr.bf16.mxu0 0
        %2129 = vmatpush1.bf16.msra.mxu0 %v1760
        %2130 = vmatprep.subr.bf16.mxu0 0
        %2131 = vmatpush1.bf16.msra.mxu0 %v1761
        %2132 = vmatprep.mubr.bf16.mxu0 %v1181
        %2133 = vmatmul.mubr.bf16.gmra.mrb[0].mxu0 %v1180
        %v2134 = vpop.f32.mrb[0].mxu0
        %v2135 = vadd.f32 %v2014, %v2134
        %v2136 = vpop.f32.mrb[0].mxu0
        %v2137 = vpop.f32.mrb[0].mxu0
        %v2138 = vadd.f32 %v2017, %v2137
        %v2139 = vpop.f32.mrb[0].mxu0
        %2140 = vmatprep.mubr.bf16.mxu0 %v1190
        %2141 = vmatmul.mubr.bf16.gmra.mrb[0].mxu0 %v1189
        %v2142 = vpop.f32.mrb[0].mxu0
        %v2143 = vadd.f32 %v2022, %v2142
        %v2144 = vpop.f32.mrb[0].mxu0
        %v2145 = vpop.f32.mrb[0].mxu0
        %v2146 = vadd.f32 %v2025, %v2145
        %v2147 = vpop.f32.mrb[0].mxu0
        %2148 = vmatprep.mubr.bf16.mxu0 %v1199
        %2149 = vmatmul.mubr.bf16.gmra.mrb[0].mxu0 %v1198
        %v2150 = vpop.f32.mrb[0].mxu0
        %v2151 = vadd.f32 %v2030, %v2150
        %v2152 = vpop.f32.mrb[0].mxu0
        %v2153 = vpop.f32.mrb[0].mxu0
        %v2154 = vadd.f32 %v2033, %v2153
        %v2155 = vpop.f32.mrb[0].mxu0
        %2156 = vmatprep.mubr.bf16.mxu0 %v1208
        %2157 = vmatmul.mubr.bf16.gmra.mrb[0].mxu0 %v1207
        %v2158 = vpop.f32.mrb[0].mxu0
        %v2159 = vadd.f32 %v2038, %v2158
        %v2160 = vpop.f32.mrb[0].mxu0
        %v2161 = vpop.f32.mrb[0].mxu0
        %v2162 = vadd.f32 %v2041, %v2161
        %v2163 = vpop.f32.mrb[0].mxu0
        %2164 = vmatprep.mubr.bf16.mxu0 %v1217
        %2165 = vmatmul.mubr.bf16.gmra.mrb[0].mxu0 %v1216
        %v2166 = vpop.f32.mrb[0].mxu0
        %v2167 = vadd.f32 %v2046, %v2166
        %v2168 = vpop.f32.mrb[0].mxu0
        %v2169 = vpop.f32.mrb[0].mxu0
        %v2170 = vadd.f32 %v2049, %v2169
        %v2171 = vpop.f32.mrb[0].mxu0
        %2172 = vmatprep.mubr.bf16.mxu0 %v1226
        %2173 = vmatmul.mubr.bf16.gmra.mrb[0].mxu0 %v1225
        %v2174 = vpop.f32.mrb[0].mxu0
        %v2175 = vadd.f32 %v2054, %v2174
        %v2176 = vpop.f32.mrb[0].mxu0
        %v2177 = vpop.f32.mrb[0].mxu0
        %v2178 = vadd.f32 %v2057, %v2177
        %v2179 = vpop.f32.mrb[0].mxu0
        %2180 = vmatprep.mubr.bf16.mxu0 %v1235
        %2181 = vmatmul.mubr.bf16.gmra.mrb[0].mxu0 %v1234
        %v2182 = vpop.f32.mrb[0].mxu0
        %v2183 = vadd.f32 %v2062, %v2182
        %v2184 = vpop.f32.mrb[0].mxu0
        %v2185 = vpop.f32.mrb[0].mxu0
        %v2186 = vadd.f32 %v2065, %v2185
        %v2187 = vpop.f32.mrb[0].mxu0
        %2188 = vmatprep.mubr.bf16.mxu0 %v1244
        %2189 = vmatmul.mubr.bf16.gmra.mrb[0].mxu0 %v1243
        %v2190 = vpop.f32.mrb[0].mxu0
        %v2191 = vadd.f32 %v2070, %v2190
        %v2192 = vpop.f32.mrb[0].mxu0
        %v2193 = vpop.f32.mrb[0].mxu0
        %v2194 = vadd.f32 %v2073, %v2193
        %v2195 = vpop.f32.mrb[0].mxu0
        %2196 = vmatprep.mubr.bf16.mxu0 %v1253
        %2197 = vmatmul.mubr.bf16.gmra.mrb[0].mxu0 %v1252
        %v2198 = vpop.f32.mrb[0].mxu0
        %v2199 = vadd.f32 %v2078, %v2198
        %v2200 = vpop.f32.mrb[0].mxu0
        %v2201 = vpop.f32.mrb[0].mxu0
        %v2202 = vadd.f32 %v2081, %v2201
        %v2203 = vpop.f32.mrb[0].mxu0
        %2204 = vmatprep.mubr.bf16.mxu0 %v1262
        %2205 = vmatmul.mubr.bf16.gmra.mrb[0].mxu0 %v1261
        %v2206 = vpop.f32.mrb[0].mxu0
        %v2207 = vadd.f32 %v2086, %v2206
        %v2208 = vpop.f32.mrb[0].mxu0
        %v2209 = vpop.f32.mrb[0].mxu0
        %v2210 = vadd.f32 %v2089, %v2209
        %v2211 = vpop.f32.mrb[0].mxu0
        %2212 = vmatprep.mubr.bf16.mxu0 %v1271
        %2213 = vmatmul.mubr.bf16.gmra.mrb[0].mxu0 %v1270
        %v2214 = vpop.f32.mrb[0].mxu0
        %v2215 = vadd.f32 %v2094, %v2214
        %v2216 = vpop.f32.mrb[0].mxu0
        %v2217 = vpop.f32.mrb[0].mxu0
        %v2218 = vadd.f32 %v2097, %v2217
        %v2219 = vpop.f32.mrb[0].mxu0
        %2220 = vdwg.mxu0
        %2221 = vmatprep.subr.bf16.mxu0 0
        %2222 = vmatpush1.bf16.msra.mxu0 %v1762
        %2223 = vmatprep.subr.bf16.mxu0 0
        %2224 = vmatpush1.bf16.msra.mxu0 %v1763
        %2225 = vmatprep.subr.bf16.mxu0 0
        %2226 = vmatpush1.bf16.msra.mxu0 %v1764
        %2227 = vmatprep.subr.bf16.mxu0 0
        %2228 = vmatpush1.bf16.msra.mxu0 %v1765
        %2229 = vmatprep.subr.bf16.mxu0 0
        %2230 = vmatpush1.bf16.msra.mxu0 %v1766
        %2231 = vmatprep.subr.bf16.mxu0 0
        %2232 = vmatpush1.bf16.msra.mxu0 %v1767
        %2233 = vmatprep.subr.bf16.mxu0 0
        %2234 = vmatpush1.bf16.msra.mxu0 %v1768
        %2235 = vmatprep.subr.bf16.mxu0 0
        %2236 = vmatpush1.bf16.msra.mxu0 %v1769
        %2237 = vmatprep.subr.bf16.mxu0 0
        %2238 = vmatpush1.bf16.msra.mxu0 %v1770
        %2239 = vmatprep.subr.bf16.mxu0 0
        %2240 = vmatpush1.bf16.msra.mxu0 %v1771
        %2241 = vmatprep.subr.bf16.mxu0 0
        %2242 = vmatpush1.bf16.msra.mxu0 %v1772
        %2243 = vmatprep.subr.bf16.mxu0 0
        %2244 = vmatpush1.bf16.msra.mxu0 %v1773
        %2245 = vmatprep.subr.bf16.mxu0 0
        %2246 = vmatpush1.bf16.msra.mxu0 %v1774
        %2247 = vmatprep.subr.bf16.mxu0 0
        %2248 = vmatpush1.bf16.msra.mxu0 %v1775
        %2249 = vmatprep.subr.bf16.mxu0 0
        %2250 = vmatpush1.bf16.msra.mxu0 %v1776
        %2251 = vmatprep.subr.bf16.mxu0 0
        %2252 = vmatpush1.bf16.msra.mxu0 %v1777
        %2253 = vmatprep.mubr.bf16.mxu0 %v1183
        %2254 = vmatmul.mubr.bf16.gmra.mrb[0].mxu0 %v1182
        %v2255 = vpop.f32.mrb[0].mxu0
        %v2256 = vadd.f32 %v2135, %v2255
        %v2257 = vpop.f32.mrb[0].mxu0
        %v2258 = vpop.f32.mrb[0].mxu0
        %v2259 = vadd.f32 %v2138, %v2258
        %v2260 = vpop.f32.mrb[0].mxu0
        %2261 = vmatprep.mubr.bf16.mxu0 %v1192
        %2262 = vmatmul.mubr.bf16.gmra.mrb[0].mxu0 %v1191
        %v2263 = vpop.f32.mrb[0].mxu0
        %v2264 = vadd.f32 %v2143, %v2263
        %v2265 = vpop.f32.mrb[0].mxu0
        %v2266 = vpop.f32.mrb[0].mxu0
        %v2267 = vadd.f32 %v2146, %v2266
        %v2268 = vpop.f32.mrb[0].mxu0
        %2269 = vmatprep.mubr.bf16.mxu0 %v1201
        %2270 = vmatmul.mubr.bf16.gmra.mrb[0].mxu0 %v1200
        %v2271 = vpop.f32.mrb[0].mxu0
        %v2272 = vadd.f32 %v2151, %v2271
        %v2273 = vpop.f32.mrb[0].mxu0
        %v2274 = vpop.f32.mrb[0].mxu0
        %v2275 = vadd.f32 %v2154, %v2274
        %v2276 = vpop.f32.mrb[0].mxu0
        %2277 = vmatprep.mubr.bf16.mxu0 %v1210
        %2278 = vmatmul.mubr.bf16.gmra.mrb[0].mxu0 %v1209
        %v2279 = vpop.f32.mrb[0].mxu0
        %v2280 = vadd.f32 %v2159, %v2279
        %v2281 = vpop.f32.mrb[0].mxu0
        %v2282 = vpop.f32.mrb[0].mxu0
        %v2283 = vadd.f32 %v2162, %v2282
        %v2284 = vpop.f32.mrb[0].mxu0
        %2285 = vmatprep.mubr.bf16.mxu0 %v1219
        %2286 = vmatmul.mubr.bf16.gmra.mrb[0].mxu0 %v1218
        %v2287 = vpop.f32.mrb[0].mxu0
        %v2288 = vadd.f32 %v2167, %v2287
        %v2289 = vpop.f32.mrb[0].mxu0
        %v2290 = vpop.f32.mrb[0].mxu0
        %v2291 = vadd.f32 %v2170, %v2290
        %v2292 = vpop.f32.mrb[0].mxu0
        %2293 = vmatprep.mubr.bf16.mxu0 %v1228
        %2294 = vmatmul.mubr.bf16.gmra.mrb[0].mxu0 %v1227
        %v2295 = vpop.f32.mrb[0].mxu0
        %v2296 = vadd.f32 %v2175, %v2295
        %v2297 = vpop.f32.mrb[0].mxu0
        %v2298 = vpop.f32.mrb[0].mxu0
        %v2299 = vadd.f32 %v2178, %v2298
        %v2300 = vpop.f32.mrb[0].mxu0
        %2301 = vmatprep.mubr.bf16.mxu0 %v1237
        %2302 = vmatmul.mubr.bf16.gmra.mrb[0].mxu0 %v1236
        %v2303 = vpop.f32.mrb[0].mxu0
        %v2304 = vadd.f32 %v2183, %v2303
        %v2305 = vpop.f32.mrb[0].mxu0
        %v2306 = vpop.f32.mrb[0].mxu0
        %v2307 = vadd.f32 %v2186, %v2306
        %v2308 = vpop.f32.mrb[0].mxu0
        %2309 = vmatprep.mubr.bf16.mxu0 %v1246
        %2310 = vmatmul.mubr.bf16.gmra.mrb[0].mxu0 %v1245
        %v2311 = vpop.f32.mrb[0].mxu0
        %v2312 = vadd.f32 %v2191, %v2311
        %v2313 = vpop.f32.mrb[0].mxu0
        %v2314 = vpop.f32.mrb[0].mxu0
        %v2315 = vadd.f32 %v2194, %v2314
        %v2316 = vpop.f32.mrb[0].mxu0
        %2317 = vmatprep.mubr.bf16.mxu0 %v1255
        %2318 = vmatmul.mubr.bf16.gmra.mrb[0].mxu0 %v1254
        %v2319 = vpop.f32.mrb[0].mxu0
        %v2320 = vadd.f32 %v2199, %v2319
        %v2321 = vpop.f32.mrb[0].mxu0
        %v2322 = vpop.f32.mrb[0].mxu0
        %v2323 = vadd.f32 %v2202, %v2322
        %v2324 = vpop.f32.mrb[0].mxu0
        %2325 = vmatprep.mubr.bf16.mxu0 %v1264
        %2326 = vmatmul.mubr.bf16.gmra.mrb[0].mxu0 %v1263
        %v2327 = vpop.f32.mrb[0].mxu0
        %v2328 = vadd.f32 %v2207, %v2327
        %v2329 = vpop.f32.mrb[0].mxu0
        %v2330 = vpop.f32.mrb[0].mxu0
        %v2331 = vadd.f32 %v2210, %v2330
        %v2332 = vpop.f32.mrb[0].mxu0
        %2333 = vmatprep.mubr.bf16.mxu0 %v1273
        %2334 = vmatmul.mubr.bf16.gmra.mrb[0].mxu0 %v1272
        %v2335 = vpop.f32.mrb[0].mxu0
        %v2336 = vadd.f32 %v2215, %v2335
        %v2337 = vpop.f32.mrb[0].mxu0
        %v2338 = vpop.f32.mrb[0].mxu0
        %v2339 = vadd.f32 %v2218, %v2338
        %v2340 = vpop.f32.mrb[0].mxu0
        %2341 = vdwg.mxu0
        %2342 = vmatprep.subr.bf16.mxu0 0
        %2343 = vmatpush1.bf16.msra.mxu0 %v1778
        %2344 = vmatprep.subr.bf16.mxu0 0
        %2345 = vmatpush1.bf16.msra.mxu0 %v1779
        %2346 = vmatprep.subr.bf16.mxu0 0
        %2347 = vmatpush1.bf16.msra.mxu0 %v1780
        %2348 = vmatprep.subr.bf16.mxu0 0
        %2349 = vmatpush1.bf16.msra.mxu0 %v1781
        %2350 = vmatprep.subr.bf16.mxu0 0
        %2351 = vmatpush1.bf16.msra.mxu0 %v1782
        %2352 = vmatprep.subr.bf16.mxu0 0
        %2353 = vmatpush1.bf16.msra.mxu0 %v1783
        %2354 = vmatprep.subr.bf16.mxu0 0
        %2355 = vmatpush1.bf16.msra.mxu0 %v1784
        %2356 = vmatprep.subr.bf16.mxu0 0
        %2357 = vmatpush1.bf16.msra.mxu0 %v1785
        %2358 = vmatprep.subr.bf16.mxu0 0
        %2359 = vmatpush1.bf16.msra.mxu0 0
        %2360 = vmatprep.subr.bf16.mxu0 0
        %2361 = vmatpush1.bf16.msra.mxu0 0
        %2362 = vmatprep.subr.bf16.mxu0 0
        %2363 = vmatpush1.bf16.msra.mxu0 0
        %2364 = vmatprep.subr.bf16.mxu0 0
        %2365 = vmatpush1.bf16.msra.mxu0 0
        %2366 = vmatprep.subr.bf16.mxu0 0
        %2367 = vmatpush1.bf16.msra.mxu0 0
        %2368 = vmatprep.subr.bf16.mxu0 0
        %2369 = vmatpush1.bf16.msra.mxu0 0
        %2370 = vmatprep.subr.bf16.mxu0 0
        %2371 = vmatpush1.bf16.msra.mxu0 0
        %2372 = vmatprep.subr.bf16.mxu0 0
        %2373 = vmatpush1.bf16.msra.mxu0 0
        %2374 = vmatprep.mubr.bf16.mxu0 0
        %2375 = vmatmul.mubr.bf16.gmra.mrb[0].mxu0 %v1184
        %v2376 = vpop.f32.mrb[0].mxu0
        %v2377 = vadd.f32 %v2256, %v2376
        %v2378 = vpop.f32.mrb[0].mxu0
        %v2379 = vpop.f32.mrb[0].mxu0
        %v2380 = vadd.f32 %v2259, %v2379
        %v2381 = vpop.f32.mrb[0].mxu0
        %2382 = vmatprep.mubr.bf16.mxu0 0
        %2383 = vmatmul.mubr.bf16.gmra.mrb[0].mxu0 %v1193
        %v2384 = vpop.f32.mrb[0].mxu0
        %v2385 = vadd.f32 %v2264, %v2384
        %v2386 = vpop.f32.mrb[0].mxu0
        %v2387 = vpop.f32.mrb[0].mxu0
        %v2388 = vadd.f32 %v2267, %v2387
        %v2389 = vpop.f32.mrb[0].mxu0
        %2390 = vmatprep.mubr.bf16.mxu0 0
        %2391 = vmatmul.mubr.bf16.gmra.mrb[0].mxu0 %v1202
        %v2392 = vpop.f32.mrb[0].mxu0
        %v2393 = vadd.f32 %v2272, %v2392
        %v2394 = vpop.f32.mrb[0].mxu0
        %v2395 = vpop.f32.mrb[0].mxu0
        %v2396 = vadd.f32 %v2275, %v2395
        %v2397 = vpop.f32.mrb[0].mxu0
        %2398 = vmatprep.mubr.bf16.mxu0 0
        %2399 = vmatmul.mubr.bf16.gmra.mrb[0].mxu0 %v1211
        %v2400 = vpop.f32.mrb[0].mxu0
        %v2401 = vadd.f32 %v2280, %v2400
        %v2402 = vpop.f32.mrb[0].mxu0
        %v2403 = vpop.f32.mrb[0].mxu0
        %v2404 = vadd.f32 %v2283, %v2403
        %v2405 = vpop.f32.mrb[0].mxu0
        %2406 = vmatprep.mubr.bf16.mxu0 0
        %2407 = vmatmul.mubr.bf16.gmra.mrb[0].mxu0 %v1220
        %v2408 = vpop.f32.mrb[0].mxu0
        %v2409 = vadd.f32 %v2288, %v2408
        %v2410 = vpop.f32.mrb[0].mxu0
        %v2411 = vpop.f32.mrb[0].mxu0
        %v2412 = vadd.f32 %v2291, %v2411
        %v2413 = vpop.f32.mrb[0].mxu0
        %2414 = vmatprep.mubr.bf16.mxu0 0
        %2415 = vmatmul.mubr.bf16.gmra.mrb[0].mxu0 %v1229
        %v2416 = vpop.f32.mrb[0].mxu0
        %v2417 = vadd.f32 %v2296, %v2416
        %v2418 = vpop.f32.mrb[0].mxu0
        %v2419 = vpop.f32.mrb[0].mxu0
        %v2420 = vadd.f32 %v2299, %v2419
        %v2421 = vpop.f32.mrb[0].mxu0
        %2422 = vmatprep.mubr.bf16.mxu0 0
        %2423 = vmatmul.mubr.bf16.gmra.mrb[0].mxu0 %v1238
        %v2424 = vpop.f32.mrb[0].mxu0
        %v2425 = vadd.f32 %v2304, %v2424
        %v2426 = vpop.f32.mrb[0].mxu0
        %v2427 = vpop.f32.mrb[0].mxu0
        %v2428 = vadd.f32 %v2307, %v2427
        %v2429 = vpop.f32.mrb[0].mxu0
        %2430 = vmatprep.mubr.bf16.mxu0 0
        %2431 = vmatmul.mubr.bf16.gmra.mrb[0].mxu0 %v1247
        %v2432 = vpop.f32.mrb[0].mxu0
        %v2433 = vadd.f32 %v2312, %v2432
        %v2434 = vpop.f32.mrb[0].mxu0
        %v2435 = vpop.f32.mrb[0].mxu0
        %v2436 = vadd.f32 %v2315, %v2435
        %v2437 = vpop.f32.mrb[0].mxu0
        %2438 = vmatprep.mubr.bf16.mxu0 0
        %2439 = vmatmul.mubr.bf16.gmra.mrb[0].mxu0 %v1256
        %v2440 = vpop.f32.mrb[0].mxu0
        %v2441 = vadd.f32 %v2320, %v2440
        %v2442 = vpop.f32.mrb[0].mxu0
        %v2443 = vpop.f32.mrb[0].mxu0
        %v2444 = vadd.f32 %v2323, %v2443
        %v2445 = vpop.f32.mrb[0].mxu0
        %2446 = vmatprep.mubr.bf16.mxu0 0
        %2447 = vmatmul.mubr.bf16.gmra.mrb[0].mxu0 %v1265
        %v2448 = vpop.f32.mrb[0].mxu0
        %v2449 = vadd.f32 %v2328, %v2448
        %v2450 = vpop.f32.mrb[0].mxu0
        %v2451 = vpop.f32.mrb[0].mxu0
        %v2452 = vadd.f32 %v2331, %v2451
        %v2453 = vpop.f32.mrb[0].mxu0
        %2454 = vmatprep.mubr.bf16.mxu0 0
        %2455 = vmatmul.mubr.bf16.gmra.mrb[0].mxu0 %v1274
        %v2456 = vpop.f32.mrb[0].mxu0
        %v2457 = vadd.f32 %v2336, %v2456
        %v2458 = vpop.f32.mrb[0].mxu0
        %v2459 = vpop.f32.mrb[0].mxu0
        %v2460 = vadd.f32 %v2339, %v2459
        %v2461 = vpop.f32.mrb[0].mxu0
        %2462 = vdwg.mxu0
        %vm2463 = vcmask 261120
        %2464 = vst.msk [vmem:[#allocation4] sm:$0xff] %vm2463, %v2377
        %2465 = vst.msk [vmem:[#allocation4 + $0x8] sm:$0xff] %vm2463, %v2380
        %2466 = vst.msk [vmem:[#allocation4 + $0x10] sm:$0xff] %vm2463, %v2385
        %2467 = vst.msk [vmem:[#allocation4 + $0x18] sm:$0xff] %vm2463, %v2388
        %2468 = vst.msk [vmem:[#allocation4 + $0x20] sm:$0xff] %vm2463, %v2393
        %2469 = vst.msk [vmem:[#allocation4 + $0x28] sm:$0xff] %vm2463, %v2396
        %2470 = vst.msk [vmem:[#allocation4 + $0x30] sm:$0xff] %vm2463, %v2401
        %2471 = vst.msk [vmem:[#allocation4 + $0x38] sm:$0xff] %vm2463, %v2404
        %2472 = vst.msk [vmem:[#allocation4 + $0x40] sm:$0xff] %vm2463, %v2409
        %2473 = vst.msk [vmem:[#allocation4 + $0x48] sm:$0xff] %vm2463, %v2412
        %2474 = vst.msk [vmem:[#allocation4 + $0x50] sm:$0xff] %vm2463, %v2417
        %2475 = vst.msk [vmem:[#allocation4 + $0x58] sm:$0xff] %vm2463, %v2420
        %2476 = vst.msk [vmem:[#allocation4 + $0x60] sm:$0xff] %vm2463, %v2425
        %2477 = vst.msk [vmem:[#allocation4 + $0x68] sm:$0xff] %vm2463, %v2428
        %2478 = vst.msk [vmem:[#allocation4 + $0x70] sm:$0xff] %vm2463, %v2433
        %2479 = vst.msk [vmem:[#allocation4 + $0x78] sm:$0xff] %vm2463, %v2436
        %2480 = vst.msk [vmem:[#allocation4 + $0x80] sm:$0xff] %vm2463, %v2441
        %2481 = vst.msk [vmem:[#allocation4 + $0x88] sm:$0xff] %vm2463, %v2444
        %2482 = vst.msk [vmem:[#allocation4 + $0x90] sm:$0xff] %vm2463, %v2449
        %2483 = vst.msk [vmem:[#allocation4 + $0x98] sm:$0xff] %vm2463, %v2452
        %2484 = vst.msk [vmem:[#allocation4 + $0xa0] sm:$0xff] %vm2463, %v2457
        %2485 = vst.msk [vmem:[#allocation4 + $0xa8] sm:$0xff] %vm2463, %v2460
        %v2486 = vld [vmem:[#allocation4] sm:$0xff]
        %v2487 = vld [vmem:[#allocation4 + $0x8] sm:$0xff]
        %v2488 = vld [vmem:[#allocation4 + $0x10] sm:$0xff]
        %v2489 = vld [vmem:[#allocation4 + $0x18] sm:$0xff]
        %v2490 = vld [vmem:[#allocation4 + $0x20] sm:$0xff]
        %v2491 = vpack.c.bf16 %v2487, %v2486
        %v2492 = vpack.c.bf16 %v2489, %v2488
        %v2493 = vpack.c.bf16 %v2490, %v2490
        %v2497 = vunpack.c.l.b16 %v2491
        %v2498 = vunpack.c.h.b16 %v2491
        %v2499 = vunpack.c.l.b16 %v2492
        %v2500 = vunpack.c.h.b16 %v2492
        %v2501 = vunpack.c.l.b16 %v2493
        %v2502 = vpack.c.b16 %v2497, %v2497
        %v2503 = vpack.c.b16 %v2498, %v2498
        %v2504 = vpack.c.b16 %v2499, %v2499
        %v2505 = vpack.c.b16 %v2500, %v2500
        %v2506 = vpack.c.b16 %v2501, %v2501
        %vm2512 = vcmask 257024
        %2513 = vst.msk [vmem:[#allocation5] sm:$0xf] %vm2512, %v2502
        %2514 = vst.msk [vmem:[#allocation5 + $0x1c] sm:$0xf] %vm2512, %v2503
        %2515 = vst.msk [vmem:[#allocation5 + $0x38] sm:$0xf] %vm2512, %v2504
        %2516 = vst.msk [vmem:[#allocation5 + $0x54] sm:$0xf] %vm2512, %v2505
        %2517 = vst.msk [vmem:[#allocation5 + $0x70] sm:$0xf] %vm2512, %v2506
        %v2518 = vld [vmem:[#allocation4 + $0x2] sm:$0xff]
        %v2519 = vld [vmem:[#allocation4 + $0xa] sm:$0xff]
        %v2520 = vld [vmem:[#allocation4 + $0x12] sm:$0xff]
        %v2521 = vld [vmem:[#allocation4 + $0x1a] sm:$0xff]
        %v2522 = vld [vmem:[#allocation4 + $0x22] sm:$0xff]
        %v2523 = vpack.c.bf16 %v2519, %v2518
        %v2524 = vpack.c.bf16 %v2521, %v2520
        %v2525 = vpack.c.bf16 %v2522, %v2522
        %v2529 = vunpack.c.l.b16 %v2523
        %v2530 = vunpack.c.h.b16 %v2523
        %v2531 = vunpack.c.l.b16 %v2524
        %v2532 = vunpack.c.h.b16 %v2524
        %v2533 = vunpack.c.l.b16 %v2525
        %v2534 = vpack.c.b16 %v2529, %v2529
        %v2535 = vpack.c.b16 %v2530, %v2530
        %v2536 = vpack.c.b16 %v2531, %v2531
        %v2537 = vpack.c.b16 %v2532, %v2532
        %v2538 = vpack.c.b16 %v2533, %v2533
        %2539 = vrot.lane.b32.xlu0 %v2534, 32
        %v2540 = vpop.permute.xlu0 %2539
        %2541 = vrot.lane.b32.xlu0 %v2535, 32
        %v2542 = vpop.permute.xlu0 %2541
        %2543 = vrot.lane.b32.xlu0 %v2536, 32
        %v2544 = vpop.permute.xlu0 %2543
        %2545 = vrot.lane.b32.xlu0 %v2537, 32
        %v2546 = vpop.permute.xlu0 %2545
        %2547 = vrot.lane.b32.xlu0 %v2538, 32
        %v2548 = vpop.permute.xlu0 %2547
        %vm2554 = vcmask 519424
        %2555 = vst.msk [vmem:[#allocation5] sm:$0xf] %vm2554, %v2540
        %2556 = vst.msk [vmem:[#allocation5 + $0x1c] sm:$0xf] %vm2554, %v2542
        %2557 = vst.msk [vmem:[#allocation5 + $0x38] sm:$0xf] %vm2554, %v2544
        %2558 = vst.msk [vmem:[#allocation5 + $0x54] sm:$0xf] %vm2554, %v2546
        %2559 = vst.msk [vmem:[#allocation5 + $0x70] sm:$0xf] %vm2554, %v2548
        %v2560 = vld [vmem:[#allocation4 + $0x4] sm:$0xff]
        %v2561 = vld [vmem:[#allocation4 + $0xc] sm:$0xff]
        %v2562 = vld [vmem:[#allocation4 + $0x14] sm:$0xff]
        %v2563 = vld [vmem:[#allocation4 + $0x1c] sm:$0xff]
        %v2564 = vld [vmem:[#allocation4 + $0x24] sm:$0xff]
        %v2565 = vpack.c.bf16 %v2561, %v2560
        %v2566 = vpack.c.bf16 %v2563, %v2562
        %v2567 = vpack.c.bf16 %v2564, %v2564
        %v2571 = vunpack.c.l.b16 %v2565
        %v2572 = vunpack.c.h.b16 %v2565
        %v2573 = vunpack.c.l.b16 %v2566
        %v2574 = vunpack.c.h.b16 %v2566
        %v2575 = vunpack.c.l.b16 %v2567
        %v2576 = vpack.c.b16 %v2571, %v2571
        %v2577 = vpack.c.b16 %v2572, %v2572
        %v2578 = vpack.c.b16 %v2573, %v2573
        %v2579 = vpack.c.b16 %v2574, %v2574
        %v2580 = vpack.c.b16 %v2575, %v2575
        %2581 = vrot.lane.b32.xlu0 %v2576, 64
        %v2582 = vpop.permute.xlu0 %2581
        %2583 = vrot.lane.b32.xlu0 %v2577, 64
        %v2584 = vpop.permute.xlu0 %2583
        %2585 = vrot.lane.b32.xlu0 %v2578, 64
        %v2586 = vpop.permute.xlu0 %2585
        %2587 = vrot.lane.b32.xlu0 %v2579, 64
        %v2588 = vpop.permute.xlu0 %2587
        %2589 = vrot.lane.b32.xlu0 %v2580, 64
        %v2590 = vpop.permute.xlu0 %2589
        %vm2596 = vcmask 781824
        %2597 = vst.msk [vmem:[#allocation5] sm:$0xf] %vm2596, %v2582
        %2598 = vst.msk [vmem:[#allocation5 + $0x1c] sm:$0xf] %vm2596, %v2584
        %2599 = vst.msk [vmem:[#allocation5 + $0x38] sm:$0xf] %vm2596, %v2586
        %2600 = vst.msk [vmem:[#allocation5 + $0x54] sm:$0xf] %vm2596, %v2588
        %2601 = vst.msk [vmem:[#allocation5 + $0x70] sm:$0xf] %vm2596, %v2590
        %v2602 = vld [vmem:[#allocation4 + $0x6] sm:$0xff]
        %v2603 = vld [vmem:[#allocation4 + $0xe] sm:$0xff]
        %v2604 = vld [vmem:[#allocation4 + $0x16] sm:$0xff]
        %v2605 = vld [vmem:[#allocation4 + $0x1e] sm:$0xff]
        %v2606 = vld [vmem:[#allocation4 + $0x26] sm:$0xff]
        %v2607 = vpack.c.bf16 %v2603, %v2602
        %v2608 = vpack.c.bf16 %v2605, %v2604
        %v2609 = vpack.c.bf16 %v2606, %v2606
        %v2613 = vunpack.c.l.b16 %v2607
        %v2614 = vunpack.c.h.b16 %v2607
        %v2615 = vunpack.c.l.b16 %v2608
        %v2616 = vunpack.c.h.b16 %v2608
        %v2617 = vunpack.c.l.b16 %v2609
        %v2618 = vpack.c.b16 %v2613, %v2613
        %v2619 = vpack.c.b16 %v2614, %v2614
        %v2620 = vpack.c.b16 %v2615, %v2615
        %v2621 = vpack.c.b16 %v2616, %v2616
        %v2622 = vpack.c.b16 %v2617, %v2617
        %2623 = vrot.lane.b32.xlu0 %v2618, 96
        %v2624 = vpop.permute.xlu0 %2623
        %2625 = vrot.lane.b32.xlu0 %v2619, 96
        %v2626 = vpop.permute.xlu0 %2625
        %2627 = vrot.lane.b32.xlu0 %v2620, 96
        %v2628 = vpop.permute.xlu0 %2627
        %2629 = vrot.lane.b32.xlu0 %v2621, 96
        %v2630 = vpop.permute.xlu0 %2629
        %2631 = vrot.lane.b32.xlu0 %v2622, 96
        %v2632 = vpop.permute.xlu0 %2631
        %vm2638 = vcmask 1044224
        %2639 = vst.msk [vmem:[#allocation5] sm:$0xf] %vm2638, %v2624
        %2640 = vst.msk [vmem:[#allocation5 + $0x1c] sm:$0xf] %vm2638, %v2626
        %2641 = vst.msk [vmem:[#allocation5 + $0x38] sm:$0xf] %vm2638, %v2628
        %2642 = vst.msk [vmem:[#allocation5 + $0x54] sm:$0xf] %vm2638, %v2630
        %2643 = vst.msk [vmem:[#allocation5 + $0x70] sm:$0xf] %vm2638, %v2632
        %v2644 = vld [vmem:[#allocation4 + $0x8] sm:$0xff]
        %v2645 = vld [vmem:[#allocation4 + $0x10] sm:$0xff]
        %v2646 = vld [vmem:[#allocation4 + $0x18] sm:$0xff]
        %v2647 = vld [vmem:[#allocation4 + $0x20] sm:$0xff]
        %v2648 = vld [vmem:[#allocation4 + $0x28] sm:$0xff]
        %v2649 = vpack.c.bf16 %v2645, %v2644
        %v2650 = vpack.c.bf16 %v2647, %v2646
        %v2651 = vpack.c.bf16 %v2648, %v2648
        %v2655 = vunpack.c.l.b16 %v2649
        %v2656 = vunpack.c.h.b16 %v2649
        %v2657 = vunpack.c.l.b16 %v2650
        %v2658 = vunpack.c.h.b16 %v2650
        %v2659 = vunpack.c.l.b16 %v2651
        %v2660 = vpack.c.b16 %v2655, %v2655
        %v2661 = vpack.c.b16 %v2656, %v2656
        %v2662 = vpack.c.b16 %v2657, %v2657
        %v2663 = vpack.c.b16 %v2658, %v2658
        %v2664 = vpack.c.b16 %v2659, %v2659
        %2670 = vst.msk [vmem:[#allocation5 + $0x4] sm:$0xf] %vm2512, %v2660
        %2671 = vst.msk [vmem:[#allocation5 + $0x20] sm:$0xf] %vm2512, %v2661
        %2672 = vst.msk [vmem:[#allocation5 + $0x3c] sm:$0xf] %vm2512, %v2662
        %2673 = vst.msk [vmem:[#allocation5 + $0x58] sm:$0xf] %vm2512, %v2663
        %2674 = vst.msk [vmem:[#allocation5 + $0x74] sm:$0xf] %vm2512, %v2664
        %v2675 = vld [vmem:[#allocation4 + $0x20] sm:$0xff]
        %v2676 = vld [vmem:[#allocation4 + $0x28] sm:$0xff]
        %v2677 = vld [vmem:[#allocation4 + $0x30] sm:$0xff]
        %v2678 = vld [vmem:[#allocation4 + $0x38] sm:$0xff]
        %v2679 = vld [vmem:[#allocation4 + $0x40] sm:$0xff]
        %v2680 = vpack.c.bf16 %v2676, %v2675
        %v2681 = vpack.c.bf16 %v2678, %v2677
        %v2682 = vpack.c.bf16 %v2679, %v2679
        %v2686 = vunpack.c.l.b16 %v2680
        %v2687 = vunpack.c.h.b16 %v2680
        %v2688 = vunpack.c.l.b16 %v2681
        %v2689 = vunpack.c.h.b16 %v2681
        %v2690 = vunpack.c.l.b16 %v2682
        %v2691 = vpack.c.b16 %v2686, %v2686
        %v2692 = vpack.c.b16 %v2687, %v2687
        %v2693 = vpack.c.b16 %v2688, %v2688
        %v2694 = vpack.c.b16 %v2689, %v2689
        %v2695 = vpack.c.b16 %v2690, %v2690
        %2696 = vrot.lane.b32.xlu0 %v2691, 32
        %v2697 = vpop.permute.xlu0 %2696
        %2698 = vrot.lane.b32.xlu0 %v2692, 32
        %v2699 = vpop.permute.xlu0 %2698
        %2700 = vrot.lane.b32.xlu0 %v2693, 32
        %v2701 = vpop.permute.xlu0 %2700
        %2702 = vrot.lane.b32.xlu0 %v2694, 32
        %v2703 = vpop.permute.xlu0 %2702
        %2704 = vrot.lane.b32.xlu0 %v2695, 32
        %v2705 = vpop.permute.xlu0 %2704
        %2711 = vst.msk [vmem:[#allocation5 + $0x4] sm:$0xf] %vm2554, %v2697
        %2712 = vst.msk [vmem:[#allocation5 + $0x20] sm:$0xf] %vm2554, %v2699
        %2713 = vst.msk [vmem:[#allocation5 + $0x3c] sm:$0xf] %vm2554, %v2701
        %2714 = vst.msk [vmem:[#allocation5 + $0x58] sm:$0xf] %vm2554, %v2703
        %2715 = vst.msk [vmem:[#allocation5 + $0x74] sm:$0xf] %vm2554, %v2705
        %v2716 = vld [vmem:[#allocation4 + $0x22] sm:$0xff]
        %v2717 = vld [vmem:[#allocation4 + $0x2a] sm:$0xff]
        %v2718 = vld [vmem:[#allocation4 + $0x32] sm:$0xff]
        %v2719 = vld [vmem:[#allocation4 + $0x3a] sm:$0xff]
        %v2720 = vld [vmem:[#allocation4 + $0x42] sm:$0xff]
        %v2721 = vpack.c.bf16 %v2717, %v2716
        %v2722 = vpack.c.bf16 %v2719, %v2718
        %v2723 = vpack.c.bf16 %v2720, %v2720
        %v2727 = vunpack.c.l.b16 %v2721
        %v2728 = vunpack.c.h.b16 %v2721
        %v2729 = vunpack.c.l.b16 %v2722
        %v2730 = vunpack.c.h.b16 %v2722
        %v2731 = vunpack.c.l.b16 %v2723
        %v2732 = vpack.c.b16 %v2727, %v2727
        %v2733 = vpack.c.b16 %v2728, %v2728
        %v2734 = vpack.c.b16 %v2729, %v2729
        %v2735 = vpack.c.b16 %v2730, %v2730
        %v2736 = vpack.c.b16 %v2731, %v2731
        %2737 = vrot.lane.b32.xlu0 %v2732, 64
        %v2738 = vpop.permute.xlu0 %2737
        %2739 = vrot.lane.b32.xlu0 %v2733, 64
        %v2740 = vpop.permute.xlu0 %2739
        %2741 = vrot.lane.b32.xlu0 %v2734, 64
        %v2742 = vpop.permute.xlu0 %2741
        %2743 = vrot.lane.b32.xlu0 %v2735, 64
        %v2744 = vpop.permute.xlu0 %2743
        %2745 = vrot.lane.b32.xlu0 %v2736, 64
        %v2746 = vpop.permute.xlu0 %2745
        %2752 = vst.msk [vmem:[#allocation5 + $0x4] sm:$0xf] %vm2596, %v2738
        %2753 = vst.msk [vmem:[#allocation5 + $0x20] sm:$0xf] %vm2596, %v2740
        %2754 = vst.msk [vmem:[#allocation5 + $0x3c] sm:$0xf] %vm2596, %v2742
        %2755 = vst.msk [vmem:[#allocation5 + $0x58] sm:$0xf] %vm2596, %v2744
        %2756 = vst.msk [vmem:[#allocation5 + $0x74] sm:$0xf] %vm2596, %v2746
        %v2757 = vld [vmem:[#allocation4 + $0x24] sm:$0xff]
        %v2758 = vld [vmem:[#allocation4 + $0x2c] sm:$0xff]
        %v2759 = vld [vmem:[#allocation4 + $0x34] sm:$0xff]
        %v2760 = vld [vmem:[#allocation4 + $0x3c] sm:$0xff]
        %v2761 = vld [vmem:[#allocation4 + $0x44] sm:$0xff]
        %v2762 = vpack.c.bf16 %v2758, %v2757
        %v2763 = vpack.c.bf16 %v2760, %v2759
        %v2764 = vpack.c.bf16 %v2761, %v2761
        %v2768 = vunpack.c.l.b16 %v2762
        %v2769 = vunpack.c.h.b16 %v2762
        %v2770 = vunpack.c.l.b16 %v2763
        %v2771 = vunpack.c.h.b16 %v2763
        %v2772 = vunpack.c.l.b16 %v2764
        %v2773 = vpack.c.b16 %v2768, %v2768
        %v2774 = vpack.c.b16 %v2769, %v2769
        %v2775 = vpack.c.b16 %v2770, %v2770
        %v2776 = vpack.c.b16 %v2771, %v2771
        %v2777 = vpack.c.b16 %v2772, %v2772
        %2778 = vrot.lane.b32.xlu0 %v2773, 96
        %v2779 = vpop.permute.xlu0 %2778
        %2780 = vrot.lane.b32.xlu0 %v2774, 96
        %v2781 = vpop.permute.xlu0 %2780
        %2782 = vrot.lane.b32.xlu0 %v2775, 96
        %v2783 = vpop.permute.xlu0 %2782
        %2784 = vrot.lane.b32.xlu0 %v2776, 96
        %v2785 = vpop.permute.xlu0 %2784
        %2786 = vrot.lane.b32.xlu0 %v2777, 96
        %v2787 = vpop.permute.xlu0 %2786
        %2793 = vst.msk [vmem:[#allocation5 + $0x4] sm:$0xf] %vm2638, %v2779
        %2794 = vst.msk [vmem:[#allocation5 + $0x20] sm:$0xf] %vm2638, %v2781
        %2795 = vst.msk [vmem:[#allocation5 + $0x3c] sm:$0xf] %vm2638, %v2783
        %2796 = vst.msk [vmem:[#allocation5 + $0x58] sm:$0xf] %vm2638, %v2785
        %2797 = vst.msk [vmem:[#allocation5 + $0x74] sm:$0xf] %vm2638, %v2787
        %v2798 = vld [vmem:[#allocation4 + $0x26] sm:$0xff]
        %v2799 = vld [vmem:[#allocation4 + $0x2e] sm:$0xff]
        %v2800 = vld [vmem:[#allocation4 + $0x36] sm:$0xff]
        %v2801 = vld [vmem:[#allocation4 + $0x3e] sm:$0xff]
        %v2802 = vld [vmem:[#allocation4 + $0x46] sm:$0xff]
        %v2803 = vpack.c.bf16 %v2799, %v2798
        %v2804 = vpack.c.bf16 %v2801, %v2800
        %v2805 = vpack.c.bf16 %v2802, %v2802
        %v2809 = vunpack.c.l.b16 %v2803
        %v2810 = vunpack.c.h.b16 %v2803
        %v2811 = vunpack.c.l.b16 %v2804
        %v2812 = vunpack.c.h.b16 %v2804
        %v2813 = vunpack.c.l.b16 %v2805
        %v2814 = vpack.c.b16 %v2809, %v2809
        %v2815 = vpack.c.b16 %v2810, %v2810
        %v2816 = vpack.c.b16 %v2811, %v2811
        %v2817 = vpack.c.b16 %v2812, %v2812
        %v2818 = vpack.c.b16 %v2813, %v2813
        %2824 = vst.msk [vmem:[#allocation5 + $0x8] sm:$0xf] %vm2512, %v2814
        %2825 = vst.msk [vmem:[#allocation5 + $0x24] sm:$0xf] %vm2512, %v2815
        %2826 = vst.msk [vmem:[#allocation5 + $0x40] sm:$0xf] %vm2512, %v2816
        %2827 = vst.msk [vmem:[#allocation5 + $0x5c] sm:$0xf] %vm2512, %v2817
        %2828 = vst.msk [vmem:[#allocation5 + $0x78] sm:$0xf] %vm2512, %v2818
        %v2829 = vld [vmem:[#allocation4 + $0x28] sm:$0xff]
        %v2830 = vld [vmem:[#allocation4 + $0x30] sm:$0xff]
        %v2831 = vld [vmem:[#allocation4 + $0x38] sm:$0xff]
        %v2832 = vld [vmem:[#allocation4 + $0x40] sm:$0xff]
        %v2833 = vld [vmem:[#allocation4 + $0x48] sm:$0xff]
        %v2834 = vpack.c.bf16 %v2830, %v2829
        %v2835 = vpack.c.bf16 %v2832, %v2831
        %v2836 = vpack.c.bf16 %v2833, %v2833
        %v2840 = vunpack.c.l.b16 %v2834
        %v2841 = vunpack.c.h.b16 %v2834
        %v2842 = vunpack.c.l.b16 %v2835
        %v2843 = vunpack.c.h.b16 %v2835
        %v2844 = vunpack.c.l.b16 %v2836
        %v2845 = vpack.c.b16 %v2840, %v2840
        %v2846 = vpack.c.b16 %v2841, %v2841
        %v2847 = vpack.c.b16 %v2842, %v2842
        %v2848 = vpack.c.b16 %v2843, %v2843
        %v2849 = vpack.c.b16 %v2844, %v2844
        %2850 = vrot.lane.b32.xlu0 %v2845, 32
        %v2851 = vpop.permute.xlu0 %2850
        %2852 = vrot.lane.b32.xlu0 %v2846, 32
        %v2853 = vpop.permute.xlu0 %2852
        %2854 = vrot.lane.b32.xlu0 %v2847, 32
        %v2855 = vpop.permute.xlu0 %2854
        %2856 = vrot.lane.b32.xlu0 %v2848, 32
        %v2857 = vpop.permute.xlu0 %2856
        %2858 = vrot.lane.b32.xlu0 %v2849, 32
        %v2859 = vpop.permute.xlu0 %2858
        %2865 = vst.msk [vmem:[#allocation5 + $0x8] sm:$0xf] %vm2554, %v2851
        %2866 = vst.msk [vmem:[#allocation5 + $0x24] sm:$0xf] %vm2554, %v2853
        %2867 = vst.msk [vmem:[#allocation5 + $0x40] sm:$0xf] %vm2554, %v2855
        %2868 = vst.msk [vmem:[#allocation5 + $0x5c] sm:$0xf] %vm2554, %v2857
        %2869 = vst.msk [vmem:[#allocation5 + $0x78] sm:$0xf] %vm2554, %v2859
        %v2870 = vld [vmem:[#allocation4 + $0x40] sm:$0xff]
        %v2871 = vld [vmem:[#allocation4 + $0x48] sm:$0xff]
        %v2872 = vld [vmem:[#allocation4 + $0x50] sm:$0xff]
        %v2873 = vld [vmem:[#allocation4 + $0x58] sm:$0xff]
        %v2874 = vld [vmem:[#allocation4 + $0x60] sm:$0xff]
        %v2875 = vpack.c.bf16 %v2871, %v2870
        %v2876 = vpack.c.bf16 %v2873, %v2872
        %v2877 = vpack.c.bf16 %v2874, %v2874
        %v2881 = vunpack.c.l.b16 %v2875
        %v2882 = vunpack.c.h.b16 %v2875
        %v2883 = vunpack.c.l.b16 %v2876
        %v2884 = vunpack.c.h.b16 %v2876
        %v2885 = vunpack.c.l.b16 %v2877
        %v2886 = vpack.c.b16 %v2881, %v2881
        %v2887 = vpack.c.b16 %v2882, %v2882
        %v2888 = vpack.c.b16 %v2883, %v2883
        %v2889 = vpack.c.b16 %v2884, %v2884
        %v2890 = vpack.c.b16 %v2885, %v2885
        %2891 = vrot.lane.b32.xlu0 %v2886, 64
        %v2892 = vpop.permute.xlu0 %2891
        %2893 = vrot.lane.b32.xlu0 %v2887, 64
        %v2894 = vpop.permute.xlu0 %2893
        %2895 = vrot.lane.b32.xlu0 %v2888, 64
        %v2896 = vpop.permute.xlu0 %2895
        %2897 = vrot.lane.b32.xlu0 %v2889, 64
        %v2898 = vpop.permute.xlu0 %2897
        %2899 = vrot.lane.b32.xlu0 %v2890, 64
        %v2900 = vpop.permute.xlu0 %2899
        %2906 = vst.msk [vmem:[#allocation5 + $0x8] sm:$0xf] %vm2596, %v2892
        %2907 = vst.msk [vmem:[#allocation5 + $0x24] sm:$0xf] %vm2596, %v2894
        %2908 = vst.msk [vmem:[#allocation5 + $0x40] sm:$0xf] %vm2596, %v2896
        %2909 = vst.msk [vmem:[#allocation5 + $0x5c] sm:$0xf] %vm2596, %v2898
        %2910 = vst.msk [vmem:[#allocation5 + $0x78] sm:$0xf] %vm2596, %v2900
        %v2911 = vld [vmem:[#allocation4 + $0x42] sm:$0xff]
        %v2912 = vld [vmem:[#allocation4 + $0x4a] sm:$0xff]
        %v2913 = vld [vmem:[#allocation4 + $0x52] sm:$0xff]
        %v2914 = vld [vmem:[#allocation4 + $0x5a] sm:$0xff]
        %v2915 = vld [vmem:[#allocation4 + $0x62] sm:$0xff]
        %v2916 = vpack.c.bf16 %v2912, %v2911
        %v2917 = vpack.c.bf16 %v2914, %v2913
        %v2918 = vpack.c.bf16 %v2915, %v2915
        %v2922 = vunpack.c.l.b16 %v2916
        %v2923 = vunpack.c.h.b16 %v2916
        %v2924 = vunpack.c.l.b16 %v2917
        %v2925 = vunpack.c.h.b16 %v2917
        %v2926 = vunpack.c.l.b16 %v2918
        %v2927 = vpack.c.b16 %v2922, %v2922
        %v2928 = vpack.c.b16 %v2923, %v2923
        %v2929 = vpack.c.b16 %v2924, %v2924
        %v2930 = vpack.c.b16 %v2925, %v2925
        %v2931 = vpack.c.b16 %v2926, %v2926
        %2932 = vrot.lane.b32.xlu0 %v2927, 96
        %v2933 = vpop.permute.xlu0 %2932
        %2934 = vrot.lane.b32.xlu0 %v2928, 96
        %v2935 = vpop.permute.xlu0 %2934
        %2936 = vrot.lane.b32.xlu0 %v2929, 96
        %v2937 = vpop.permute.xlu0 %2936
        %2938 = vrot.lane.b32.xlu0 %v2930, 96
        %v2939 = vpop.permute.xlu0 %2938
        %2940 = vrot.lane.b32.xlu0 %v2931, 96
        %v2941 = vpop.permute.xlu0 %2940
        %2947 = vst.msk [vmem:[#allocation5 + $0x8] sm:$0xf] %vm2638, %v2933
        %2948 = vst.msk [vmem:[#allocation5 + $0x24] sm:$0xf] %vm2638, %v2935
        %2949 = vst.msk [vmem:[#allocation5 + $0x40] sm:$0xf] %vm2638, %v2937
        %2950 = vst.msk [vmem:[#allocation5 + $0x5c] sm:$0xf] %vm2638, %v2939
        %2951 = vst.msk [vmem:[#allocation5 + $0x78] sm:$0xf] %vm2638, %v2941
        %v2952 = vld [vmem:[#allocation4 + $0x44] sm:$0xff]
        %v2953 = vld [vmem:[#allocation4 + $0x4c] sm:$0xff]
        %v2954 = vld [vmem:[#allocation4 + $0x54] sm:$0xff]
        %v2955 = vld [vmem:[#allocation4 + $0x5c] sm:$0xff]
        %v2956 = vld [vmem:[#allocation4 + $0x64] sm:$0xff]
        %v2957 = vpack.c.bf16 %v2953, %v2952
        %v2958 = vpack.c.bf16 %v2955, %v2954
        %v2959 = vpack.c.bf16 %v2956, %v2956
        %v2963 = vunpack.c.l.b16 %v2957
        %v2964 = vunpack.c.h.b16 %v2957
        %v2965 = vunpack.c.l.b16 %v2958
        %v2966 = vunpack.c.h.b16 %v2958
        %v2967 = vunpack.c.l.b16 %v2959
        %v2968 = vpack.c.b16 %v2963, %v2963
        %v2969 = vpack.c.b16 %v2964, %v2964
        %v2970 = vpack.c.b16 %v2965, %v2965
        %v2971 = vpack.c.b16 %v2966, %v2966
        %v2972 = vpack.c.b16 %v2967, %v2967
        %2978 = vst.msk [vmem:[#allocation5 + $0xc] sm:$0xf] %vm2512, %v2968
        %2979 = vst.msk [vmem:[#allocation5 + $0x28] sm:$0xf] %vm2512, %v2969
        %2980 = vst.msk [vmem:[#allocation5 + $0x44] sm:$0xf] %vm2512, %v2970
        %2981 = vst.msk [vmem:[#allocation5 + $0x60] sm:$0xf] %vm2512, %v2971
        %2982 = vst.msk [vmem:[#allocation5 + $0x7c] sm:$0xf] %vm2512, %v2972
        %v2983 = vld [vmem:[#allocation4 + $0x46] sm:$0xff]
        %v2984 = vld [vmem:[#allocation4 + $0x4e] sm:$0xff]
        %v2985 = vld [vmem:[#allocation4 + $0x56] sm:$0xff]
        %v2986 = vld [vmem:[#allocation4 + $0x5e] sm:$0xff]
        %v2987 = vld [vmem:[#allocation4 + $0x66] sm:$0xff]
        %v2988 = vpack.c.bf16 %v2984, %v2983
        %v2989 = vpack.c.bf16 %v2986, %v2985
        %v2990 = vpack.c.bf16 %v2987, %v2987
        %v2994 = vunpack.c.l.b16 %v2988
        %v2995 = vunpack.c.h.b16 %v2988
        %v2996 = vunpack.c.l.b16 %v2989
        %v2997 = vunpack.c.h.b16 %v2989
        %v2998 = vunpack.c.l.b16 %v2990
        %v2999 = vpack.c.b16 %v2994, %v2994
        %v3000 = vpack.c.b16 %v2995, %v2995
        %v3001 = vpack.c.b16 %v2996, %v2996
        %v3002 = vpack.c.b16 %v2997, %v2997
        %v3003 = vpack.c.b16 %v2998, %v2998
        %3004 = vrot.lane.b32.xlu0 %v2999, 32
        %v3005 = vpop.permute.xlu0 %3004
        %3006 = vrot.lane.b32.xlu0 %v3000, 32
        %v3007 = vpop.permute.xlu0 %3006
        %3008 = vrot.lane.b32.xlu0 %v3001, 32
        %v3009 = vpop.permute.xlu0 %3008
        %3010 = vrot.lane.b32.xlu0 %v3002, 32
        %v3011 = vpop.permute.xlu0 %3010
        %3012 = vrot.lane.b32.xlu0 %v3003, 32
        %v3013 = vpop.permute.xlu0 %3012
        %3019 = vst.msk [vmem:[#allocation5 + $0xc] sm:$0xf] %vm2554, %v3005
        %3020 = vst.msk [vmem:[#allocation5 + $0x28] sm:$0xf] %vm2554, %v3007
        %3021 = vst.msk [vmem:[#allocation5 + $0x44] sm:$0xf] %vm2554, %v3009
        %3022 = vst.msk [vmem:[#allocation5 + $0x60] sm:$0xf] %vm2554, %v3011
        %3023 = vst.msk [vmem:[#allocation5 + $0x7c] sm:$0xf] %vm2554, %v3013
        %v3024 = vld [vmem:[#allocation4 + $0x48] sm:$0xff]
        %v3025 = vld [vmem:[#allocation4 + $0x50] sm:$0xff]
        %v3026 = vld [vmem:[#allocation4 + $0x58] sm:$0xff]
        %v3027 = vld [vmem:[#allocation4 + $0x60] sm:$0xff]
        %v3028 = vld [vmem:[#allocation4 + $0x68] sm:$0xff]
        %v3029 = vpack.c.bf16 %v3025, %v3024
        %v3030 = vpack.c.bf16 %v3027, %v3026
        %v3031 = vpack.c.bf16 %v3028, %v3028
        %v3035 = vunpack.c.l.b16 %v3029
        %v3036 = vunpack.c.h.b16 %v3029
        %v3037 = vunpack.c.l.b16 %v3030
        %v3038 = vunpack.c.h.b16 %v3030
        %v3039 = vunpack.c.l.b16 %v3031
        %v3040 = vpack.c.b16 %v3035, %v3035
        %v3041 = vpack.c.b16 %v3036, %v3036
        %v3042 = vpack.c.b16 %v3037, %v3037
        %v3043 = vpack.c.b16 %v3038, %v3038
        %v3044 = vpack.c.b16 %v3039, %v3039
        %3045 = vrot.lane.b32.xlu0 %v3040, 64
        %v3046 = vpop.permute.xlu0 %3045
        %3047 = vrot.lane.b32.xlu0 %v3041, 64
        %v3048 = vpop.permute.xlu0 %3047
        %3049 = vrot.lane.b32.xlu0 %v3042, 64
        %v3050 = vpop.permute.xlu0 %3049
        %3051 = vrot.lane.b32.xlu0 %v3043, 64
        %v3052 = vpop.permute.xlu0 %3051
        %3053 = vrot.lane.b32.xlu0 %v3044, 64
        %v3054 = vpop.permute.xlu0 %3053
        %3060 = vst.msk [vmem:[#allocation5 + $0xc] sm:$0xf] %vm2596, %v3046
        %3061 = vst.msk [vmem:[#allocation5 + $0x28] sm:$0xf] %vm2596, %v3048
        %3062 = vst.msk [vmem:[#allocation5 + $0x44] sm:$0xf] %vm2596, %v3050
        %3063 = vst.msk [vmem:[#allocation5 + $0x60] sm:$0xf] %vm2596, %v3052
        %3064 = vst.msk [vmem:[#allocation5 + $0x7c] sm:$0xf] %vm2596, %v3054
        %v3065 = vld [vmem:[#allocation4 + $0x60] sm:$0xff]
        %v3066 = vld [vmem:[#allocation4 + $0x68] sm:$0xff]
        %v3067 = vld [vmem:[#allocation4 + $0x70] sm:$0xff]
        %v3068 = vld [vmem:[#allocation4 + $0x78] sm:$0xff]
        %v3069 = vld [vmem:[#allocation4 + $0x80] sm:$0xff]
        %v3070 = vpack.c.bf16 %v3066, %v3065
        %v3071 = vpack.c.bf16 %v3068, %v3067
        %v3072 = vpack.c.bf16 %v3069, %v3069
        %v3076 = vunpack.c.l.b16 %v3070
        %v3077 = vunpack.c.h.b16 %v3070
        %v3078 = vunpack.c.l.b16 %v3071
        %v3079 = vunpack.c.h.b16 %v3071
        %v3080 = vunpack.c.l.b16 %v3072
        %v3081 = vpack.c.b16 %v3076, %v3076
        %v3082 = vpack.c.b16 %v3077, %v3077
        %v3083 = vpack.c.b16 %v3078, %v3078
        %v3084 = vpack.c.b16 %v3079, %v3079
        %v3085 = vpack.c.b16 %v3080, %v3080
        %3086 = vrot.lane.b32.xlu0 %v3081, 96
        %v3087 = vpop.permute.xlu0 %3086
        %3088 = vrot.lane.b32.xlu0 %v3082, 96
        %v3089 = vpop.permute.xlu0 %3088
        %3090 = vrot.lane.b32.xlu0 %v3083, 96
        %v3091 = vpop.permute.xlu0 %3090
        %3092 = vrot.lane.b32.xlu0 %v3084, 96
        %v3093 = vpop.permute.xlu0 %3092
        %3094 = vrot.lane.b32.xlu0 %v3085, 96
        %v3095 = vpop.permute.xlu0 %3094
        %3101 = vst.msk [vmem:[#allocation5 + $0xc] sm:$0xf] %vm2638, %v3087
        %3102 = vst.msk [vmem:[#allocation5 + $0x28] sm:$0xf] %vm2638, %v3089
        %3103 = vst.msk [vmem:[#allocation5 + $0x44] sm:$0xf] %vm2638, %v3091
        %3104 = vst.msk [vmem:[#allocation5 + $0x60] sm:$0xf] %vm2638, %v3093
        %3105 = vst.msk [vmem:[#allocation5 + $0x7c] sm:$0xf] %vm2638, %v3095
        %v3106 = vld [vmem:[#allocation4 + $0x62] sm:$0xff]
        %v3107 = vld [vmem:[#allocation4 + $0x6a] sm:$0xff]
        %v3108 = vld [vmem:[#allocation4 + $0x72] sm:$0xff]
        %v3109 = vld [vmem:[#allocation4 + $0x7a] sm:$0xff]
        %v3110 = vld [vmem:[#allocation4 + $0x82] sm:$0xff]
        %v3111 = vpack.c.bf16 %v3107, %v3106
        %v3112 = vpack.c.bf16 %v3109, %v3108
        %v3113 = vpack.c.bf16 %v3110, %v3110
        %v3117 = vunpack.c.l.b16 %v3111
        %v3118 = vunpack.c.h.b16 %v3111
        %v3119 = vunpack.c.l.b16 %v3112
        %v3120 = vunpack.c.h.b16 %v3112
        %v3121 = vunpack.c.l.b16 %v3113
        %v3122 = vpack.c.b16 %v3117, %v3117
        %v3123 = vpack.c.b16 %v3118, %v3118
        %v3124 = vpack.c.b16 %v3119, %v3119
        %v3125 = vpack.c.b16 %v3120, %v3120
        %v3126 = vpack.c.b16 %v3121, %v3121
        %3132 = vst.msk [vmem:[#allocation5 + $0x10] sm:$0xf] %vm2512, %v3122
        %3133 = vst.msk [vmem:[#allocation5 + $0x2c] sm:$0xf] %vm2512, %v3123
        %3134 = vst.msk [vmem:[#allocation5 + $0x48] sm:$0xf] %vm2512, %v3124
        %3135 = vst.msk [vmem:[#allocation5 + $0x64] sm:$0xf] %vm2512, %v3125
        %3136 = vst.msk [vmem:[#allocation5 + $0x80] sm:$0xf] %vm2512, %v3126
        %v3137 = vld [vmem:[#allocation4 + $0x64] sm:$0xff]
        %v3138 = vld [vmem:[#allocation4 + $0x6c] sm:$0xff]
        %v3139 = vld [vmem:[#allocation4 + $0x74] sm:$0xff]
        %v3140 = vld [vmem:[#allocation4 + $0x7c] sm:$0xff]
        %v3141 = vld [vmem:[#allocation4 + $0x84] sm:$0xff]
        %v3142 = vpack.c.bf16 %v3138, %v3137
        %v3143 = vpack.c.bf16 %v3140, %v3139
        %v3144 = vpack.c.bf16 %v3141, %v3141
        %v3148 = vunpack.c.l.b16 %v3142
        %v3149 = vunpack.c.h.b16 %v3142
        %v3150 = vunpack.c.l.b16 %v3143
        %v3151 = vunpack.c.h.b16 %v3143
        %v3152 = vunpack.c.l.b16 %v3144
        %v3153 = vpack.c.b16 %v3148, %v3148
        %v3154 = vpack.c.b16 %v3149, %v3149
        %v3155 = vpack.c.b16 %v3150, %v3150
        %v3156 = vpack.c.b16 %v3151, %v3151
        %v3157 = vpack.c.b16 %v3152, %v3152
        %3158 = vrot.lane.b32.xlu0 %v3153, 32
        %v3159 = vpop.permute.xlu0 %3158
        %3160 = vrot.lane.b32.xlu0 %v3154, 32
        %v3161 = vpop.permute.xlu0 %3160
        %3162 = vrot.lane.b32.xlu0 %v3155, 32
        %v3163 = vpop.permute.xlu0 %3162
        %3164 = vrot.lane.b32.xlu0 %v3156, 32
        %v3165 = vpop.permute.xlu0 %3164
        %3166 = vrot.lane.b32.xlu0 %v3157, 32
        %v3167 = vpop.permute.xlu0 %3166
        %3173 = vst.msk [vmem:[#allocation5 + $0x10] sm:$0xf] %vm2554, %v3159
        %3174 = vst.msk [vmem:[#allocation5 + $0x2c] sm:$0xf] %vm2554, %v3161
        %3175 = vst.msk [vmem:[#allocation5 + $0x48] sm:$0xf] %vm2554, %v3163
        %3176 = vst.msk [vmem:[#allocation5 + $0x64] sm:$0xf] %vm2554, %v3165
        %3177 = vst.msk [vmem:[#allocation5 + $0x80] sm:$0xf] %vm2554, %v3167
        %v3178 = vld [vmem:[#allocation4 + $0x66] sm:$0xff]
        %v3179 = vld [vmem:[#allocation4 + $0x6e] sm:$0xff]
        %v3180 = vld [vmem:[#allocation4 + $0x76] sm:$0xff]
        %v3181 = vld [vmem:[#allocation4 + $0x7e] sm:$0xff]
        %v3182 = vld [vmem:[#allocation4 + $0x86] sm:$0xff]
        %v3183 = vpack.c.bf16 %v3179, %v3178
        %v3184 = vpack.c.bf16 %v3181, %v3180
        %v3185 = vpack.c.bf16 %v3182, %v3182
        %v3189 = vunpack.c.l.b16 %v3183
        %v3190 = vunpack.c.h.b16 %v3183
        %v3191 = vunpack.c.l.b16 %v3184
        %v3192 = vunpack.c.h.b16 %v3184
        %v3193 = vunpack.c.l.b16 %v3185
        %v3194 = vpack.c.b16 %v3189, %v3189
        %v3195 = vpack.c.b16 %v3190, %v3190
        %v3196 = vpack.c.b16 %v3191, %v3191
        %v3197 = vpack.c.b16 %v3192, %v3192
        %v3198 = vpack.c.b16 %v3193, %v3193
        %3199 = vrot.lane.b32.xlu0 %v3194, 64
        %v3200 = vpop.permute.xlu0 %3199
        %3201 = vrot.lane.b32.xlu0 %v3195, 64
        %v3202 = vpop.permute.xlu0 %3201
        %3203 = vrot.lane.b32.xlu0 %v3196, 64
        %v3204 = vpop.permute.xlu0 %3203
        %3205 = vrot.lane.b32.xlu0 %v3197, 64
        %v3206 = vpop.permute.xlu0 %3205
        %3207 = vrot.lane.b32.xlu0 %v3198, 64
        %v3208 = vpop.permute.xlu0 %3207
        %3214 = vst.msk [vmem:[#allocation5 + $0x10] sm:$0xf] %vm2596, %v3200
        %3215 = vst.msk [vmem:[#allocation5 + $0x2c] sm:$0xf] %vm2596, %v3202
        %3216 = vst.msk [vmem:[#allocation5 + $0x48] sm:$0xf] %vm2596, %v3204
        %3217 = vst.msk [vmem:[#allocation5 + $0x64] sm:$0xf] %vm2596, %v3206
        %3218 = vst.msk [vmem:[#allocation5 + $0x80] sm:$0xf] %vm2596, %v3208
        %v3219 = vld [vmem:[#allocation4 + $0x68] sm:$0xff]
        %v3220 = vld [vmem:[#allocation4 + $0x70] sm:$0xff]
        %v3221 = vld [vmem:[#allocation4 + $0x78] sm:$0xff]
        %v3222 = vld [vmem:[#allocation4 + $0x80] sm:$0xff]
        %v3223 = vld [vmem:[#allocation4 + $0x88] sm:$0xff]
        %v3224 = vpack.c.bf16 %v3220, %v3219
        %v3225 = vpack.c.bf16 %v3222, %v3221
        %v3226 = vpack.c.bf16 %v3223, %v3223
        %v3230 = vunpack.c.l.b16 %v3224
        %v3231 = vunpack.c.h.b16 %v3224
        %v3232 = vunpack.c.l.b16 %v3225
        %v3233 = vunpack.c.h.b16 %v3225
        %v3234 = vunpack.c.l.b16 %v3226
        %v3235 = vpack.c.b16 %v3230, %v3230
        %v3236 = vpack.c.b16 %v3231, %v3231
        %v3237 = vpack.c.b16 %v3232, %v3232
        %v3238 = vpack.c.b16 %v3233, %v3233
        %v3239 = vpack.c.b16 %v3234, %v3234
        %3240 = vrot.lane.b32.xlu0 %v3235, 96
        %v3241 = vpop.permute.xlu0 %3240
        %3242 = vrot.lane.b32.xlu0 %v3236, 96
        %v3243 = vpop.permute.xlu0 %3242
        %3244 = vrot.lane.b32.xlu0 %v3237, 96
        %v3245 = vpop.permute.xlu0 %3244
        %3246 = vrot.lane.b32.xlu0 %v3238, 96
        %v3247 = vpop.permute.xlu0 %3246
        %3248 = vrot.lane.b32.xlu0 %v3239, 96
        %v3249 = vpop.permute.xlu0 %3248
        %3255 = vst.msk [vmem:[#allocation5 + $0x10] sm:$0xf] %vm2638, %v3241
        %3256 = vst.msk [vmem:[#allocation5 + $0x2c] sm:$0xf] %vm2638, %v3243
        %3257 = vst.msk [vmem:[#allocation5 + $0x48] sm:$0xf] %vm2638, %v3245
        %3258 = vst.msk [vmem:[#allocation5 + $0x64] sm:$0xf] %vm2638, %v3247
        %3259 = vst.msk [vmem:[#allocation5 + $0x80] sm:$0xf] %vm2638, %v3249
        %v3260 = vld [vmem:[#allocation4 + $0x80] sm:$0xff]
        %v3261 = vld [vmem:[#allocation4 + $0x88] sm:$0xff]
        %v3262 = vld [vmem:[#allocation4 + $0x90] sm:$0xff]
        %v3263 = vld [vmem:[#allocation4 + $0x98] sm:$0xff]
        %v3264 = vld [vmem:[#allocation4 + $0xa0] sm:$0xff]
        %v3265 = vpack.c.bf16 %v3261, %v3260
        %v3266 = vpack.c.bf16 %v3263, %v3262
        %v3267 = vpack.c.bf16 %v3264, %v3264
        %v3271 = vunpack.c.l.b16 %v3265
        %v3272 = vunpack.c.h.b16 %v3265
        %v3273 = vunpack.c.l.b16 %v3266
        %v3274 = vunpack.c.h.b16 %v3266
        %v3275 = vunpack.c.l.b16 %v3267
        %v3276 = vpack.c.b16 %v3271, %v3271
        %v3277 = vpack.c.b16 %v3272, %v3272
        %v3278 = vpack.c.b16 %v3273, %v3273
        %v3279 = vpack.c.b16 %v3274, %v3274
        %v3280 = vpack.c.b16 %v3275, %v3275
        %3286 = vst.msk [vmem:[#allocation5 + $0x14] sm:$0xf] %vm2512, %v3276
        %3287 = vst.msk [vmem:[#allocation5 + $0x30] sm:$0xf] %vm2512, %v3277
        %3288 = vst.msk [vmem:[#allocation5 + $0x4c] sm:$0xf] %vm2512, %v3278
        %3289 = vst.msk [vmem:[#allocation5 + $0x68] sm:$0xf] %vm2512, %v3279
        %3290 = vst.msk [vmem:[#allocation5 + $0x84] sm:$0xf] %vm2512, %v3280
        %v3291 = vld [vmem:[#allocation4 + $0x82] sm:$0xff]
        %v3292 = vld [vmem:[#allocation4 + $0x8a] sm:$0xff]
        %v3293 = vld [vmem:[#allocation4 + $0x92] sm:$0xff]
        %v3294 = vld [vmem:[#allocation4 + $0x9a] sm:$0xff]
        %v3295 = vld [vmem:[#allocation4 + $0xa2] sm:$0xff]
        %v3296 = vpack.c.bf16 %v3292, %v3291
        %v3297 = vpack.c.bf16 %v3294, %v3293
        %v3298 = vpack.c.bf16 %v3295, %v3295
        %v3302 = vunpack.c.l.b16 %v3296
        %v3303 = vunpack.c.h.b16 %v3296
        %v3304 = vunpack.c.l.b16 %v3297
        %v3305 = vunpack.c.h.b16 %v3297
        %v3306 = vunpack.c.l.b16 %v3298
        %v3307 = vpack.c.b16 %v3302, %v3302
        %v3308 = vpack.c.b16 %v3303, %v3303
        %v3309 = vpack.c.b16 %v3304, %v3304
        %v3310 = vpack.c.b16 %v3305, %v3305
        %v3311 = vpack.c.b16 %v3306, %v3306
        %3312 = vrot.lane.b32.xlu0 %v3307, 32
        %v3313 = vpop.permute.xlu0 %3312
        %3314 = vrot.lane.b32.xlu0 %v3308, 32
        %v3315 = vpop.permute.xlu0 %3314
        %3316 = vrot.lane.b32.xlu0 %v3309, 32
        %v3317 = vpop.permute.xlu0 %3316
        %3318 = vrot.lane.b32.xlu0 %v3310, 32
        %v3319 = vpop.permute.xlu0 %3318
        %3320 = vrot.lane.b32.xlu0 %v3311, 32
        %v3321 = vpop.permute.xlu0 %3320
        %3327 = vst.msk [vmem:[#allocation5 + $0x14] sm:$0xf] %vm2554, %v3313
        %3328 = vst.msk [vmem:[#allocation5 + $0x30] sm:$0xf] %vm2554, %v3315
        %3329 = vst.msk [vmem:[#allocation5 + $0x4c] sm:$0xf] %vm2554, %v3317
        %3330 = vst.msk [vmem:[#allocation5 + $0x68] sm:$0xf] %vm2554, %v3319
        %3331 = vst.msk [vmem:[#allocation5 + $0x84] sm:$0xf] %vm2554, %v3321
        %v3332 = vld [vmem:[#allocation4 + $0x84] sm:$0xff]
        %v3333 = vld [vmem:[#allocation4 + $0x8c] sm:$0xff]
        %v3334 = vld [vmem:[#allocation4 + $0x94] sm:$0xff]
        %v3335 = vld [vmem:[#allocation4 + $0x9c] sm:$0xff]
        %v3336 = vld [vmem:[#allocation4 + $0xa4] sm:$0xff]
        %v3337 = vpack.c.bf16 %v3333, %v3332
        %v3338 = vpack.c.bf16 %v3335, %v3334
        %v3339 = vpack.c.bf16 %v3336, %v3336
        %v3343 = vunpack.c.l.b16 %v3337
        %v3344 = vunpack.c.h.b16 %v3337
        %v3345 = vunpack.c.l.b16 %v3338
        %v3346 = vunpack.c.h.b16 %v3338
        %v3347 = vunpack.c.l.b16 %v3339
        %v3348 = vpack.c.b16 %v3343, %v3343
        %v3349 = vpack.c.b16 %v3344, %v3344
        %v3350 = vpack.c.b16 %v3345, %v3345
        %v3351 = vpack.c.b16 %v3346, %v3346
        %v3352 = vpack.c.b16 %v3347, %v3347
        %3353 = vrot.lane.b32.xlu0 %v3348, 64
        %v3354 = vpop.permute.xlu0 %3353
        %3355 = vrot.lane.b32.xlu0 %v3349, 64
        %v3356 = vpop.permute.xlu0 %3355
        %3357 = vrot.lane.b32.xlu0 %v3350, 64
        %v3358 = vpop.permute.xlu0 %3357
        %3359 = vrot.lane.b32.xlu0 %v3351, 64
        %v3360 = vpop.permute.xlu0 %3359
        %3361 = vrot.lane.b32.xlu0 %v3352, 64
        %v3362 = vpop.permute.xlu0 %3361
        %3368 = vst.msk [vmem:[#allocation5 + $0x14] sm:$0xf] %vm2596, %v3354
        %3369 = vst.msk [vmem:[#allocation5 + $0x30] sm:$0xf] %vm2596, %v3356
        %3370 = vst.msk [vmem:[#allocation5 + $0x4c] sm:$0xf] %vm2596, %v3358
        %3371 = vst.msk [vmem:[#allocation5 + $0x68] sm:$0xf] %vm2596, %v3360
        %3372 = vst.msk [vmem:[#allocation5 + $0x84] sm:$0xf] %vm2596, %v3362
        %v3373 = vld [vmem:[#allocation4 + $0x86] sm:$0xff]
        %v3374 = vld [vmem:[#allocation4 + $0x8e] sm:$0xff]
        %v3375 = vld [vmem:[#allocation4 + $0x96] sm:$0xff]
        %v3376 = vld [vmem:[#allocation4 + $0x9e] sm:$0xff]
        %v3377 = vld [vmem:[#allocation4 + $0xa6] sm:$0xff]
        %v3378 = vpack.c.bf16 %v3374, %v3373
        %v3379 = vpack.c.bf16 %v3376, %v3375
        %v3380 = vpack.c.bf16 %v3377, %v3377
        %v3384 = vunpack.c.l.b16 %v3378
        %v3385 = vunpack.c.h.b16 %v3378
        %v3386 = vunpack.c.l.b16 %v3379
        %v3387 = vunpack.c.h.b16 %v3379
        %v3388 = vunpack.c.l.b16 %v3380
        %v3389 = vpack.c.b16 %v3384, %v3384
        %v3390 = vpack.c.b16 %v3385, %v3385
        %v3391 = vpack.c.b16 %v3386, %v3386
        %v3392 = vpack.c.b16 %v3387, %v3387
        %v3393 = vpack.c.b16 %v3388, %v3388
        %3394 = vrot.lane.b32.xlu0 %v3389, 96
        %v3395 = vpop.permute.xlu0 %3394
        %3396 = vrot.lane.b32.xlu0 %v3390, 96
        %v3397 = vpop.permute.xlu0 %3396
        %3398 = vrot.lane.b32.xlu0 %v3391, 96
        %v3399 = vpop.permute.xlu0 %3398
        %3400 = vrot.lane.b32.xlu0 %v3392, 96
        %v3401 = vpop.permute.xlu0 %3400
        %3402 = vrot.lane.b32.xlu0 %v3393, 96
        %v3403 = vpop.permute.xlu0 %3402
        %3409 = vst.msk [vmem:[#allocation5 + $0x14] sm:$0xf] %vm2638, %v3395
        %3410 = vst.msk [vmem:[#allocation5 + $0x30] sm:$0xf] %vm2638, %v3397
        %3411 = vst.msk [vmem:[#allocation5 + $0x4c] sm:$0xf] %vm2638, %v3399
        %3412 = vst.msk [vmem:[#allocation5 + $0x68] sm:$0xf] %vm2638, %v3401
        %3413 = vst.msk [vmem:[#allocation5 + $0x84] sm:$0xf] %vm2638, %v3403
        %v3414 = vld [vmem:[#allocation4 + $0x88] sm:$0xff]
        %v3415 = vld [vmem:[#allocation4 + $0x90] sm:$0xff]
        %v3416 = vld [vmem:[#allocation4 + $0x98] sm:$0xff]
        %v3417 = vld [vmem:[#allocation4 + $0xa0] sm:$0xff]
        %v3418 = vld [vmem:[#allocation4 + $0xa8] sm:$0xff]
        %v3419 = vpack.c.bf16 %v3415, %v3414
        %v3420 = vpack.c.bf16 %v3417, %v3416
        %v3421 = vpack.c.bf16 %v3418, %v3418
        %v3425 = vunpack.c.l.b16 %v3419
        %v3426 = vunpack.c.h.b16 %v3419
        %v3427 = vunpack.c.l.b16 %v3420
        %v3428 = vunpack.c.h.b16 %v3420
        %v3429 = vunpack.c.l.b16 %v3421
        %v3430 = vpack.c.b16 %v3425, %v3425
        %v3431 = vpack.c.b16 %v3426, %v3426
        %v3432 = vpack.c.b16 %v3427, %v3427
        %v3433 = vpack.c.b16 %v3428, %v3428
        %v3434 = vpack.c.b16 %v3429, %v3429
        %3440 = vst.msk [vmem:[#allocation5 + $0x18] sm:$0xf] %vm2512, %v3430
        %3441 = vst.msk [vmem:[#allocation5 + $0x34] sm:$0xf] %vm2512, %v3431
        %3442 = vst.msk [vmem:[#allocation5 + $0x50] sm:$0xf] %vm2512, %v3432
        %3443 = vst.msk [vmem:[#allocation5 + $0x6c] sm:$0xf] %vm2512, %v3433
        %3444 = vst.msk [vmem:[#allocation5 + $0x88] sm:$0xf] %vm2512, %v3434
        %v3445 = vld [vmem:[#allocation5] sm:$0xff]
        %v3446 = vld [vmem:[#allocation5 + $0x8] sm:$0xff]
        %v3447 = vld [vmem:[#allocation5 + $0x10] sm:$0xff]
        %v3448 = vld [vmem:[#allocation5 + $0x18] sm:$0xf]
        %v3449 = vld [vmem:[#allocation5 + $0x1c] sm:$0xff]
        %v3450 = vld [vmem:[#allocation5 + $0x24] sm:$0xff]
        %v3451 = vld [vmem:[#allocation5 + $0x2c] sm:$0xff]
        %v3452 = vld [vmem:[#allocation5 + $0x34] sm:$0xf]
        %v3453 = vld [vmem:[#allocation5 + $0x38] sm:$0xff]
        %v3454 = vld [vmem:[#allocation5 + $0x40] sm:$0xff]
        %v3455 = vld [vmem:[#allocation5 + $0x48] sm:$0xff]
        %v3456 = vld [vmem:[#allocation5 + $0x50] sm:$0xf]
        %v3457 = vld [vmem:[#allocation5 + $0x54] sm:$0xff]
        %v3458 = vld [vmem:[#allocation5 + $0x5c] sm:$0xff]
        %v3459 = vld [vmem:[#allocation5 + $0x64] sm:$0xff]
        %v3460 = vld [vmem:[#allocation5 + $0x6c] sm:$0xf]
        %v3461 = vld [vmem:[#allocation5 + $0x70] sm:$0xff]
        %v3462 = vld [vmem:[#allocation5 + $0x78] sm:$0xff]
        %v3463 = vld [vmem:[#allocation5 + $0x80] sm:$0xff]
        %v3464 = vld [vmem:[#allocation5 + $0x88] sm:$0xf]
        %v3465 = vld [vmem:[%s5] sm:$0xf]
        %v3466 = vld [vmem:[%s5 + $0x4] sm:$0xf]
        %v3467 = vld [vmem:[%s5 + $0x8] sm:$0xf]
        %v3468 = vld [vmem:[%s5 + $0xc] sm:$0xf]
        %v3469 = vld [vmem:[%s5 + $0x10] sm:$0xf]
        %v3470 = vld [vmem:[%s5 + $0x14] sm:$0xf]
        %v3471 = vld [vmem:[%s5 + $0x18] sm:$0xf]
        %v3472 = vld [vmem:[%s5 + $0x1c] sm:$0xf]
        %v3473 = vld [vmem:[%s5 + $0x20] sm:$0xf]
        %v3474 = vld [vmem:[%s5 + $0x24] sm:$0xf]
        %v3475 = vld [vmem:[%s5 + $0x28] sm:$0xf]
        %v3476 = vld [vmem:[%s5 + $0x2c] sm:$0xf]
        %v3477 = vld [vmem:[%s5 + $0x30] sm:$0xf]
        %v3478 = vld [vmem:[%s5 + $0x34] sm:$0xf]
        %v3479 = vld [vmem:[%s5 + $0x38] sm:$0xf]
        %v3480 = vld [vmem:[%s5 + $0x3c] sm:$0xf]
        %v3481 = vld [vmem:[%s5 + $0x40] sm:$0xf]
        %v3482 = vld [vmem:[%s5 + $0x44] sm:$0xf]
        %v3483 = vld [vmem:[%s5 + $0x48] sm:$0xf]
        %v3484 = vld [vmem:[%s5 + $0x4c] sm:$0xf]
        %v3485 = vld [vmem:[%s5 + $0x50] sm:$0xf]
        %v3486 = vld [vmem:[%s5 + $0x54] sm:$0xf]
        %v3487 = vld [vmem:[%s5 + $0x58] sm:$0xf]
        %v3488 = vld [vmem:[%s5 + $0x5c] sm:$0xf]
        %v3489 = vld [vmem:[%s5 + $0x60] sm:$0xf]
        %v3490 = vld [vmem:[%s5 + $0x64] sm:$0xf]
        %v3491 = vld [vmem:[%s5 + $0x68] sm:$0xf]
        %v3492 = vld [vmem:[%s5 + $0x6c] sm:$0xf]
        %v3493 = vld [vmem:[%s5 + $0x70] sm:$0xf]
        %v3494 = vld [vmem:[%s5 + $0x74] sm:$0xf]
        %v3495 = vld [vmem:[%s5 + $0x78] sm:$0xf]
        %v3496 = vld [vmem:[%s5 + $0x7c] sm:$0xf]
        %v3497 = vld [vmem:[%s5 + $0x80] sm:$0xf]
        %v3498 = vld [vmem:[%s5 + $0x84] sm:$0xf]
        %v3499 = vld [vmem:[%s5 + $0x88] sm:$0xf]
        %v3500 = vld [vmem:[%s5 + $0x8c] sm:$0xf]
        %v3501 = vld [vmem:[%s5 + $0x90] sm:$0xf]
        %v3502 = vld [vmem:[%s5 + $0x94] sm:$0xf]
        %v3503 = vld [vmem:[%s5 + $0x98] sm:$0xf]
        %v3504 = vld [vmem:[%s5 + $0x9c] sm:$0xf]
        %v3505 = vld [vmem:[%s5 + $0xa0] sm:$0xf]
        %v3506 = vld [vmem:[%s5 + $0xa4] sm:$0xf]
        %v3507 = vld [vmem:[%s5 + $0xa8] sm:$0xf]
        %v3508 = vld [vmem:[%s5 + $0xac] sm:$0xf]
        %v3509 = vld [vmem:[%s5 + $0xb0] sm:$0xf]
        %v3510 = vld [vmem:[%s5 + $0xb4] sm:$0xf]
        %v3511 = vld [vmem:[%s5 + $0xb8] sm:$0xf]
        %v3512 = vld [vmem:[%s5 + $0xbc] sm:$0xf]
        %v3513 = vld [vmem:[%s5 + $0xc0] sm:$0xf]
        %v3514 = vld [vmem:[%s5 + $0xc4] sm:$0xf]
        %v3515 = vld [vmem:[%s5 + $0xc8] sm:$0xf]
        %v3516 = vld [vmem:[%s5 + $0xcc] sm:$0xf]
        %v3517 = vld [vmem:[%s5 + $0xd0] sm:$0xf]
        %v3518 = vld [vmem:[%s5 + $0xd4] sm:$0xf]
        %v3519 = vld [vmem:[%s5 + $0xd8] sm:$0xf]
        %v3520 = vld [vmem:[%s5 + $0xdc] sm:$0xf]
        %v3521 = vld [vmem:[%s5 + $0xe0] sm:$0xf]
        %v3522 = vld [vmem:[%s5 + $0xe4] sm:$0xf]
        %v3523 = vld [vmem:[%s5 + $0xe8] sm:$0xf]
        %v3524 = vld [vmem:[%s5 + $0xec] sm:$0xf]
        %v3525 = vld [vmem:[%s5 + $0xf0] sm:$0xf]
        %v3526 = vld [vmem:[%s5 + $0xf4] sm:$0xf]
        %v3527 = vld [vmem:[%s5 + $0xf8] sm:$0xf]
        %v3528 = vld [vmem:[%s5 + $0xfc] sm:$0xf]
        %v3529 = vld [vmem:[%s5 + $0x100] sm:$0xf]
        %v3530 = vld [vmem:[%s5 + $0x104] sm:$0xf]
        %v3531 = vld [vmem:[%s5 + $0x108] sm:$0xf]
        %v3532 = vld [vmem:[%s5 + $0x10c] sm:$0xf]
        %v3533 = vld [vmem:[%s5 + $0x110] sm:$0xf]
        %v3534 = vld [vmem:[%s5 + $0x114] sm:$0xf]
        %v3535 = vld [vmem:[%s5 + $0x118] sm:$0xf]
        %v3536 = vld [vmem:[%s5 + $0x11c] sm:$0xf]
        %v3537 = vld [vmem:[%s5 + $0x120] sm:$0xf]
        %v3538 = vld [vmem:[%s5 + $0x124] sm:$0xf]
        %v3539 = vld [vmem:[%s5 + $0x128] sm:$0xf]
        %v3540 = vld [vmem:[%s5 + $0x12c] sm:$0xf]
        %v3541 = vld [vmem:[%s5 + $0x130] sm:$0xf]
        %v3542 = vld [vmem:[%s5 + $0x134] sm:$0xf]
        %v3543 = vld [vmem:[%s5 + $0x138] sm:$0xf]
        %v3544 = vld [vmem:[%s5 + $0x13c] sm:$0xf]
        %v3545 = vld [vmem:[%s5 + $0x140] sm:$0xf]
        %v3546 = vld [vmem:[%s5 + $0x144] sm:$0xf]
        %v3547 = vld [vmem:[%s5 + $0x148] sm:$0xf]
        %v3548 = vld [vmem:[%s5 + $0x14c] sm:$0xf]
        %v3549 = vld [vmem:[%s5 + $0x150] sm:$0xf]
        %v3550 = vld [vmem:[%s5 + $0x154] sm:$0xf]
        %v3551 = vld [vmem:[%s5 + $0x158] sm:$0xf]
        %v3552 = vld [vmem:[%s5 + $0x15c] sm:$0xf]
        %v3553 = vld [vmem:[%s5 + $0x160] sm:$0xf]
        %v3554 = vld [vmem:[%s5 + $0x164] sm:$0xf]
        %v3555 = vld [vmem:[%s5 + $0x168] sm:$0xf]
        %v3556 = vld [vmem:[%s5 + $0x16c] sm:$0xf]
        %v3557 = vld [vmem:[%s5 + $0x170] sm:$0xf]
        %v3558 = vld [vmem:[%s5 + $0x174] sm:$0xf]
        %v3559 = vld [vmem:[%s5 + $0x178] sm:$0xf]
        %v3560 = vld [vmem:[%s5 + $0x17c] sm:$0xf]
        %v3561 = vld [vmem:[%s5 + $0x180] sm:$0xf]
        %v3562 = vld [vmem:[%s5 + $0x184] sm:$0xf]
        %v3563 = vld [vmem:[%s5 + $0x188] sm:$0xf]
        %v3564 = vld [vmem:[%s5 + $0x18c] sm:$0xf]
        %v3565 = vld [vmem:[%s6] sm:$0x1]
        %v3567 = vlaneseq
        %v3568 = vshrl.u32 %v3567, 7
        %v3569 = vsub.s32 0, %v3568
        %v3570 = vrot.slane %v3565, %v3569
        %v3592 = vunpack.c.l.b16 %v3445
        %v3593 = vunpack.c.h.b16 %v3445
        %v3594 = vunpack.c.l.b16 %v3446
        %v3595 = vunpack.c.h.b16 %v3446
        %v3596 = vunpack.c.l.b16 %v3447
        %v3597 = vunpack.c.h.b16 %v3447
        %v3598 = vunpack.c.l.b16 %v3448
        %v3599 = vunpack.c.l.b16 %v3449
        %v3600 = vunpack.c.h.b16 %v3449
        %v3601 = vunpack.c.l.b16 %v3450
        %v3602 = vunpack.c.h.b16 %v3450
        %v3603 = vunpack.c.l.b16 %v3451
        %v3604 = vunpack.c.h.b16 %v3451
        %v3605 = vunpack.c.l.b16 %v3452
        %v3606 = vunpack.c.l.b16 %v3453
        %v3607 = vunpack.c.h.b16 %v3453
        %v3608 = vunpack.c.l.b16 %v3454
        %v3609 = vunpack.c.h.b16 %v3454
        %v3610 = vunpack.c.l.b16 %v3455
        %v3611 = vunpack.c.h.b16 %v3455
        %v3612 = vunpack.c.l.b16 %v3456
        %v3613 = vunpack.c.l.b16 %v3457
        %v3614 = vunpack.c.h.b16 %v3457
        %v3615 = vunpack.c.l.b16 %v3458
        %v3616 = vunpack.c.h.b16 %v3458
        %v3617 = vunpack.c.l.b16 %v3459
        %v3618 = vunpack.c.h.b16 %v3459
        %v3619 = vunpack.c.l.b16 %v3460
        %v3620 = vunpack.c.l.b16 %v3461
        %v3621 = vunpack.c.h.b16 %v3461
        %v3622 = vunpack.c.l.b16 %v3462
        %v3623 = vunpack.c.h.b16 %v3462
        %v3624 = vunpack.c.l.b16 %v3463
        %v3625 = vunpack.c.h.b16 %v3463
        %v3626 = vunpack.c.l.b16 %v3464
        %v3627 = vpack.c.b16 %v3599, %v3592
        %v3628 = vpack.c.b16 %v3600, %v3593
        %v3629 = vpack.c.b16 %v3601, %v3594
        %v3630 = vpack.c.b16 %v3602, %v3595
        %v3631 = vpack.c.b16 %v3603, %v3596
        %v3632 = vpack.c.b16 %v3604, %v3597
        %v3633 = vpack.c.b16 %v3605, %v3598
        %v3634 = vpack.c.b16 %v3613, %v3606
        %v3635 = vpack.c.b16 %v3614, %v3607
        %v3636 = vpack.c.b16 %v3615, %v3608
        %v3637 = vpack.c.b16 %v3616, %v3609
        %v3638 = vpack.c.b16 %v3617, %v3610
        %v3639 = vpack.c.b16 %v3618, %v3611
        %v3640 = vpack.c.b16 %v3619, %v3612
        %v3641 = vpack.c.b16 %v3620, %v3620
        %v3642 = vpack.c.b16 %v3621, %v3621
        %v3643 = vpack.c.b16 %v3622, %v3622
        %v3644 = vpack.c.b16 %v3623, %v3623
        %v3645 = vpack.c.b16 %v3624, %v3624
        %v3646 = vpack.c.b16 %v3625, %v3625
        %v3647 = vpack.c.b16 %v3626, %v3626
        %v3766 = vunpack.c.l.b16 %v3465
        %v3767 = vunpack.c.l.b16 %v3466
        %v3768 = vunpack.c.l.b16 %v3467
        %v3769 = vunpack.c.l.b16 %v3468
        %v3770 = vunpack.c.l.b16 %v3469
        %v3771 = vunpack.c.l.b16 %v3470
        %v3772 = vunpack.c.l.b16 %v3471
        %v3773 = vunpack.c.l.b16 %v3472
        %v3774 = vunpack.c.l.b16 %v3473
        %v3775 = vunpack.c.l.b16 %v3474
        %v3776 = vunpack.c.l.b16 %v3475
        %v3777 = vunpack.c.l.b16 %v3476
        %v3778 = vunpack.c.l.b16 %v3477
        %v3779 = vunpack.c.l.b16 %v3478
        %v3780 = vunpack.c.l.b16 %v3479
        %v3781 = vunpack.c.l.b16 %v3480
        %v3782 = vunpack.c.l.b16 %v3481
        %v3783 = vunpack.c.l.b16 %v3482
        %v3784 = vunpack.c.l.b16 %v3483
        %v3785 = vunpack.c.l.b16 %v3484
        %v3786 = vunpack.c.l.b16 %v3485
        %v3787 = vunpack.c.l.b16 %v3486
        %v3788 = vunpack.c.l.b16 %v3487
        %v3789 = vunpack.c.l.b16 %v3488
        %v3790 = vunpack.c.l.b16 %v3489
        %v3791 = vunpack.c.l.b16 %v3490
        %v3792 = vunpack.c.l.b16 %v3491
        %v3793 = vunpack.c.l.b16 %v3492
        %v3794 = vunpack.c.l.b16 %v3493
        %v3795 = vunpack.c.l.b16 %v3494
        %v3796 = vunpack.c.l.b16 %v3495
        %v3797 = vunpack.c.l.b16 %v3496
        %v3798 = vunpack.c.l.b16 %v3497
        %v3799 = vunpack.c.l.b16 %v3498
        %v3800 = vunpack.c.l.b16 %v3499
        %v3801 = vunpack.c.l.b16 %v3500
        %v3802 = vunpack.c.l.b16 %v3501
        %v3803 = vunpack.c.l.b16 %v3502
        %v3804 = vunpack.c.l.b16 %v3503
        %v3805 = vunpack.c.l.b16 %v3504
        %v3806 = vunpack.c.l.b16 %v3505
        %v3807 = vunpack.c.l.b16 %v3506
        %v3808 = vunpack.c.l.b16 %v3507
        %v3809 = vunpack.c.l.b16 %v3508
        %v3810 = vunpack.c.l.b16 %v3509
        %v3811 = vunpack.c.l.b16 %v3510
        %v3812 = vunpack.c.l.b16 %v3511
        %v3813 = vunpack.c.l.b16 %v3512
        %v3814 = vunpack.c.l.b16 %v3513
        %v3815 = vunpack.c.l.b16 %v3514
        %v3816 = vunpack.c.l.b16 %v3515
        %v3817 = vunpack.c.l.b16 %v3516
        %v3818 = vunpack.c.l.b16 %v3517
        %v3819 = vunpack.c.l.b16 %v3518
        %v3820 = vunpack.c.l.b16 %v3519
        %v3821 = vunpack.c.l.b16 %v3520
        %v3822 = vunpack.c.l.b16 %v3521
        %v3823 = vunpack.c.l.b16 %v3522
        %v3824 = vunpack.c.l.b16 %v3523
        %v3825 = vunpack.c.l.b16 %v3524
        %v3826 = vunpack.c.l.b16 %v3525
        %v3827 = vunpack.c.l.b16 %v3526
        %v3828 = vunpack.c.l.b16 %v3527
        %v3829 = vunpack.c.l.b16 %v3528
        %v3830 = vunpack.c.l.b16 %v3529
        %v3831 = vunpack.c.l.b16 %v3530
        %v3832 = vunpack.c.l.b16 %v3531
        %v3833 = vunpack.c.l.b16 %v3532
        %v3834 = vunpack.c.l.b16 %v3533
        %v3835 = vunpack.c.l.b16 %v3534
        %v3836 = vunpack.c.l.b16 %v3535
        %v3837 = vunpack.c.l.b16 %v3536
        %v3838 = vunpack.c.l.b16 %v3537
        %v3839 = vunpack.c.l.b16 %v3538
        %v3840 = vunpack.c.l.b16 %v3539
        %v3841 = vunpack.c.l.b16 %v3540
        %v3842 = vunpack.c.l.b16 %v3541
        %v3843 = vunpack.c.l.b16 %v3542
        %v3844 = vunpack.c.l.b16 %v3543
        %v3845 = vunpack.c.l.b16 %v3544
        %v3846 = vunpack.c.l.b16 %v3545
        %v3847 = vunpack.c.l.b16 %v3546
        %v3848 = vunpack.c.l.b16 %v3547
        %v3849 = vunpack.c.l.b16 %v3548
        %v3850 = vunpack.c.l.b16 %v3549
        %v3851 = vunpack.c.l.b16 %v3550
        %v3852 = vunpack.c.l.b16 %v3551
        %v3853 = vunpack.c.l.b16 %v3552
        %v3854 = vunpack.c.l.b16 %v3553
        %v3855 = vunpack.c.l.b16 %v3554
        %v3856 = vunpack.c.l.b16 %v3555
        %v3857 = vunpack.c.l.b16 %v3556
        %v3858 = vunpack.c.l.b16 %v3557
        %v3859 = vunpack.c.l.b16 %v3558
        %v3860 = vunpack.c.l.b16 %v3559
        %v3861 = vunpack.c.l.b16 %v3560
        %v3862 = vunpack.c.l.b16 %v3561
        %v3863 = vunpack.c.l.b16 %v3562
        %v3864 = vunpack.c.l.b16 %v3563
        %v3865 = vunpack.c.l.b16 %v3564
        %v3866 = vpack.c.b16 %v3767, %v3766
        %v3867 = vpack.c.b16 %v3769, %v3768
        %v3868 = vpack.c.b16 %v3771, %v3770
        %v3869 = vpack.c.b16 %v3773, %v3772
        %v3870 = vpack.c.b16 %v3775, %v3774
        %v3871 = vpack.c.b16 %v3777, %v3776
        %v3872 = vpack.c.b16 %v3779, %v3778
        %v3873 = vpack.c.b16 %v3781, %v3780
        %v3874 = vpack.c.b16 %v3783, %v3782
        %v3875 = vpack.c.b16 %v3785, %v3784
        %v3876 = vpack.c.b16 %v3787, %v3786
        %v3877 = vpack.c.b16 %v3789, %v3788
        %v3878 = vpack.c.b16 %v3791, %v3790
        %v3879 = vpack.c.b16 %v3793, %v3792
        %v3880 = vpack.c.b16 %v3795, %v3794
        %v3881 = vpack.c.b16 %v3797, %v3796
        %v3882 = vpack.c.b16 %v3799, %v3798
        %v3883 = vpack.c.b16 %v3801, %v3800
        %v3884 = vpack.c.b16 %v3803, %v3802
        %v3885 = vpack.c.b16 %v3805, %v3804
        %v3886 = vpack.c.b16 %v3807, %v3806
        %v3887 = vpack.c.b16 %v3809, %v3808
        %v3888 = vpack.c.b16 %v3811, %v3810
        %v3889 = vpack.c.b16 %v3813, %v3812
        %v3890 = vpack.c.b16 %v3815, %v3814
        %v3891 = vpack.c.b16 %v3817, %v3816
        %v3892 = vpack.c.b16 %v3819, %v3818
        %v3893 = vpack.c.b16 %v3821, %v3820
        %v3894 = vpack.c.b16 %v3823, %v3822
        %v3895 = vpack.c.b16 %v3825, %v3824
        %v3896 = vpack.c.b16 %v3827, %v3826
        %v3897 = vpack.c.b16 %v3829, %v3828
        %v3898 = vpack.c.b16 %v3831, %v3830
        %v3899 = vpack.c.b16 %v3833, %v3832
        %v3900 = vpack.c.b16 %v3835, %v3834
        %v3901 = vpack.c.b16 %v3837, %v3836
        %v3902 = vpack.c.b16 %v3839, %v3838
        %v3903 = vpack.c.b16 %v3841, %v3840
        %v3904 = vpack.c.b16 %v3843, %v3842
        %v3905 = vpack.c.b16 %v3845, %v3844
        %v3906 = vpack.c.b16 %v3847, %v3846
        %v3907 = vpack.c.b16 %v3849, %v3848
        %v3908 = vpack.c.b16 %v3851, %v3850
        %v3909 = vpack.c.b16 %v3853, %v3852
        %v3910 = vpack.c.b16 %v3855, %v3854
        %v3911 = vpack.c.b16 %v3857, %v3856
        %v3912 = vpack.c.b16 %v3859, %v3858
        %v3913 = vpack.c.b16 %v3861, %v3860
        %v3914 = vpack.c.b16 %v3863, %v3862
        %v3915 = vpack.c.b16 %v3865, %v3864
        %v3967 = vsel %vm2463, %v3633, 0
        %v3970 = vsel %vm2463, %v3640, 0
        %v3973 = vsel %vm2463, %v3647, 0
        %3975 = vmatprep.subr.bf16.mxu0 0
        %3976 = vmatpush1.bf16.msra.mxu0 %v3866
        %3977 = vmatprep.subr.bf16.mxu0 0
        %3978 = vmatpush1.bf16.msra.mxu0 %v3867
        %3979 = vmatprep.subr.bf16.mxu0 0
        %3980 = vmatpush1.bf16.msra.mxu0 %v3868
        %3981 = vmatprep.subr.bf16.mxu0 0
        %3982 = vmatpush1.bf16.msra.mxu0 %v3869
        %3983 = vmatprep.subr.bf16.mxu0 0
        %3984 = vmatpush1.bf16.msra.mxu0 %v3870
        %3985 = vmatprep.subr.bf16.mxu0 0
        %3986 = vmatpush1.bf16.msra.mxu0 %v3871
        %3987 = vmatprep.subr.bf16.mxu0 0
        %3988 = vmatpush1.bf16.msra.mxu0 %v3872
        %3989 = vmatprep.subr.bf16.mxu0 0
        %3990 = vmatpush1.bf16.msra.mxu0 %v3873
        %3991 = vmatprep.subr.bf16.mxu0 0
        %3992 = vmatpush1.bf16.msra.mxu0 %v3874
        %3993 = vmatprep.subr.bf16.mxu0 0
        %3994 = vmatpush1.bf16.msra.mxu0 %v3875
        %3995 = vmatprep.subr.bf16.mxu0 0
        %3996 = vmatpush1.bf16.msra.mxu0 %v3876
        %3997 = vmatprep.subr.bf16.mxu0 0
        %3998 = vmatpush1.bf16.msra.mxu0 %v3877
        %3999 = vmatprep.subr.bf16.mxu0 0
        %4000 = vmatpush1.bf16.msra.mxu0 %v3878
        %4001 = vmatprep.subr.bf16.mxu0 0
        %4002 = vmatpush1.bf16.msra.mxu0 %v3879
        %4003 = vmatprep.subr.bf16.mxu0 0
        %4004 = vmatpush1.bf16.msra.mxu0 %v3880
        %4005 = vmatprep.subr.bf16.mxu0 0
        %4006 = vmatpush1.bf16.msra.mxu0 %v3881
        %4007 = vmatprep.mubr.bf16.mxu0 %v3628
        %4008 = vmatmul.mubr.bf16.gmra.mrb[0].mxu0 %v3627
        %v4009 = vpop.f32.mrb[0].mxu0
        %v4010 = vadd.f32 %v3570, %v4009
        %v4011 = vpop.f32.mrb[0].mxu0
        %v4012 = vpop.f32.mrb[0].mxu0
        %v4013 = vpop.f32.mrb[0].mxu0
        %4014 = vmatprep.mubr.bf16.mxu0 %v3635
        %4015 = vmatmul.mubr.bf16.gmra.mrb[0].mxu0 %v3634
        %v4016 = vpop.f32.mrb[0].mxu0
        %v4017 = vpop.f32.mrb[0].mxu0
        %v4018 = vpop.f32.mrb[0].mxu0
        %v4019 = vpop.f32.mrb[0].mxu0
        %4020 = vmatprep.mubr.bf16.mxu0 %v3642
        %4021 = vmatmul.mubr.bf16.gmra.mrb[0].mxu0 %v3641
        %v4022 = vpop.f32.mrb[0].mxu0
        %v4023 = vadd.f32 %v3570, %v4022
        %v4024 = vpop.f32.mrb[0].mxu0
        %v4025 = vpop.f32.mrb[0].mxu0
        %v4026 = vpop.f32.mrb[0].mxu0
        %4027 = vdwg.mxu0
        %4028 = vmatprep.subr.bf16.mxu0 0
        %4029 = vmatpush1.bf16.msra.mxu0 %v3882
        %4030 = vmatprep.subr.bf16.mxu0 0
        %4031 = vmatpush1.bf16.msra.mxu0 %v3883
        %4032 = vmatprep.subr.bf16.mxu0 0
        %4033 = vmatpush1.bf16.msra.mxu0 %v3884
        %4034 = vmatprep.subr.bf16.mxu0 0
        %4035 = vmatpush1.bf16.msra.mxu0 %v3885
        %4036 = vmatprep.subr.bf16.mxu0 0
        %4037 = vmatpush1.bf16.msra.mxu0 %v3886
        %4038 = vmatprep.subr.bf16.mxu0 0
        %4039 = vmatpush1.bf16.msra.mxu0 %v3887
        %4040 = vmatprep.subr.bf16.mxu0 0
        %4041 = vmatpush1.bf16.msra.mxu0 %v3888
        %4042 = vmatprep.subr.bf16.mxu0 0
        %4043 = vmatpush1.bf16.msra.mxu0 %v3889
        %4044 = vmatprep.subr.bf16.mxu0 0
        %4045 = vmatpush1.bf16.msra.mxu0 %v3890
        %4046 = vmatprep.subr.bf16.mxu0 0
        %4047 = vmatpush1.bf16.msra.mxu0 %v3891
        %4048 = vmatprep.subr.bf16.mxu0 0
        %4049 = vmatpush1.bf16.msra.mxu0 %v3892
        %4050 = vmatprep.subr.bf16.mxu0 0
        %4051 = vmatpush1.bf16.msra.mxu0 %v3893
        %4052 = vmatprep.subr.bf16.mxu0 0
        %4053 = vmatpush1.bf16.msra.mxu0 %v3894
        %4054 = vmatprep.subr.bf16.mxu0 0
        %4055 = vmatpush1.bf16.msra.mxu0 %v3895
        %4056 = vmatprep.subr.bf16.mxu0 0
        %4057 = vmatpush1.bf16.msra.mxu0 %v3896
        %4058 = vmatprep.subr.bf16.mxu0 0
        %4059 = vmatpush1.bf16.msra.mxu0 %v3897
        %4060 = vmatprep.mubr.bf16.mxu0 %v3630
        %4061 = vmatmul.mubr.bf16.gmra.mrb[0].mxu0 %v3629
        %v4062 = vpop.f32.mrb[0].mxu0
        %v4063 = vadd.f32 %v4010, %v4062
        %v4064 = vpop.f32.mrb[0].mxu0
        %v4065 = vpop.f32.mrb[0].mxu0
        %v4066 = vpop.f32.mrb[0].mxu0
        %4067 = vmatprep.mubr.bf16.mxu0 %v3637
        %4068 = vmatmul.mubr.bf16.gmra.mrb[0].mxu0 %v3636
        %v4069 = vpop.f32.mrb[0].mxu0
        %v4070 = vpop.f32.mrb[0].mxu0
        %v4071 = vpop.f32.mrb[0].mxu0
        %v4072 = vpop.f32.mrb[0].mxu0
        %4073 = vmatprep.mubr.bf16.mxu0 %v3644
        %4074 = vmatmul.mubr.bf16.gmra.mrb[0].mxu0 %v3643
        %v4075 = vpop.f32.mrb[0].mxu0
        %v4076 = vadd.f32 %v4023, %v4075
        %v4077 = vpop.f32.mrb[0].mxu0
        %v4078 = vpop.f32.mrb[0].mxu0
        %v4079 = vpop.f32.mrb[0].mxu0
        %4080 = vdwg.mxu0
        %4081 = vmatprep.subr.bf16.mxu0 0
        %4082 = vmatpush1.bf16.msra.mxu0 %v3898
        %4083 = vmatprep.subr.bf16.mxu0 0
        %4084 = vmatpush1.bf16.msra.mxu0 %v3899
        %4085 = vmatprep.subr.bf16.mxu0 0
        %4086 = vmatpush1.bf16.msra.mxu0 %v3900
        %4087 = vmatprep.subr.bf16.mxu0 0
        %4088 = vmatpush1.bf16.msra.mxu0 %v3901
        %4089 = vmatprep.subr.bf16.mxu0 0
        %4090 = vmatpush1.bf16.msra.mxu0 %v3902
        %4091 = vmatprep.subr.bf16.mxu0 0
        %4092 = vmatpush1.bf16.msra.mxu0 %v3903
        %4093 = vmatprep.subr.bf16.mxu0 0
        %4094 = vmatpush1.bf16.msra.mxu0 %v3904
        %4095 = vmatprep.subr.bf16.mxu0 0
        %4096 = vmatpush1.bf16.msra.mxu0 %v3905
        %4097 = vmatprep.subr.bf16.mxu0 0
        %4098 = vmatpush1.bf16.msra.mxu0 %v3906
        %4099 = vmatprep.subr.bf16.mxu0 0
        %4100 = vmatpush1.bf16.msra.mxu0 %v3907
        %4101 = vmatprep.subr.bf16.mxu0 0
        %4102 = vmatpush1.bf16.msra.mxu0 %v3908
        %4103 = vmatprep.subr.bf16.mxu0 0
        %4104 = vmatpush1.bf16.msra.mxu0 %v3909
        %4105 = vmatprep.subr.bf16.mxu0 0
        %4106 = vmatpush1.bf16.msra.mxu0 %v3910
        %4107 = vmatprep.subr.bf16.mxu0 0
        %4108 = vmatpush1.bf16.msra.mxu0 %v3911
        %4109 = vmatprep.subr.bf16.mxu0 0
        %4110 = vmatpush1.bf16.msra.mxu0 %v3912
        %4111 = vmatprep.subr.bf16.mxu0 0
        %4112 = vmatpush1.bf16.msra.mxu0 %v3913
        %4113 = vmatprep.mubr.bf16.mxu0 %v3632
        %4114 = vmatmul.mubr.bf16.gmra.mrb[0].mxu0 %v3631
        %v4115 = vpop.f32.mrb[0].mxu0
        %v4116 = vadd.f32 %v4063, %v4115
        %v4117 = vpop.f32.mrb[0].mxu0
        %v4118 = vpop.f32.mrb[0].mxu0
        %v4119 = vpop.f32.mrb[0].mxu0
        %4120 = vmatprep.mubr.bf16.mxu0 %v3639
        %4121 = vmatmul.mubr.bf16.gmra.mrb[0].mxu0 %v3638
        %v4122 = vpop.f32.mrb[0].mxu0
        %v4123 = vpop.f32.mrb[0].mxu0
        %v4124 = vpop.f32.mrb[0].mxu0
        %v4125 = vpop.f32.mrb[0].mxu0
        %4126 = vmatprep.mubr.bf16.mxu0 %v3646
        %4127 = vmatmul.mubr.bf16.gmra.mrb[0].mxu0 %v3645
        %v4128 = vpop.f32.mrb[0].mxu0
        %v4129 = vadd.f32 %v4076, %v4128
        %v4130 = vpop.f32.mrb[0].mxu0
        %v4131 = vpop.f32.mrb[0].mxu0
        %v4132 = vpop.f32.mrb[0].mxu0
        %4133 = vdwg.mxu0
        %4134 = vmatprep.subr.bf16.mxu0 0
        %4135 = vmatpush1.bf16.msra.mxu0 %v3914
        %4136 = vmatprep.subr.bf16.mxu0 0
        %4137 = vmatpush1.bf16.msra.mxu0 %v3915
        %4138 = vmatprep.subr.bf16.mxu0 0
        %4139 = vmatpush1.bf16.msra.mxu0 0
        %4140 = vmatprep.subr.bf16.mxu0 0
        %4141 = vmatpush1.bf16.msra.mxu0 0
        %4142 = vmatprep.subr.bf16.mxu0 0
        %4143 = vmatpush1.bf16.msra.mxu0 0
        %4144 = vmatprep.subr.bf16.mxu0 0
        %4145 = vmatpush1.bf16.msra.mxu0 0
        %4146 = vmatprep.subr.bf16.mxu0 0
        %4147 = vmatpush1.bf16.msra.mxu0 0
        %4148 = vmatprep.subr.bf16.mxu0 0
        %4149 = vmatpush1.bf16.msra.mxu0 0
        %4150 = vmatprep.subr.bf16.mxu0 0
        %4151 = vmatpush1.bf16.msra.mxu0 0
        %4152 = vmatprep.subr.bf16.mxu0 0
        %4153 = vmatpush1.bf16.msra.mxu0 0
        %4154 = vmatprep.subr.bf16.mxu0 0
        %4155 = vmatpush1.bf16.msra.mxu0 0
        %4156 = vmatprep.subr.bf16.mxu0 0
        %4157 = vmatpush1.bf16.msra.mxu0 0
        %4158 = vmatprep.subr.bf16.mxu0 0
        %4159 = vmatpush1.bf16.msra.mxu0 0
        %4160 = vmatprep.subr.bf16.mxu0 0
        %4161 = vmatpush1.bf16.msra.mxu0 0
        %4162 = vmatprep.subr.bf16.mxu0 0
        %4163 = vmatpush1.bf16.msra.mxu0 0
        %4164 = vmatprep.subr.bf16.mxu0 0
        %4165 = vmatpush1.bf16.msra.mxu0 0
        %4166 = vmatprep.mubr.bf16.mxu0 0
        %4167 = vmatmul.mubr.bf16.gmra.mrb[0].mxu0 %v3967
        %v4168 = vpop.f32.mrb[0].mxu0
        %v4169 = vadd.f32 %v4116, %v4168
        %v4170 = vpop.f32.mrb[0].mxu0
        %v4171 = vpop.f32.mrb[0].mxu0
        %v4172 = vpop.f32.mrb[0].mxu0
        %4173 = vmatprep.mubr.bf16.mxu0 0
        %4174 = vmatmul.mubr.bf16.gmra.mrb[0].mxu0 %v3970
        %v4175 = vpop.f32.mrb[0].mxu0
        %v4176 = vpop.f32.mrb[0].mxu0
        %v4177 = vpop.f32.mrb[0].mxu0
        %v4178 = vpop.f32.mrb[0].mxu0
        %4179 = vmatprep.mubr.bf16.mxu0 0
        %4180 = vmatmul.mubr.bf16.gmra.mrb[0].mxu0 %v3973
        %v4181 = vpop.f32.mrb[0].mxu0
        %v4182 = vadd.f32 %v4129, %v4181
        %v4183 = vpop.f32.mrb[0].mxu0
        %v4184 = vpop.f32.mrb[0].mxu0
        %v4185 = vpop.f32.mrb[0].mxu0
        %4186 = vdwg.mxu0
        %v4187 = vpack.c.bf16 %v4169, %v4169
        %vm4188 = vcmask 122880
        %vm4189 = vsmask.f32 256
        %vm4190 = vmand %vm4188, %vm4189
        %v4191 = vld [vmem:[#allocation6] sm:$0x1]
        %v4192 = vsel %vm4190, %v4187, %v4191
        %4193 = vst [vmem:[#allocation6] sm:$0x1] %v4192
        %v4196 = vunpack.c.l.s4 1966171168
        %v4197 = vunpack.c.0.s8 %v4196
        %v4198 = vlaneseq
        %v4199 = vshrl.u32 %v4198, 7
        %v4200 = vsub.s32 %v4197, %v4199
        %v4201 = vrot.slane %v4187, %v4200
        %v4202 = vcombine.high %v4201, %v4201
        %v4204 = vunpack.c.l.s4 1966171168
        %v4205 = vunpack.c.0.s8 %v4204
        %v4206 = vlaneseq
        %v4207 = vshrl.u32 %v4206, 7
        %v4208 = vsub.s32 %v4205, %v4207
        %v4209 = vrot.slane %v4202, %v4208
        %4210 = vrot.lane.b32.xlu0 %v4209, 16
        %v4211 = vpop.permute.xlu0 %4210
        %vm4213 = vcmask 254080
        %vm4214 = vmand %vm4213, %vm4189
        %v4215 = vld [vmem:[#allocation6] sm:$0x1]
        %v4216 = vsel %vm4214, %v4211, %v4215
        %4217 = vst [vmem:[#allocation6] sm:$0x1] %v4216
        %v4218 = vpack.c.bf16 %v4182, %v4182
        %v4221 = vunpack.c.l.s4 1966171168
        %v4222 = vunpack.c.0.s8 %v4221
        %v4223 = vlaneseq
        %v4224 = vshrl.u32 %v4223, 7
        %v4225 = vsub.s32 %v4222, %v4224
        %v4226 = vrot.slane %v4218, %v4225
        %v4228 = vunpack.c.l.s4 1966171168
        %v4229 = vunpack.c.0.s8 %v4228
        %v4230 = vlaneseq
        %v4231 = vshrl.u32 %v4230, 7
        %v4232 = vsub.s32 %v4229, %v4231
        %v4233 = vrot.slane %v4226, %v4232
        %4234 = vrot.lane.b32.xlu0 %v4233, 32
        %v4235 = vpop.permute.xlu0 %4234
        %vm4237 = vcmask 385280
        %vm4238 = vmand %vm4237, %vm4189
        %v4239 = vld [vmem:[#allocation6] sm:$0x1]
        %v4240 = vsel %vm4238, %v4235, %v4239
        %4241 = vst [vmem:[#allocation6] sm:$0x1] %v4240
        %v4242 = vcombine.high %v4226, %v4226
        %v4244 = vunpack.c.l.s4 1966171168
        %v4245 = vunpack.c.0.s8 %v4244
        %v4246 = vlaneseq
        %v4247 = vshrl.u32 %v4246, 7
        %v4248 = vsub.s32 %v4245, %v4247
        %v4249 = vrot.slane %v4242, %v4248
        %4250 = vrot.lane.b32.xlu0 %v4249, 48
        %v4251 = vpop.permute.xlu0 %4250
        %vm4253 = vcmask 516480
        %vm4254 = vmand %vm4253, %vm4189
        %v4255 = vld [vmem:[#allocation6] sm:$0x1]
        %v4256 = vsel %vm4254, %v4251, %v4255
        %4257 = vst [vmem:[#allocation6] sm:$0x1] %v4256
        %v4258 = vld [vmem:[#allocation6] sm:$0x1]
        %v4259 = vld [vmem:[%s7] sm:$0xf]
        %v4260 = vld [vmem:[%s7 + $0x4] sm:$0xf]
        %v4261 = vld [vmem:[%s7 + $0x8] sm:$0xf]
        %v4262 = vld [vmem:[%s7 + $0xc] sm:$0xf]
        %v4263 = vld [vmem:[%s7 + $0x10] sm:$0xf]
        %v4264 = vld [vmem:[%s7 + $0x14] sm:$0xf]
        %v4265 = vld [vmem:[%s7 + $0x18] sm:$0xf]
        %v4266 = vld [vmem:[%s7 + $0x1c] sm:$0xf]
        %v4267 = vld [vmem:[%s8] sm:$0x1]
        %v4276 = vunpack.c.l.b16 %v4259
        %v4277 = vunpack.c.l.b16 %v4260
        %v4278 = vunpack.c.l.b16 %v4261
        %v4279 = vunpack.c.l.b16 %v4262
        %v4280 = vunpack.c.l.b16 %v4263
        %v4281 = vunpack.c.l.b16 %v4264
        %v4282 = vunpack.c.l.b16 %v4265
        %v4283 = vunpack.c.l.b16 %v4266
        %v4284 = vpack.c.b16 %v4277, %v4276
        %v4285 = vpack.c.b16 %v4279, %v4278
        %v4286 = vpack.c.b16 %v4281, %v4280
        %v4287 = vpack.c.b16 %v4283, %v4282
        %vm4292 = vcmask 523264
        %v4294 = vsel %vm4292, %v4258, 0
        %4296 = vmatprep.subr.bf16.mxu0 0
        %4297 = vmatpush1.bf16.msra.mxu0 %v4284
        %4298 = vmatprep.subr.bf16.mxu0 0
        %4299 = vmatpush1.bf16.msra.mxu0 %v4285
        %4300 = vmatprep.subr.bf16.mxu0 0
        %4301 = vmatpush1.bf16.msra.mxu0 %v4286
        %4302 = vmatprep.subr.bf16.mxu0 0
        %4303 = vmatpush1.bf16.msra.mxu0 %v4287
        %4304 = vmatprep.subr.bf16.mxu0 0
        %4305 = vmatpush1.bf16.msra.mxu0 0
        %4306 = vmatprep.subr.bf16.mxu0 0
        %4307 = vmatpush1.bf16.msra.mxu0 0
        %4308 = vmatprep.subr.bf16.mxu0 0
        %4309 = vmatpush1.bf16.msra.mxu0 0
        %4310 = vmatprep.subr.bf16.mxu0 0
        %4311 = vmatpush1.bf16.msra.mxu0 0
        %4312 = vmatprep.subr.bf16.mxu0 0
        %4313 = vmatpush1.bf16.msra.mxu0 0
        %4314 = vmatprep.subr.bf16.mxu0 0
        %4315 = vmatpush1.bf16.msra.mxu0 0
        %4316 = vmatprep.subr.bf16.mxu0 0
        %4317 = vmatpush1.bf16.msra.mxu0 0
        %4318 = vmatprep.subr.bf16.mxu0 0
        %4319 = vmatpush1.bf16.msra.mxu0 0
        %4320 = vmatprep.subr.bf16.mxu0 0
        %4321 = vmatpush1.bf16.msra.mxu0 0
        %4322 = vmatprep.subr.bf16.mxu0 0
        %4323 = vmatpush1.bf16.msra.mxu0 0
        %4324 = vmatprep.subr.bf16.mxu0 0
        %4325 = vmatpush1.bf16.msra.mxu0 0
        %4326 = vmatprep.subr.bf16.mxu0 0
        %4327 = vmatpush1.bf16.msra.mxu0 0
        %4328 = vmatprep.mubr.bf16.mxu0 0
        %4329 = vmatmul.mubr.bf16.gmra.mrb[0].mxu0 %v4294
        %v4330 = vpop.f32.mrb[0].mxu0
        %v4331 = vadd.f32 %v4267, %v4330
        %v4332 = vpop.f32.mrb[0].mxu0
        %v4333 = vpop.f32.mrb[0].mxu0
        %v4334 = vpop.f32.mrb[0].mxu0
        %4335 = vdwg.mxu0
        %4336 = vst [vmem:[%s324] sm:$0x1] %v4331
        %s4337 = sand.u32 %s225, 1
        %s4338 = scalar_lea.sflag [#allocation8], %s4337
        %s4339 = sand.u32 %s225, 1
        %s4340 = scalar_lea.vmem [#allocation7], %s4339
        // Predicated region
        $region57: #{learner_model_forward.1} parent=55 // pred_check
          %p4341 = pneg %p235
        $region58: #{learner_model_forward.1} parent=55 // pred_check_branch
          %4343 = sbr.rel (%p4341) target = $region60
        $region59: #{learner_model_forward.1} parent=55 // pred_region
          %s4345 = ssub.s32 16, 16
          %4346 = vsyncadd %s4338, %s4345
          %s4347 = smul.addr %s23, 16
          %s4348 = scalar_lea.hbm %s9, %s4347
          %s4350 = sshll.u32 %s4340, 4
          %s4351 = int_to_ptr.vmem [resolvable:$true] %s4350
          %4353 = dma.vmem_to_hbm [thread:$0]  %s4351, 16, %s4348, %s4338
        $region60: #{learner_model_forward.1} parent=55 // pred_fallthru
          _
      $region56: #{learner_model_forward.1} parent=5 // pred_fallthru
        _
      %p4354 = scmp.le.s32.totalorder 2, %s18
      // Predicated region
      $region61: #{learner_model_forward.1} parent=5 // pred_check
        %p4355 = pneg %p4354
      $region62: #{learner_model_forward.1} parent=5 // pred_check_branch
        %4357 = sbr.rel (%p4355) target = $region64
      $region63: #{learner_model_forward.1} parent=5 // pred_region
        %s4358 = ssub.s32 %s18, 2
        // Predicated region
        $region65: #{learner_model_forward.1} parent=63 // pred_check
          %p4359 = pneg %p241
        $region66: #{learner_model_forward.1} parent=63 // pred_check_branch
          %4361 = sbr.rel (%p4359) target = $region68
        $region67: #{learner_model_forward.1} parent=63 // pred_region
          %s4362 = sand.u32 %s226, 1
          %s4363 = scalar_lea.sflag [#allocation8], %s4362
          %s4364 = sand.u32 %s226, 1
          %s4365 = scalar_lea.vmem [#allocation7], %s4364
          %4366 = dma.done %s4363, 16
        $region68: #{learner_model_forward.1} parent=63 // pred_fallthru
          _
      $region64: #{learner_model_forward.1} parent=5 // pred_fallthru
        _
    $region6: #{learner_model_forward.1} parent=1 // loop_footer
      %s22 = sadd.s32 1, %s18
    $region7: #{learner_model_forward.1} parent=1 // loop_footer_branch
      %17 = sbr.rel target = $region3
    $region8: #{learner_model_forward.1} parent=1 // loop_exit
      _
    %4367 = vsyncpa [#allocation8], 1
    %s4368 = scalar_lea.sflag [#allocation8], 1
    %4369 = vsyncpa %s4368, 1

</llo_original>
